<compile_context>
chip_gen: v7x
topology: tpu7x:2x2x1
jax: 0.10.0
libtpu: 0.0.40
codegen_flags: <defaults>
</compile_context>

<pallas_src>
import jax
import jax.numpy as jnp
from jax import lax
from jax.experimental import pallas as pl
from jax.experimental.pallas import tpu as pltpu

INPUT = 45
HIDDEN = 128
IN_PAD = 128      # x feature dim padded 45 -> 128 (zero-padded contraction dim)
OUT_PAD = 128     # fc output dim padded 45 -> 128 (lane-dense store)


def _lstm_fc_kernel(x_ref, h0_ref, c0_ref, wih_ref, whh_ref, b_ref,
                    wfc_ref, bfc_ref,
                    y_ref, hn_ref, cn_ref,
                    gx_ref, hall_ref):
    T, B, _ = x_ref.shape
    H = HIDDEN

    # ---- Phase 1: input projection for ALL timesteps at once (no serial dep).
    # Gate bias folded in here, so nothing is re-added inside the recurrence.
    x2d = x_ref[...].reshape(T * B, IN_PAD)
    gx_ref[...] = (jnp.dot(x2d, wih_ref[...], preferred_element_type=jnp.float32)
                   + b_ref[...])

    # ---- Phase 2: sequential recurrence. Only h_prev @ W_hh^T is on the serial path.
    # All elementwise/gate math stays f32 (v5e VPU/EUP has no bf16).
    def step(t, carry):
        h_prev, c_prev = carry
        row = pl.multiple_of(t * B, 8)
        gates = (gx_ref[pl.ds(row, B), :]
                 + jnp.dot(h_prev, whh_ref[...], preferred_element_type=jnp.float32))
        i_g = jax.nn.sigmoid(gates[:, 0 * H:1 * H])       # PyTorch gate order [i,f,g,o]
        f_g = jax.nn.sigmoid(gates[:, 1 * H:2 * H])
        g_g = jnp.tanh(gates[:, 2 * H:3 * H])
        o_g = jax.nn.sigmoid(gates[:, 3 * H:4 * H])
        c_new = f_g * c_prev + i_g * g_g
        h_new = o_g * jnp.tanh(c_new)
        hall_ref[pl.ds(row, B), :] = h_new
        return h_new, c_new

    h_fin, c_fin = lax.fori_loop(0, T, step, (h0_ref[...], c0_ref[...]),
                                 unroll=True)
    hn_ref[...] = h_fin.astype(hn_ref.dtype)
    cn_ref[...] = c_fin.astype(cn_ref.dtype)

    # ---- Phase 3: fc + sigmoid over all timesteps in one well-shaped matmul,
    # followed by a single lane-dense (last dim 128) store.
    y2d = jax.nn.sigmoid(
        jnp.dot(hall_ref[...], wfc_ref[...], preferred_element_type=jnp.float32)
        + bfc_ref[...])
    y_ref[...] = y2d.reshape(T, B, OUT_PAD).astype(y_ref.dtype)


@jax.jit
def lotto_predictor_forward(x, hidden, params):
    """x: (B, T, 45) float32, hidden = (h0, c0) each (1, B, 128)."""
    h0, c0 = hidden
    B, T, _ = x.shape
    B_pad = ((B + 7) // 8) * 8

    # time-major, batch padded to a multiple of 8 sublanes, features padded to 128 lanes
    x_tm = jnp.transpose(x, (1, 0, 2)).astype(jnp.float32)          # (T, B, 45)
    x_tm = jnp.pad(x_tm, ((0, 0), (0, B_pad - B), (0, IN_PAD - INPUT)))
    h0p = jnp.pad(h0[0].astype(jnp.float32), ((0, B_pad - B), (0, 0)))
    c0p = jnp.pad(c0[0].astype(jnp.float32), ((0, B_pad - B), (0, 0)))

    w_ih_t = jnp.pad(params["w_ih"].T, ((0, IN_PAD - INPUT), (0, 0)))    # (128, 512)
    w_hh_t = params["w_hh"].T                                            # (128, 512)
    b_g = (params["b_ih"] + params["b_hh"]).reshape(1, 4 * HIDDEN)       # (1, 512)
    w_fc_t = jnp.pad(params["w_fc"].T, ((0, 0), (0, OUT_PAD - INPUT)))   # (128, 128)
    b_fc = jnp.pad(params["b_fc"], (0, OUT_PAD - INPUT)).reshape(1, OUT_PAD)

    full = lambda shape: pl.BlockSpec(shape, lambda i, _s=shape: (0,) * len(_s))

    y, h_n, c_n = pl.pallas_call(
        _lstm_fc_kernel,
        out_shape=(
            jax.ShapeDtypeStruct((T, B_pad, OUT_PAD), jnp.float32),
            jax.ShapeDtypeStruct((B_pad, HIDDEN), jnp.float32),
            jax.ShapeDtypeStruct((B_pad, HIDDEN), jnp.float32),
        ),
        grid_spec=pltpu.PrefetchScalarGridSpec(
            num_scalar_prefetch=0,
            grid=(1,),                                  # whole recurrence inside the kernel
            in_specs=[
                full((T, B_pad, IN_PAD)),               # x (time-major, padded)
                full((B_pad, HIDDEN)),                  # h0
                full((B_pad, HIDDEN)),                  # c0
                full((IN_PAD, 4 * HIDDEN)),             # W_ih^T (rows zero-padded)
                full((HIDDEN, 4 * HIDDEN)),             # W_hh^T
                full((1, 4 * HIDDEN)),                  # combined gate bias
                full((HIDDEN, OUT_PAD)),                # W_fc^T (cols zero-padded)
                full((1, OUT_PAD)),                     # b_fc (zero-padded)
            ],
            out_specs=[
                full((T, B_pad, OUT_PAD)),              # per-step outputs (lane-dense)
                full((B_pad, HIDDEN)),                  # h_n
                full((B_pad, HIDDEN)),                  # c_n
            ],
            scratch_shapes=[
                pltpu.VMEM((T * B_pad, 4 * HIDDEN), jnp.float32),   # hoisted gates_x
                pltpu.VMEM((T * B_pad, HIDDEN), jnp.float32),       # all h_t for deferred fc
            ],
        ),
        compiler_params=pltpu.CompilerParams(
            dimension_semantics=("arbitrary",),
        ),
    )(x_tm, h0p, c0p, w_ih_t, w_hh_t, b_g, w_fc_t, b_fc)

    out = jnp.transpose(y[:, :B, :INPUT], (1, 0, 2))    # strip padding -> (B, T, 45)
    out = out[:-1]                                      # matches `out = out[:-1]` in the spec
    return out, (h_n[:B][None, ...], c_n[:B][None, ...])


def init_params(key):
    """Deterministic parameter init with the shapes nn.LSTM / nn.Linear imply."""
    k = jax.random.split(key, 6)
    s = 1.0 / jnp.sqrt(jnp.float32(HIDDEN))
    u = lambda kk, shape: jax.random.uniform(kk, shape, jnp.float32, -s, s)
    return {
        "w_ih": u(k[0], (4 * HIDDEN, INPUT)),    # weight_ih_l0
        "w_hh": u(k[1], (4 * HIDDEN, HIDDEN)),   # weight_hh_l0
        "b_ih": u(k[2], (4 * HIDDEN,)),          # bias_ih_l0
        "b_hh": u(k[3], (4 * HIDDEN,)),          # bias_hh_l0
        "w_fc": u(k[4], (INPUT, HIDDEN)),        # fc.weight
        "b_fc": u(k[5], (INPUT,)),               # fc.bias
    }


def _reference_forward(x, hidden, params):
    """Pure-JAX reference of LottoPredictor.forward (for correctness check)."""
    h0, c0 = hidden
    w_ih, w_hh = params["w_ih"], params["w_hh"]
    b = params["b_ih"] + params["b_hh"]
    H = HIDDEN

    def step(carry, x_t):
        h, c = carry
        gates = x_t @ w_ih.T + h @ w_hh.T + b
        i = jax.nn.sigmoid(gates[:, 0 * H:1 * H])
        f = jax.nn.sigmoid(gates[:, 1 * H:2 * H])
        g = jnp.tanh(gates[:, 2 * H:3 * H])
        o = jax.nn.sigmoid(gates[:, 3 * H:4 * H])
        c = f * c + i * g
        h = o * jnp.tanh(c)
        return (h, c), h

    (h_n, c_n), hs = lax.scan(step, (h0[0], c0[0]), jnp.transpose(x, (1, 0, 2)))
    out = jnp.transpose(hs, (1, 0, 2))[:-1]
    out = jax.nn.sigmoid(out @ params["w_fc"].T + params["b_fc"])
    return out, (h_n[None], c_n[None])


if __name__ == "__main__":
    key = jax.random.PRNGKey(0)
    kp, kx = jax.random.split(key)
    params = init_params(kp)

    B, T = 4, 8                                  # small shapes; feature dims fixed by module
    x = jax.random.normal(kx, (B, T, INPUT), jnp.float32)
    hidden = (jnp.zeros((1, B, HIDDEN), jnp.float32),
              jnp.zeros((1, B, HIDDEN), jnp.float32))   # init_hidden(B)

    out, (h_n, c_n) = lotto_predictor_forward(x, hidden, params)
    jax.block_until_ready((out, h_n, c_n))

    assert out.shape == (B - 1, T, INPUT)
    assert h_n.shape == (1, B, HIDDEN) and c_n.shape == (1, B, HIDDEN)
    assert bool(jnp.all(jnp.isfinite(out)))

    out_ref, (h_ref, c_ref) = _reference_forward(x, hidden, params)
    assert bool(jnp.allclose(out, out_ref, atol=2e-3, rtol=2e-3))
    assert bool(jnp.allclose(h_n, h_ref, atol=2e-3, rtol=2e-3))
    assert bool(jnp.allclose(c_n, c_ref, atol=2e-3, rtol=2e-3))

    print("KERNEL_OK")
</pallas_src>

<mosaic_0001>
module attributes {stable_mosaic.version = 11 : i64} {
  func.func @_lstm_fc_kernel(%arg0: i32, %arg1: memref<8x8x128xf32, #tpu.memory_space<vmem>>, %arg2: memref<8x128xf32, #tpu.memory_space<vmem>>, %arg3: memref<8x128xf32, #tpu.memory_space<vmem>>, %arg4: memref<128x512xf32, #tpu.memory_space<vmem>>, %arg5: memref<128x512xf32, #tpu.memory_space<vmem>>, %arg6: memref<1x512xf32, #tpu.memory_space<vmem>>, %arg7: memref<128x128xf32, #tpu.memory_space<vmem>>, %arg8: memref<1x128xf32, #tpu.memory_space<vmem>>, %arg9: memref<8x8x128xf32, #tpu.memory_space<vmem>>, %arg10: memref<8x128xf32, #tpu.memory_space<vmem>>, %arg11: memref<8x128xf32, #tpu.memory_space<vmem>>, %arg12: memref<64x512xf32, #tpu.memory_space<vmem>>, %arg13: memref<64x128xf32, #tpu.memory_space<vmem>>) attributes {dimension_semantics = [#tpu.dimension_semantics<arbitrary>], iteration_bounds = array<i64: 1>, scalar_prefetch = 0 : i64, scratch_operands = 2 : i64, tpu.core_type = #tpu.core_type<tc>, window_params = [{pipeline_mode = #tpu.pipeline_mode<synchronous>, transform_indices = @transform_0, window_bounds = array<i64: 8, 8, 128>}, {pipeline_mode = #tpu.pipeline_mode<synchronous>, transform_indices = @transform_1, window_bounds = array<i64: 8, 128>}, {pipeline_mode = #tpu.pipeline_mode<synchronous>, transform_indices = @transform_2, window_bounds = array<i64: 8, 128>}, {pipeline_mode = #tpu.pipeline_mode<synchronous>, transform_indices = @transform_3, window_bounds = array<i64: 128, 512>}, {pipeline_mode = #tpu.pipeline_mode<synchronous>, transform_indices = @transform_4, window_bounds = array<i64: 128, 512>}, {pipeline_mode = #tpu.pipeline_mode<synchronous>, transform_indices = @transform_5, window_bounds = array<i64: 1, 512>}, {pipeline_mode = #tpu.pipeline_mode<synchronous>, transform_indices = @transform_6, window_bounds = array<i64: 128, 128>}, {pipeline_mode = #tpu.pipeline_mode<synchronous>, transform_indices = @transform_7, window_bounds = array<i64: 1, 128>}, {pipeline_mode = #tpu.pipeline_mode<synchronous>, transform_indices = @transform_8, window_bounds = array<i64: 8, 8, 128>}, {pipeline_mode = #tpu.pipeline_mode<synchronous>, transform_indices = @transform_9, window_bounds = array<i64: 8, 128>}, {pipeline_mode = #tpu.pipeline_mode<synchronous>, transform_indices = @transform_10, window_bounds = array<i64: 8, 128>}]} {
    %c0 = arith.constant 0 : index
    %c0_0 = arith.constant 0 : index
    %c0_1 = arith.constant 0 : index
    %0 = vector.load %arg1[%c0, %c0_0, %c0_1] : memref<8x8x128xf32, #tpu.memory_space<vmem>>, vector<8x8x128xf32>
    %1 = vector.shape_cast %0 : vector<8x8x128xf32> to vector<64x128xf32>
    %c0_2 = arith.constant 0 : index
    %c0_3 = arith.constant 0 : index
    %2 = vector.load %arg4[%c0_2, %c0_3] : memref<128x512xf32, #tpu.memory_space<vmem>>, vector<128x512xf32>
    %cst = arith.constant dense<0.000000e+00> : vector<64x512xf32>
    %3 = tpu.matmul %1, %2, %cst {dimension_numbers = #tpu.dot_dimension_numbers<[1], [0], [0], [1], [0, 0, 1, 1], [], []>} : vector<64x128xf32>, vector<128x512xf32>, vector<64x512xf32> -> vector<64x512xf32>
    %c0_4 = arith.constant 0 : index
    %c0_5 = arith.constant 0 : index
    %4 = vector.load %arg6[%c0_4, %c0_5] : memref<1x512xf32, #tpu.memory_space<vmem>>, vector<1x512xf32>
    %5 = vector.broadcast %4 : vector<1x512xf32> to vector<64x512xf32>
    %6 = arith.addf %3, %5 : vector<64x512xf32>
    %c0_6 = arith.constant 0 : index
    %c0_7 = arith.constant 0 : index
    %7 = vector.load %arg12[%c0_6, %c0_7] : memref<64x512xf32, #tpu.memory_space<vmem>>, vector<64x512xf32>
    tpu.vector_store %arg12[%c0_6, %c0_7], %6 {strides = array<i32>} : memref<64x512xf32, #tpu.memory_space<vmem>>, vector<64x512xf32>,
    %c0_8 = arith.constant 0 : index
    %c0_9 = arith.constant 0 : index
    %8 = vector.load %arg2[%c0_8, %c0_9] : memref<8x128xf32, #tpu.memory_space<vmem>>, vector<8x128xf32>
    %c0_10 = arith.constant 0 : index
    %c0_11 = arith.constant 0 : index
    %9 = vector.load %arg3[%c0_10, %c0_11] : memref<8x128xf32, #tpu.memory_space<vmem>>, vector<8x128xf32>
    %c0_i32 = arith.constant 0 : i32
    %c8_i32 = arith.constant 8 : i32
    %10 = arith.muli %c0_i32, %c8_i32 : i32
    %11 = tpu.assume_multiple %10, 8 : i32
    %12 = arith.index_cast %11 : i32 to index
    %c0_12 = arith.constant 0 : index
    %13 = vector.load %arg12[%12, %c0_12] : memref<64x512xf32, #tpu.memory_space<vmem>>, vector<8x512xf32>
    %c0_13 = arith.constant 0 : index
    %c0_14 = arith.constant 0 : index
    %14 = vector.load %arg5[%c0_13, %c0_14] : memref<128x512xf32, #tpu.memory_space<vmem>>, vector<128x512xf32>
    %cst_15 = arith.constant dense<0.000000e+00> : vector<8x512xf32>
    %15 = tpu.matmul %8, %14, %cst_15 {dimension_numbers = #tpu.dot_dimension_numbers<[1], [0], [0], [1], [0, 0, 1, 1], [], []>} : vector<8x128xf32>, vector<128x512xf32>, vector<8x512xf32> -> vector<8x512xf32>
    %16 = arith.addf %13, %15 : vector<8x512xf32>
    %17 = vector.extract_strided_slice %16 {offsets = [0, 0], sizes = [8, 128], strides = [1, 1]} : vector<8x512xf32> to vector<8x128xf32>
    %18 = arith.negf %17 : vector<8x128xf32>
    %19 = math.exp %18 : vector<8x128xf32>
    %cst_16 = arith.constant 1.000000e+00 : f32
    %20 = vector.broadcast %cst_16 : f32 to vector<8x128xf32>
    %21 = arith.addf %20, %19 : vector<8x128xf32>
    %22 = arith.divf %20, %21 : vector<8x128xf32>
    %23 = vector.extract_strided_slice %16 {offsets = [0, 128], sizes = [8, 128], strides = [1, 1]} : vector<8x512xf32> to vector<8x128xf32>
    %24 = arith.negf %23 : vector<8x128xf32>
    %25 = math.exp %24 : vector<8x128xf32>
    %cst_17 = arith.constant 1.000000e+00 : f32
    %26 = vector.broadcast %cst_17 : f32 to vector<8x128xf32>
    %27 = arith.addf %26, %25 : vector<8x128xf32>
    %28 = arith.divf %26, %27 : vector<8x128xf32>
    %29 = vector.extract_strided_slice %16 {offsets = [0, 256], sizes = [8, 128], strides = [1, 1]} : vector<8x512xf32> to vector<8x128xf32>
    %30 = math.tanh %29 : vector<8x128xf32>
    %31 = vector.extract_strided_slice %16 {offsets = [0, 384], sizes = [8, 128], strides = [1, 1]} : vector<8x512xf32> to vector<8x128xf32>
    %32 = arith.negf %31 : vector<8x128xf32>
    %33 = math.exp %32 : vector<8x128xf32>
    %cst_18 = arith.constant 1.000000e+00 : f32
    %34 = vector.broadcast %cst_18 : f32 to vector<8x128xf32>
    %35 = arith.addf %34, %33 : vector<8x128xf32>
    %36 = arith.divf %34, %35 : vector<8x128xf32>
    %37 = arith.mulf %28, %9 : vector<8x128xf32>
    %38 = arith.mulf %22, %30 : vector<8x128xf32>
    %39 = arith.addf %37, %38 : vector<8x128xf32>
    %40 = math.tanh %39 : vector<8x128xf32>
    %41 = arith.mulf %36, %40 : vector<8x128xf32>
    %42 = arith.index_cast %11 : i32 to index
    %c0_19 = arith.constant 0 : index
    %43 = vector.load %arg13[%42, %c0_19] : memref<64x128xf32, #tpu.memory_space<vmem>>, vector<8x128xf32>
    tpu.vector_store %arg13[%42, %c0_19], %41 {strides = array<i32>} : memref<64x128xf32, #tpu.memory_space<vmem>>, vector<8x128xf32>,
    %c1_i32 = arith.constant 1 : i32
    %c8_i32_20 = arith.constant 8 : i32
    %44 = arith.muli %c1_i32, %c8_i32_20 : i32
    %45 = tpu.assume_multiple %44, 8 : i32
    %46 = arith.index_cast %45 : i32 to index
    %c0_21 = arith.constant 0 : index
    %47 = vector.load %arg12[%46, %c0_21] : memref<64x512xf32, #tpu.memory_space<vmem>>, vector<8x512xf32>
    %c0_22 = arith.constant 0 : index
    %c0_23 = arith.constant 0 : index
    %48 = vector.load %arg5[%c0_22, %c0_23] : memref<128x512xf32, #tpu.memory_space<vmem>>, vector<128x512xf32>
    %cst_24 = arith.constant dense<0.000000e+00> : vector<8x512xf32>
    %49 = tpu.matmul %41, %48, %cst_24 {dimension_numbers = #tpu.dot_dimension_numbers<[1], [0], [0], [1], [0, 0, 1, 1], [], []>} : vector<8x128xf32>, vector<128x512xf32>, vector<8x512xf32> -> vector<8x512xf32>
    %50 = arith.addf %47, %49 : vector<8x512xf32>
    %51 = vector.extract_strided_slice %50 {offsets = [0, 0], sizes = [8, 128], strides = [1, 1]} : vector<8x512xf32> to vector<8x128xf32>
    %52 = arith.negf %51 : vector<8x128xf32>
    %53 = math.exp %52 : vector<8x128xf32>
    %cst_25 = arith.constant 1.000000e+00 : f32
    %54 = vector.broadcast %cst_25 : f32 to vector<8x128xf32>
    %55 = arith.addf %54, %53 : vector<8x128xf32>
    %56 = arith.divf %54, %55 : vector<8x128xf32>
    %57 = vector.extract_strided_slice %50 {offsets = [0, 128], sizes = [8, 128], strides = [1, 1]} : vector<8x512xf32> to vector<8x128xf32>
    %58 = arith.negf %57 : vector<8x128xf32>
    %59 = math.exp %58 : vector<8x128xf32>
    %cst_26 = arith.constant 1.000000e+00 : f32
    %60 = vector.broadcast %cst_26 : f32 to vector<8x128xf32>
    %61 = arith.addf %60, %59 : vector<8x128xf32>
    %62 = arith.divf %60, %61 : vector<8x128xf32>
    %63 = vector.extract_strided_slice %50 {offsets = [0, 256], sizes = [8, 128], strides = [1, 1]} : vector<8x512xf32> to vector<8x128xf32>
    %64 = math.tanh %63 : vector<8x128xf32>
    %65 = vector.extract_strided_slice %50 {offsets = [0, 384], sizes = [8, 128], strides = [1, 1]} : vector<8x512xf32> to vector<8x128xf32>
    %66 = arith.negf %65 : vector<8x128xf32>
    %67 = math.exp %66 : vector<8x128xf32>
    %cst_27 = arith.constant 1.000000e+00 : f32
    %68 = vector.broadcast %cst_27 : f32 to vector<8x128xf32>
    %69 = arith.addf %68, %67 : vector<8x128xf32>
    %70 = arith.divf %68, %69 : vector<8x128xf32>
    %71 = arith.mulf %62, %39 : vector<8x128xf32>
    %72 = arith.mulf %56, %64 : vector<8x128xf32>
    %73 = arith.addf %71, %72 : vector<8x128xf32>
    %74 = math.tanh %73 : vector<8x128xf32>
    %75 = arith.mulf %70, %74 : vector<8x128xf32>
    %76 = arith.index_cast %45 : i32 to index
    %c0_28 = arith.constant 0 : index
    %77 = vector.load %arg13[%76, %c0_28] : memref<64x128xf32, #tpu.memory_space<vmem>>, vector<8x128xf32>
    tpu.vector_store %arg13[%76, %c0_28], %75 {strides = array<i32>} : memref<64x128xf32, #tpu.memory_space<vmem>>, vector<8x128xf32>,
    %c2_i32 = arith.constant 2 : i32
    %c8_i32_29 = arith.constant 8 : i32
    %78 = arith.muli %c2_i32, %c8_i32_29 : i32
    %79 = tpu.assume_multiple %78, 8 : i32
    %80 = arith.index_cast %79 : i32 to index
    %c0_30 = arith.constant 0 : index
    %81 = vector.load %arg12[%80, %c0_30] : memref<64x512xf32, #tpu.memory_space<vmem>>, vector<8x512xf32>
    %c0_31 = arith.constant 0 : index
    %c0_32 = arith.constant 0 : index
    %82 = vector.load %arg5[%c0_31, %c0_32] : memref<128x512xf32, #tpu.memory_space<vmem>>, vector<128x512xf32>
    %cst_33 = arith.constant dense<0.000000e+00> : vector<8x512xf32>
    %83 = tpu.matmul %75, %82, %cst_33 {dimension_numbers = #tpu.dot_dimension_numbers<[1], [0], [0], [1], [0, 0, 1, 1], [], []>} : vector<8x128xf32>, vector<128x512xf32>, vector<8x512xf32> -> vector<8x512xf32>
    %84 = arith.addf %81, %83 : vector<8x512xf32>
    %85 = vector.extract_strided_slice %84 {offsets = [0, 0], sizes = [8, 128], strides = [1, 1]} : vector<8x512xf32> to vector<8x128xf32>
    %86 = arith.negf %85 : vector<8x128xf32>
    %87 = math.exp %86 : vector<8x128xf32>
    %cst_34 = arith.constant 1.000000e+00 : f32
    %88 = vector.broadcast %cst_34 : f32 to vector<8x128xf32>
    %89 = arith.addf %88, %87 : vector<8x128xf32>
    %90 = arith.divf %88, %89 : vector<8x128xf32>
    %91 = vector.extract_strided_slice %84 {offsets = [0, 128], sizes = [8, 128], strides = [1, 1]} : vector<8x512xf32> to vector<8x128xf32>
    %92 = arith.negf %91 : vector<8x128xf32>
    %93 = math.exp %92 : vector<8x128xf32>
    %cst_35 = arith.constant 1.000000e+00 : f32
    %94 = vector.broadcast %cst_35 : f32 to vector<8x128xf32>
    %95 = arith.addf %94, %93 : vector<8x128xf32>
    %96 = arith.divf %94, %95 : vector<8x128xf32>
    %97 = vector.extract_strided_slice %84 {offsets = [0, 256], sizes = [8, 128], strides = [1, 1]} : vector<8x512xf32> to vector<8x128xf32>
    %98 = math.tanh %97 : vector<8x128xf32>
    %99 = vector.extract_strided_slice %84 {offsets = [0, 384], sizes = [8, 128], strides = [1, 1]} : vector<8x512xf32> to vector<8x128xf32>
    %100 = arith.negf %99 : vector<8x128xf32>
    %101 = math.exp %100 : vector<8x128xf32>
    %cst_36 = arith.constant 1.000000e+00 : f32
    %102 = vector.broadcast %cst_36 : f32 to vector<8x128xf32>
    %103 = arith.addf %102, %101 : vector<8x128xf32>
    %104 = arith.divf %102, %103 : vector<8x128xf32>
    %105 = arith.mulf %96, %73 : vector<8x128xf32>
    %106 = arith.mulf %90, %98 : vector<8x128xf32>
    %107 = arith.addf %105, %106 : vector<8x128xf32>
    %108 = math.tanh %107 : vector<8x128xf32>
    %109 = arith.mulf %104, %108 : vector<8x128xf32>
    %110 = arith.index_cast %79 : i32 to index
    %c0_37 = arith.constant 0 : index
    %111 = vector.load %arg13[%110, %c0_37] : memref<64x128xf32, #tpu.memory_space<vmem>>, vector<8x128xf32>
    tpu.vector_store %arg13[%110, %c0_37], %109 {strides = array<i32>} : memref<64x128xf32, #tpu.memory_space<vmem>>, vector<8x128xf32>,
    %c3_i32 = arith.constant 3 : i32
    %c8_i32_38 = arith.constant 8 : i32
    %112 = arith.muli %c3_i32, %c8_i32_38 : i32
    %113 = tpu.assume_multiple %112, 8 : i32
    %114 = arith.index_cast %113 : i32 to index
    %c0_39 = arith.constant 0 : index
    %115 = vector.load %arg12[%114, %c0_39] : memref<64x512xf32, #tpu.memory_space<vmem>>, vector<8x512xf32>
    %c0_40 = arith.constant 0 : index
    %c0_41 = arith.constant 0 : index
    %116 = vector.load %arg5[%c0_40, %c0_41] : memref<128x512xf32, #tpu.memory_space<vmem>>, vector<128x512xf32>
    %cst_42 = arith.constant dense<0.000000e+00> : vector<8x512xf32>
    %117 = tpu.matmul %109, %116, %cst_42 {dimension_numbers = #tpu.dot_dimension_numbers<[1], [0], [0], [1], [0, 0, 1, 1], [], []>} : vector<8x128xf32>, vector<128x512xf32>, vector<8x512xf32> -> vector<8x512xf32>
    %118 = arith.addf %115, %117 : vector<8x512xf32>
    %119 = vector.extract_strided_slice %118 {offsets = [0, 0], sizes = [8, 128], strides = [1, 1]} : vector<8x512xf32> to vector<8x128xf32>
    %120 = arith.negf %119 : vector<8x128xf32>
    %121 = math.exp %120 : vector<8x128xf32>
    %cst_43 = arith.constant 1.000000e+00 : f32
    %122 = vector.broadcast %cst_43 : f32 to vector<8x128xf32>
    %123 = arith.addf %122, %121 : vector<8x128xf32>
    %124 = arith.divf %122, %123 : vector<8x128xf32>
    %125 = vector.extract_strided_slice %118 {offsets = [0, 128], sizes = [8, 128], strides = [1, 1]} : vector<8x512xf32> to vector<8x128xf32>
    %126 = arith.negf %125 : vector<8x128xf32>
    %127 = math.exp %126 : vector<8x128xf32>
    %cst_44 = arith.constant 1.000000e+00 : f32
    %128 = vector.broadcast %cst_44 : f32 to vector<8x128xf32>
    %129 = arith.addf %128, %127 : vector<8x128xf32>
    %130 = arith.divf %128, %129 : vector<8x128xf32>
    %131 = vector.extract_strided_slice %118 {offsets = [0, 256], sizes = [8, 128], strides = [1, 1]} : vector<8x512xf32> to vector<8x128xf32>
    %132 = math.tanh %131 : vector<8x128xf32>
    %133 = vector.extract_strided_slice %118 {offsets = [0, 384], sizes = [8, 128], strides = [1, 1]} : vector<8x512xf32> to vector<8x128xf32>
    %134 = arith.negf %133 : vector<8x128xf32>
    %135 = math.exp %134 : vector<8x128xf32>
    %cst_45 = arith.constant 1.000000e+00 : f32
    %136 = vector.broadcast %cst_45 : f32 to vector<8x128xf32>
    %137 = arith.addf %136, %135 : vector<8x128xf32>
    %138 = arith.divf %136, %137 : vector<8x128xf32>
    %139 = arith.mulf %130, %107 : vector<8x128xf32>
    %140 = arith.mulf %124, %132 : vector<8x128xf32>
    %141 = arith.addf %139, %140 : vector<8x128xf32>
    %142 = math.tanh %141 : vector<8x128xf32>
    %143 = arith.mulf %138, %142 : vector<8x128xf32>
    %144 = arith.index_cast %113 : i32 to index
    %c0_46 = arith.constant 0 : index
    %145 = vector.load %arg13[%144, %c0_46] : memref<64x128xf32, #tpu.memory_space<vmem>>, vector<8x128xf32>
    tpu.vector_store %arg13[%144, %c0_46], %143 {strides = array<i32>} : memref<64x128xf32, #tpu.memory_space<vmem>>, vector<8x128xf32>,
    %c4_i32 = arith.constant 4 : i32
    %c8_i32_47 = arith.constant 8 : i32
    %146 = arith.muli %c4_i32, %c8_i32_47 : i32
    %147 = tpu.assume_multiple %146, 8 : i32
    %148 = arith.index_cast %147 : i32 to index
    %c0_48 = arith.constant 0 : index
    %149 = vector.load %arg12[%148, %c0_48] : memref<64x512xf32, #tpu.memory_space<vmem>>, vector<8x512xf32>
    %c0_49 = arith.constant 0 : index
    %c0_50 = arith.constant 0 : index
    %150 = vector.load %arg5[%c0_49, %c0_50] : memref<128x512xf32, #tpu.memory_space<vmem>>, vector<128x512xf32>
    %cst_51 = arith.constant dense<0.000000e+00> : vector<8x512xf32>
    %151 = tpu.matmul %143, %150, %cst_51 {dimension_numbers = #tpu.dot_dimension_numbers<[1], [0], [0], [1], [0, 0, 1, 1], [], []>} : vector<8x128xf32>, vector<128x512xf32>, vector<8x512xf32> -> vector<8x512xf32>
    %152 = arith.addf %149, %151 : vector<8x512xf32>
    %153 = vector.extract_strided_slice %152 {offsets = [0, 0], sizes = [8, 128], strides = [1, 1]} : vector<8x512xf32> to vector<8x128xf32>
    %154 = arith.negf %153 : vector<8x128xf32>
    %155 = math.exp %154 : vector<8x128xf32>
    %cst_52 = arith.constant 1.000000e+00 : f32
    %156 = vector.broadcast %cst_52 : f32 to vector<8x128xf32>
    %157 = arith.addf %156, %155 : vector<8x128xf32>
    %158 = arith.divf %156, %157 : vector<8x128xf32>
    %159 = vector.extract_strided_slice %152 {offsets = [0, 128], sizes = [8, 128], strides = [1, 1]} : vector<8x512xf32> to vector<8x128xf32>
    %160 = arith.negf %159 : vector<8x128xf32>
    %161 = math.exp %160 : vector<8x128xf32>
    %cst_53 = arith.constant 1.000000e+00 : f32
    %162 = vector.broadcast %cst_53 : f32 to vector<8x128xf32>
    %163 = arith.addf %162, %161 : vector<8x128xf32>
    %164 = arith.divf %162, %163 : vector<8x128xf32>
    %165 = vector.extract_strided_slice %152 {offsets = [0, 256], sizes = [8, 128], strides = [1, 1]} : vector<8x512xf32> to vector<8x128xf32>
    %166 = math.tanh %165 : vector<8x128xf32>
    %167 = vector.extract_strided_slice %152 {offsets = [0, 384], sizes = [8, 128], strides = [1, 1]} : vector<8x512xf32> to vector<8x128xf32>
    %168 = arith.negf %167 : vector<8x128xf32>
    %169 = math.exp %168 : vector<8x128xf32>
    %cst_54 = arith.constant 1.000000e+00 : f32
    %170 = vector.broadcast %cst_54 : f32 to vector<8x128xf32>
    %171 = arith.addf %170, %169 : vector<8x128xf32>
    %172 = arith.divf %170, %171 : vector<8x128xf32>
    %173 = arith.mulf %164, %141 : vector<8x128xf32>
    %174 = arith.mulf %158, %166 : vector<8x128xf32>
    %175 = arith.addf %173, %174 : vector<8x128xf32>
    %176 = math.tanh %175 : vector<8x128xf32>
    %177 = arith.mulf %172, %176 : vector<8x128xf32>
    %178 = arith.index_cast %147 : i32 to index
    %c0_55 = arith.constant 0 : index
    %179 = vector.load %arg13[%178, %c0_55] : memref<64x128xf32, #tpu.memory_space<vmem>>, vector<8x128xf32>
    tpu.vector_store %arg13[%178, %c0_55], %177 {strides = array<i32>} : memref<64x128xf32, #tpu.memory_space<vmem>>, vector<8x128xf32>,
    %c5_i32 = arith.constant 5 : i32
    %c8_i32_56 = arith.constant 8 : i32
    %180 = arith.muli %c5_i32, %c8_i32_56 : i32
    %181 = tpu.assume_multiple %180, 8 : i32
    %182 = arith.index_cast %181 : i32 to index
    %c0_57 = arith.constant 0 : index
    %183 = vector.load %arg12[%182, %c0_57] : memref<64x512xf32, #tpu.memory_space<vmem>>, vector<8x512xf32>
    %c0_58 = arith.constant 0 : index
    %c0_59 = arith.constant 0 : index
    %184 = vector.load %arg5[%c0_58, %c0_59] : memref<128x512xf32, #tpu.memory_space<vmem>>, vector<128x512xf32>
    %cst_60 = arith.constant dense<0.000000e+00> : vector<8x512xf32>
    %185 = tpu.matmul %177, %184, %cst_60 {dimension_numbers = #tpu.dot_dimension_numbers<[1], [0], [0], [1], [0, 0, 1, 1], [], []>} : vector<8x128xf32>, vector<128x512xf32>, vector<8x512xf32> -> vector<8x512xf32>
    %186 = arith.addf %183, %185 : vector<8x512xf32>
    %187 = vector.extract_strided_slice %186 {offsets = [0, 0], sizes = [8, 128], strides = [1, 1]} : vector<8x512xf32> to vector<8x128xf32>
    %188 = arith.negf %187 : vector<8x128xf32>
    %189 = math.exp %188 : vector<8x128xf32>
    %cst_61 = arith.constant 1.000000e+00 : f32
    %190 = vector.broadcast %cst_61 : f32 to vector<8x128xf32>
    %191 = arith.addf %190, %189 : vector<8x128xf32>
    %192 = arith.divf %190, %191 : vector<8x128xf32>
    %193 = vector.extract_strided_slice %186 {offsets = [0, 128], sizes = [8, 128], strides = [1, 1]} : vector<8x512xf32> to vector<8x128xf32>
    %194 = arith.negf %193 : vector<8x128xf32>
    %195 = math.exp %194 : vector<8x128xf32>
    %cst_62 = arith.constant 1.000000e+00 : f32
    %196 = vector.broadcast %cst_62 : f32 to vector<8x128xf32>
    %197 = arith.addf %196, %195 : vector<8x128xf32>
    %198 = arith.divf %196, %197 : vector<8x128xf32>
    %199 = vector.extract_strided_slice %186 {offsets = [0, 256], sizes = [8, 128], strides = [1, 1]} : vector<8x512xf32> to vector<8x128xf32>
    %200 = math.tanh %199 : vector<8x128xf32>
    %201 = vector.extract_strided_slice %186 {offsets = [0, 384], sizes = [8, 128], strides = [1, 1]} : vector<8x512xf32> to vector<8x128xf32>
    %202 = arith.negf %201 : vector<8x128xf32>
    %203 = math.exp %202 : vector<8x128xf32>
    %cst_63 = arith.constant 1.000000e+00 : f32
    %204 = vector.broadcast %cst_63 : f32 to vector<8x128xf32>
    %205 = arith.addf %204, %203 : vector<8x128xf32>
    %206 = arith.divf %204, %205 : vector<8x128xf32>
    %207 = arith.mulf %198, %175 : vector<8x128xf32>
    %208 = arith.mulf %192, %200 : vector<8x128xf32>
    %209 = arith.addf %207, %208 : vector<8x128xf32>
    %210 = math.tanh %209 : vector<8x128xf32>
    %211 = arith.mulf %206, %210 : vector<8x128xf32>
    %212 = arith.index_cast %181 : i32 to index
    %c0_64 = arith.constant 0 : index
    %213 = vector.load %arg13[%212, %c0_64] : memref<64x128xf32, #tpu.memory_space<vmem>>, vector<8x128xf32>
    tpu.vector_store %arg13[%212, %c0_64], %211 {strides = array<i32>} : memref<64x128xf32, #tpu.memory_space<vmem>>, vector<8x128xf32>,
    %c6_i32 = arith.constant 6 : i32
    %c8_i32_65 = arith.constant 8 : i32
    %214 = arith.muli %c6_i32, %c8_i32_65 : i32
    %215 = tpu.assume_multiple %214, 8 : i32
    %216 = arith.index_cast %215 : i32 to index
    %c0_66 = arith.constant 0 : index
    %217 = vector.load %arg12[%216, %c0_66] : memref<64x512xf32, #tpu.memory_space<vmem>>, vector<8x512xf32>
    %c0_67 = arith.constant 0 : index
    %c0_68 = arith.constant 0 : index
    %218 = vector.load %arg5[%c0_67, %c0_68] : memref<128x512xf32, #tpu.memory_space<vmem>>, vector<128x512xf32>
    %cst_69 = arith.constant dense<0.000000e+00> : vector<8x512xf32>
    %219 = tpu.matmul %211, %218, %cst_69 {dimension_numbers = #tpu.dot_dimension_numbers<[1], [0], [0], [1], [0, 0, 1, 1], [], []>} : vector<8x128xf32>, vector<128x512xf32>, vector<8x512xf32> -> vector<8x512xf32>
    %220 = arith.addf %217, %219 : vector<8x512xf32>
    %221 = vector.extract_strided_slice %220 {offsets = [0, 0], sizes = [8, 128], strides = [1, 1]} : vector<8x512xf32> to vector<8x128xf32>
    %222 = arith.negf %221 : vector<8x128xf32>
    %223 = math.exp %222 : vector<8x128xf32>
    %cst_70 = arith.constant 1.000000e+00 : f32
    %224 = vector.broadcast %cst_70 : f32 to vector<8x128xf32>
    %225 = arith.addf %224, %223 : vector<8x128xf32>
    %226 = arith.divf %224, %225 : vector<8x128xf32>
    %227 = vector.extract_strided_slice %220 {offsets = [0, 128], sizes = [8, 128], strides = [1, 1]} : vector<8x512xf32> to vector<8x128xf32>
    %228 = arith.negf %227 : vector<8x128xf32>
    %229 = math.exp %228 : vector<8x128xf32>
    %cst_71 = arith.constant 1.000000e+00 : f32
    %230 = vector.broadcast %cst_71 : f32 to vector<8x128xf32>
    %231 = arith.addf %230, %229 : vector<8x128xf32>
    %232 = arith.divf %230, %231 : vector<8x128xf32>
    %233 = vector.extract_strided_slice %220 {offsets = [0, 256], sizes = [8, 128], strides = [1, 1]} : vector<8x512xf32> to vector<8x128xf32>
    %234 = math.tanh %233 : vector<8x128xf32>
    %235 = vector.extract_strided_slice %220 {offsets = [0, 384], sizes = [8, 128], strides = [1, 1]} : vector<8x512xf32> to vector<8x128xf32>
    %236 = arith.negf %235 : vector<8x128xf32>
    %237 = math.exp %236 : vector<8x128xf32>
    %cst_72 = arith.constant 1.000000e+00 : f32
    %238 = vector.broadcast %cst_72 : f32 to vector<8x128xf32>
    %239 = arith.addf %238, %237 : vector<8x128xf32>
    %240 = arith.divf %238, %239 : vector<8x128xf32>
    %241 = arith.mulf %232, %209 : vector<8x128xf32>
    %242 = arith.mulf %226, %234 : vector<8x128xf32>
    %243 = arith.addf %241, %242 : vector<8x128xf32>
    %244 = math.tanh %243 : vector<8x128xf32>
    %245 = arith.mulf %240, %244 : vector<8x128xf32>
    %246 = arith.index_cast %215 : i32 to index
    %c0_73 = arith.constant 0 : index
    %247 = vector.load %arg13[%246, %c0_73] : memref<64x128xf32, #tpu.memory_space<vmem>>, vector<8x128xf32>
    tpu.vector_store %arg13[%246, %c0_73], %245 {strides = array<i32>} : memref<64x128xf32, #tpu.memory_space<vmem>>, vector<8x128xf32>,
    %c7_i32 = arith.constant 7 : i32
    %c8_i32_74 = arith.constant 8 : i32
    %248 = arith.muli %c7_i32, %c8_i32_74 : i32
    %249 = tpu.assume_multiple %248, 8 : i32
    %250 = arith.index_cast %249 : i32 to index
    %c0_75 = arith.constant 0 : index
    %251 = vector.load %arg12[%250, %c0_75] : memref<64x512xf32, #tpu.memory_space<vmem>>, vector<8x512xf32>
    %c0_76 = arith.constant 0 : index
    %c0_77 = arith.constant 0 : index
    %252 = vector.load %arg5[%c0_76, %c0_77] : memref<128x512xf32, #tpu.memory_space<vmem>>, vector<128x512xf32>
    %cst_78 = arith.constant dense<0.000000e+00> : vector<8x512xf32>
    %253 = tpu.matmul %245, %252, %cst_78 {dimension_numbers = #tpu.dot_dimension_numbers<[1], [0], [0], [1], [0, 0, 1, 1], [], []>} : vector<8x128xf32>, vector<128x512xf32>, vector<8x512xf32> -> vector<8x512xf32>
    %254 = arith.addf %251, %253 : vector<8x512xf32>
    %255 = vector.extract_strided_slice %254 {offsets = [0, 0], sizes = [8, 128], strides = [1, 1]} : vector<8x512xf32> to vector<8x128xf32>
    %256 = arith.negf %255 : vector<8x128xf32>
    %257 = math.exp %256 : vector<8x128xf32>
    %cst_79 = arith.constant 1.000000e+00 : f32
    %258 = vector.broadcast %cst_79 : f32 to vector<8x128xf32>
    %259 = arith.addf %258, %257 : vector<8x128xf32>
    %260 = arith.divf %258, %259 : vector<8x128xf32>
    %261 = vector.extract_strided_slice %254 {offsets = [0, 128], sizes = [8, 128], strides = [1, 1]} : vector<8x512xf32> to vector<8x128xf32>
    %262 = arith.negf %261 : vector<8x128xf32>
    %263 = math.exp %262 : vector<8x128xf32>
    %cst_80 = arith.constant 1.000000e+00 : f32
    %264 = vector.broadcast %cst_80 : f32 to vector<8x128xf32>
    %265 = arith.addf %264, %263 : vector<8x128xf32>
    %266 = arith.divf %264, %265 : vector<8x128xf32>
    %267 = vector.extract_strided_slice %254 {offsets = [0, 256], sizes = [8, 128], strides = [1, 1]} : vector<8x512xf32> to vector<8x128xf32>
    %268 = math.tanh %267 : vector<8x128xf32>
    %269 = vector.extract_strided_slice %254 {offsets = [0, 384], sizes = [8, 128], strides = [1, 1]} : vector<8x512xf32> to vector<8x128xf32>
    %270 = arith.negf %269 : vector<8x128xf32>
    %271 = math.exp %270 : vector<8x128xf32>
    %cst_81 = arith.constant 1.000000e+00 : f32
    %272 = vector.broadcast %cst_81 : f32 to vector<8x128xf32>
    %273 = arith.addf %272, %271 : vector<8x128xf32>
    %274 = arith.divf %272, %273 : vector<8x128xf32>
    %275 = arith.mulf %266, %243 : vector<8x128xf32>
    %276 = arith.mulf %260, %268 : vector<8x128xf32>
    %277 = arith.addf %275, %276 : vector<8x128xf32>
    %278 = math.tanh %277 : vector<8x128xf32>
    %279 = arith.mulf %274, %278 : vector<8x128xf32>
    %280 = arith.index_cast %249 : i32 to index
    %c0_82 = arith.constant 0 : index
    %281 = vector.load %arg13[%280, %c0_82] : memref<64x128xf32, #tpu.memory_space<vmem>>, vector<8x128xf32>
    tpu.vector_store %arg13[%280, %c0_82], %279 {strides = array<i32>} : memref<64x128xf32, #tpu.memory_space<vmem>>, vector<8x128xf32>,
    %c8_i32_83 = arith.constant 8 : i32
    %c0_84 = arith.constant 0 : index
    %c0_85 = arith.constant 0 : index
    %282 = vector.load %arg10[%c0_84, %c0_85] : memref<8x128xf32, #tpu.memory_space<vmem>>, vector<8x128xf32>
    tpu.vector_store %arg10[%c0_84, %c0_85], %279 {strides = array<i32>} : memref<8x128xf32, #tpu.memory_space<vmem>>, vector<8x128xf32>,
    %c0_86 = arith.constant 0 : index
    %c0_87 = arith.constant 0 : index
    %283 = vector.load %arg11[%c0_86, %c0_87] : memref<8x128xf32, #tpu.memory_space<vmem>>, vector<8x128xf32>
    tpu.vector_store %arg11[%c0_86, %c0_87], %277 {strides = array<i32>} : memref<8x128xf32, #tpu.memory_space<vmem>>, vector<8x128xf32>,
    %c0_88 = arith.constant 0 : index
    %c0_89 = arith.constant 0 : index
    %284 = vector.load %arg13[%c0_88, %c0_89] : memref<64x128xf32, #tpu.memory_space<vmem>>, vector<64x128xf32>
    %c0_90 = arith.constant 0 : index
    %c0_91 = arith.constant 0 : index
    %285 = vector.load %arg7[%c0_90, %c0_91] : memref<128x128xf32, #tpu.memory_space<vmem>>, vector<128x128xf32>
    %cst_92 = arith.constant dense<0.000000e+00> : vector<64x128xf32>
    %286 = tpu.matmul %284, %285, %cst_92 {dimension_numbers = #tpu.dot_dimension_numbers<[1], [0], [0], [1], [0, 0, 1, 1], [], []>} : vector<64x128xf32>, vector<128x128xf32>, vector<64x128xf32> -> vector<64x128xf32>
    %c0_93 = arith.constant 0 : index
    %c0_94 = arith.constant 0 : index
    %287 = vector.load %arg8[%c0_93, %c0_94] : memref<1x128xf32, #tpu.memory_space<vmem>>, vector<1x128xf32>
    %288 = vector.broadcast %287 : vector<1x128xf32> to vector<64x128xf32>
    %289 = arith.addf %286, %288 : vector<64x128xf32>
    %290 = arith.negf %289 : vector<64x128xf32>
    %291 = math.exp %290 : vector<64x128xf32>
    %cst_95 = arith.constant 1.000000e+00 : f32
    %292 = vector.broadcast %cst_95 : f32 to vector<64x128xf32>
    %293 = arith.addf %292, %291 : vector<64x128xf32>
    %294 = arith.divf %292, %293 : vector<64x128xf32>
    %295 = vector.shape_cast %294 : vector<64x128xf32> to vector<8x8x128xf32>
    %c0_96 = arith.constant 0 : index
    %c0_97 = arith.constant 0 : index
    %c0_98 = arith.constant 0 : index
    %296 = vector.load %arg9[%c0_96, %c0_97, %c0_98] : memref<8x8x128xf32, #tpu.memory_space<vmem>>, vector<8x8x128xf32>
    tpu.vector_store %arg9[%c0_96, %c0_97, %c0_98], %295 {strides = array<i32>} : memref<8x8x128xf32, #tpu.memory_space<vmem>>, vector<8x8x128xf32>,
    return
  }
  func.func @transform_0(%arg0: i32) -> (i32, i32, i32) {
    %c0_i32 = arith.constant 0 : i32
    %c0_i32_0 = arith.constant 0 : i32
    %c0_i32_1 = arith.constant 0 : i32
    %c0_i32_2 = arith.constant 0 : i32
    return %c0_i32, %c0_i32_0, %c0_i32_1 : i32, i32, i32
  }
  func.func @transform_1(%arg0: i32) -> (i32, i32) {
    %c0_i32 = arith.constant 0 : i32
    %c0_i32_0 = arith.constant 0 : i32
    %c0_i32_1 = arith.constant 0 : i32
    return %c0_i32, %c0_i32_0 : i32, i32
  }
  func.func @transform_2(%arg0: i32) -> (i32, i32) {
    %c0_i32 = arith.constant 0 : i32
    %c0_i32_0 = arith.constant 0 : i32
    %c0_i32_1 = arith.constant 0 : i32
    return %c0_i32, %c0_i32_0 : i32, i32
  }
  func.func @transform_3(%arg0: i32) -> (i32, i32) {
    %c0_i32 = arith.constant 0 : i32
    %c0_i32_0 = arith.constant 0 : i32
    %c0_i32_1 = arith.constant 0 : i32
    return %c0_i32, %c0_i32_0 : i32, i32
  }
  func.func @transform_4(%arg0: i32) -> (i32, i32) {
    %c0_i32 = arith.constant 0 : i32
    %c0_i32_0 = arith.constant 0 : i32
    %c0_i32_1 = arith.constant 0 : i32
    return %c0_i32, %c0_i32_0 : i32, i32
  }
  func.func @transform_5(%arg0: i32) -> (i32, i32) {
    %c0_i32 = arith.constant 0 : i32
    %c0_i32_0 = arith.constant 0 : i32
    %c0_i32_1 = arith.constant 0 : i32
    return %c0_i32, %c0_i32_0 : i32, i32
  }
  func.func @transform_6(%arg0: i32) -> (i32, i32) {
    %c0_i32 = arith.constant 0 : i32
    %c0_i32_0 = arith.constant 0 : i32
    %c0_i32_1 = arith.constant 0 : i32
    return %c0_i32, %c0_i32_0 : i32, i32
  }
  func.func @transform_7(%arg0: i32) -> (i32, i32) {
    %c0_i32 = arith.constant 0 : i32
    %c0_i32_0 = arith.constant 0 : i32
    %c0_i32_1 = arith.constant 0 : i32
    return %c0_i32, %c0_i32_0 : i32, i32
  }
  func.func @transform_8(%arg0: i32) -> (i32, i32, i32) {
    %c0_i32 = arith.constant 0 : i32
    %c0_i32_0 = arith.constant 0 : i32
    %c0_i32_1 = arith.constant 0 : i32
    %c0_i32_2 = arith.constant 0 : i32
    return %c0_i32, %c0_i32_0, %c0_i32_1 : i32, i32, i32
  }
  func.func @transform_9(%arg0: i32) -> (i32, i32) {
    %c0_i32 = arith.constant 0 : i32
    %c0_i32_0 = arith.constant 0 : i32
    %c0_i32_1 = arith.constant 0 : i32
    return %c0_i32, %c0_i32_0 : i32, i32
  }
  func.func @transform_10(%arg0: i32) -> (i32, i32) {
    %c0_i32 = arith.constant 0 : i32
    %c0_i32_0 = arith.constant 0 : i32
    %c0_i32_1 = arith.constant 0 : i32
    return %c0_i32, %c0_i32_0 : i32, i32
  }
}

</mosaic_0001>

<llo_original>
// kernel: lotto_predictor_forward.1
$region0: #{lotto_predictor_forward.1}
  #allocation0 [shape = 'u32[]', space=smem, size = 0x4, offset = 0x4, fixed_abs, tag = 'smem constant byte address 0x4 - core index']
  #allocation1 [shape = 'u32[144,128]{1,0:T(1,128)}', space=vmem, size = 0x12000, scoped, tag = 'internal scratch']
  #allocation2 [shape = 'f32[64,512]{1,0:T(8,128)}', space=vmem, size = 0x20000, scoped, tag = 'scratch operand']
  #allocation3 [shape = 'f32[64,128]{1,0:T(8,128)}', space=vmem, size = 0x8000, scoped, tag = 'scratch operand']
  %s0 = inlined_call_operand.vmem [shape: f32[8,8,128], index: 0, kind: input, shape index: {}]
  %s1 = inlined_call_operand.vmem [shape: f32[8,128], index: 1, kind: input, shape index: {}]
  %s2 = inlined_call_operand.vmem [shape: f32[8,128], index: 2, kind: input, shape index: {}]
  %s3 = inlined_call_operand.vmem [shape: f32[128,512], index: 3, kind: input, shape index: {}]
  %s4 = inlined_call_operand.vmem [shape: f32[128,512], index: 4, kind: input, shape index: {}]
  %s5 = inlined_call_operand.vmem [shape: f32[1,512], index: 5, kind: input, shape index: {}]
  %s6 = inlined_call_operand.vmem [shape: f32[128,128], index: 6, kind: input, shape index: {}]
  %s7 = inlined_call_operand.vmem [shape: f32[1,128], index: 7, kind: input, shape index: {}]
  %s8 = inlined_call_operand.vmem [shape: f32[8,8,128], index: 8, kind: output, shape index: {0}]
  %s9 = inlined_call_operand.vmem [shape: f32[8,128], index: 9, kind: output, shape index: {1}]
  %s10 = inlined_call_operand.vmem [shape: f32[8,128], index: 10, kind: output, shape index: {2}]
  %11 = xla_tuple %s8, %s9, %s10
  %s12 = sld [smem:[#allocation0]]
  $region58: #{lotto_predictor_forward.1} parent=0
    _
  %s14 = ssub.s32 1, %s12
  %s15 = scalar_select 0, %s14, %s12
  // Predicated region
  $region2: #{lotto_predictor_forward.1} parent=0 // pred_check
    _
  $region3: #{lotto_predictor_forward.1} parent=0 // pred_check_branch
    %17 = sbr.rel (0) target = $region5
  $region4: #{lotto_predictor_forward.1} parent=0 // pred_region
    _
  $region5: #{lotto_predictor_forward.1} parent=0 // pred_fallthru
    _
  // Predicated region
  $region6: #{lotto_predictor_forward.1} parent=0 // pred_check
    _
  $region7: #{lotto_predictor_forward.1} parent=0 // pred_check_branch
    %19 = sbr.rel (0) target = $region9
  $region8: #{lotto_predictor_forward.1} parent=0 // pred_region
    _
  $region9: #{lotto_predictor_forward.1} parent=0 // pred_fallthru
    _
  // Predicated region
  $region10: #{lotto_predictor_forward.1} parent=0 // pred_check
    _
  $region11: #{lotto_predictor_forward.1} parent=0 // pred_check_branch
    %21 = sbr.rel (0) target = $region13
  $region12: #{lotto_predictor_forward.1} parent=0 // pred_region
    _
  $region13: #{lotto_predictor_forward.1} parent=0 // pred_fallthru
    _
  // Predicated region
  $region14: #{lotto_predictor_forward.1} parent=0 // pred_check
    _
  $region15: #{lotto_predictor_forward.1} parent=0 // pred_check_branch
    %23 = sbr.rel (0) target = $region17
  $region16: #{lotto_predictor_forward.1} parent=0 // pred_region
    _
  $region17: #{lotto_predictor_forward.1} parent=0 // pred_fallthru
    _
  // Predicated region
  $region18: #{lotto_predictor_forward.1} parent=0 // pred_check
    _
  $region19: #{lotto_predictor_forward.1} parent=0 // pred_check_branch
    %25 = sbr.rel (0) target = $region21
  $region20: #{lotto_predictor_forward.1} parent=0 // pred_region
    _
  $region21: #{lotto_predictor_forward.1} parent=0 // pred_fallthru
    _
  // Predicated region
  $region22: #{lotto_predictor_forward.1} parent=0 // pred_check
    _
  $region23: #{lotto_predictor_forward.1} parent=0 // pred_check_branch
    %27 = sbr.rel (0) target = $region25
  $region24: #{lotto_predictor_forward.1} parent=0 // pred_region
    _
  $region25: #{lotto_predictor_forward.1} parent=0 // pred_fallthru
    _
  // Predicated region
  $region26: #{lotto_predictor_forward.1} parent=0 // pred_check
    _
  $region27: #{lotto_predictor_forward.1} parent=0 // pred_check_branch
    %29 = sbr.rel (0) target = $region29
  $region28: #{lotto_predictor_forward.1} parent=0 // pred_region
    _
  $region29: #{lotto_predictor_forward.1} parent=0 // pred_fallthru
    _
  // Predicated region
  $region30: #{lotto_predictor_forward.1} parent=0 // pred_check
    _
  $region31: #{lotto_predictor_forward.1} parent=0 // pred_check_branch
    %31 = sbr.rel (0) target = $region33
  $region32: #{lotto_predictor_forward.1} parent=0 // pred_region
    _
  $region33: #{lotto_predictor_forward.1} parent=0 // pred_fallthru
    _
  %v32 = vld [vmem:[%s0] sm:$0xff]
  %v33 = vld [vmem:[%s0 + $0x8] sm:$0xff]
  %v34 = vld [vmem:[%s0 + $0x10] sm:$0xff]
  %v35 = vld [vmem:[%s0 + $0x18] sm:$0xff]
  %v36 = vld [vmem:[%s0 + $0x20] sm:$0xff]
  %v37 = vld [vmem:[%s0 + $0x28] sm:$0xff]
  %v38 = vld [vmem:[%s0 + $0x30] sm:$0xff]
  %v39 = vld [vmem:[%s0 + $0x38] sm:$0xff]
  %v40 = vld [vmem:[%s3] sm:$0xff]
  %v41 = vld [vmem:[%s3 + $0x8] sm:$0xff]
  %v42 = vld [vmem:[%s3 + $0x10] sm:$0xff]
  %v43 = vld [vmem:[%s3 + $0x18] sm:$0xff]
  %v44 = vld [vmem:[%s3 + $0x20] sm:$0xff]
  %v45 = vld [vmem:[%s3 + $0x28] sm:$0xff]
  %v46 = vld [vmem:[%s3 + $0x30] sm:$0xff]
  %v47 = vld [vmem:[%s3 + $0x38] sm:$0xff]
  %v48 = vld [vmem:[%s3 + $0x40] sm:$0xff]
  %v49 = vld [vmem:[%s3 + $0x48] sm:$0xff]
  %v50 = vld [vmem:[%s3 + $0x50] sm:$0xff]
  %v51 = vld [vmem:[%s3 + $0x58] sm:$0xff]
  %v52 = vld [vmem:[%s3 + $0x60] sm:$0xff]
  %v53 = vld [vmem:[%s3 + $0x68] sm:$0xff]
  %v54 = vld [vmem:[%s3 + $0x70] sm:$0xff]
  %v55 = vld [vmem:[%s3 + $0x78] sm:$0xff]
  %v56 = vld [vmem:[%s3 + $0x80] sm:$0xff]
  %v57 = vld [vmem:[%s3 + $0x88] sm:$0xff]
  %v58 = vld [vmem:[%s3 + $0x90] sm:$0xff]
  %v59 = vld [vmem:[%s3 + $0x98] sm:$0xff]
  %v60 = vld [vmem:[%s3 + $0xa0] sm:$0xff]
  %v61 = vld [vmem:[%s3 + $0xa8] sm:$0xff]
  %v62 = vld [vmem:[%s3 + $0xb0] sm:$0xff]
  %v63 = vld [vmem:[%s3 + $0xb8] sm:$0xff]
  %v64 = vld [vmem:[%s3 + $0xc0] sm:$0xff]
  %v65 = vld [vmem:[%s3 + $0xc8] sm:$0xff]
  %v66 = vld [vmem:[%s3 + $0xd0] sm:$0xff]
  %v67 = vld [vmem:[%s3 + $0xd8] sm:$0xff]
  %v68 = vld [vmem:[%s3 + $0xe0] sm:$0xff]
  %v69 = vld [vmem:[%s3 + $0xe8] sm:$0xff]
  %v70 = vld [vmem:[%s3 + $0xf0] sm:$0xff]
  %v71 = vld [vmem:[%s3 + $0xf8] sm:$0xff]
  %v72 = vld [vmem:[%s3 + $0x100] sm:$0xff]
  %v73 = vld [vmem:[%s3 + $0x108] sm:$0xff]
  %v74 = vld [vmem:[%s3 + $0x110] sm:$0xff]
  %v75 = vld [vmem:[%s3 + $0x118] sm:$0xff]
  %v76 = vld [vmem:[%s3 + $0x120] sm:$0xff]
  %v77 = vld [vmem:[%s3 + $0x128] sm:$0xff]
  %v78 = vld [vmem:[%s3 + $0x130] sm:$0xff]
  %v79 = vld [vmem:[%s3 + $0x138] sm:$0xff]
  %v80 = vld [vmem:[%s3 + $0x140] sm:$0xff]
  %v81 = vld [vmem:[%s3 + $0x148] sm:$0xff]
  %v82 = vld [vmem:[%s3 + $0x150] sm:$0xff]
  %v83 = vld [vmem:[%s3 + $0x158] sm:$0xff]
  %v84 = vld [vmem:[%s3 + $0x160] sm:$0xff]
  %v85 = vld [vmem:[%s3 + $0x168] sm:$0xff]
  %v86 = vld [vmem:[%s3 + $0x170] sm:$0xff]
  %v87 = vld [vmem:[%s3 + $0x178] sm:$0xff]
  %v88 = vld [vmem:[%s3 + $0x180] sm:$0xff]
  %v89 = vld [vmem:[%s3 + $0x188] sm:$0xff]
  %v90 = vld [vmem:[%s3 + $0x190] sm:$0xff]
  %v91 = vld [vmem:[%s3 + $0x198] sm:$0xff]
  %v92 = vld [vmem:[%s3 + $0x1a0] sm:$0xff]
  %v93 = vld [vmem:[%s3 + $0x1a8] sm:$0xff]
  %v94 = vld [vmem:[%s3 + $0x1b0] sm:$0xff]
  %v95 = vld [vmem:[%s3 + $0x1b8] sm:$0xff]
  %v96 = vld [vmem:[%s3 + $0x1c0] sm:$0xff]
  %v97 = vld [vmem:[%s3 + $0x1c8] sm:$0xff]
  %v98 = vld [vmem:[%s3 + $0x1d0] sm:$0xff]
  %v99 = vld [vmem:[%s3 + $0x1d8] sm:$0xff]
  %v100 = vld [vmem:[%s3 + $0x1e0] sm:$0xff]
  %v101 = vld [vmem:[%s3 + $0x1e8] sm:$0xff]
  %v102 = vld [vmem:[%s3 + $0x1f0] sm:$0xff]
  %v103 = vld [vmem:[%s3 + $0x1f8] sm:$0xff]
  %v104 = vld [vmem:[%s5] sm:$0xf]
  %v106 = vlaneseq
  %v107 = vshrl.u32 %v106, 7
  %v108 = vsub.s32 0, %v107
  %v109 = vrot.slane %v104, %v108
  %v110 = vlaneseq
  %v111 = vshrl.u32 %v110, 7
  %v112 = vsub.s32 1, %v111
  %v113 = vrot.slane %v104, %v112
  %v114 = vlaneseq
  %v115 = vshrl.u32 %v114, 7
  %v116 = vsub.s32 2, %v115
  %v117 = vrot.slane %v104, %v116
  %v118 = vlaneseq
  %v119 = vshrl.u32 %v118, 7
  %v120 = vsub.s32 3, %v119
  %v121 = vrot.slane %v104, %v120
  %126 = vmatprep.subr.mxu0 %v41
  %127 = vmatpush1.msra.mxu0 %v40
  %128 = vmatprep.subr.mxu0 %v45
  %129 = vmatpush1.msra.mxu0 %v44
  %130 = vmatprep.subr.mxu0 %v49
  %131 = vmatpush1.msra.mxu0 %v48
  %132 = vmatprep.subr.mxu0 %v53
  %133 = vmatpush1.msra.mxu0 %v52
  %134 = vmatprep.subr.mxu0 %v57
  %135 = vmatpush1.msra.mxu0 %v56
  %136 = vmatprep.subr.mxu0 %v61
  %137 = vmatpush1.msra.mxu0 %v60
  %138 = vmatprep.subr.mxu0 %v65
  %139 = vmatpush1.msra.mxu0 %v64
  %140 = vmatprep.subr.mxu0 %v69
  %141 = vmatpush1.msra.mxu0 %v68
  %142 = vmatprep.subr.mxu0 %v73
  %143 = vmatpush1.msra.mxu0 %v72
  %144 = vmatprep.subr.mxu0 %v77
  %145 = vmatpush1.msra.mxu0 %v76
  %146 = vmatprep.subr.mxu0 %v81
  %147 = vmatpush1.msra.mxu0 %v80
  %148 = vmatprep.subr.mxu0 %v85
  %149 = vmatpush1.msra.mxu0 %v84
  %150 = vmatprep.subr.mxu0 %v89
  %151 = vmatpush1.msra.mxu0 %v88
  %152 = vmatprep.subr.mxu0 %v93
  %153 = vmatpush1.msra.mxu0 %v92
  %154 = vmatprep.subr.mxu0 %v97
  %155 = vmatpush1.msra.mxu0 %v96
  %156 = vmatprep.subr.mxu0 %v101
  %157 = vmatpush1.msra.mxu0 %v100
  %158 = vmatprep.subr.mxu0 0.0
  %159 = vmatpush1.msra.mxu0 0.0
  %160 = vmatprep.subr.mxu0 0.0
  %161 = vmatpush1.msra.mxu0 0.0
  %162 = vmatprep.subr.mxu0 0.0
  %163 = vmatpush1.msra.mxu0 0.0
  %164 = vmatprep.subr.mxu0 0.0
  %165 = vmatpush1.msra.mxu0 0.0
  %166 = vmatprep.subr.mxu0 0.0
  %167 = vmatpush1.msra.mxu0 0.0
  %168 = vmatprep.subr.mxu0 0.0
  %169 = vmatpush1.msra.mxu0 0.0
  %170 = vmatprep.subr.mxu0 0.0
  %171 = vmatpush1.msra.mxu0 0.0
  %172 = vmatprep.subr.mxu0 0.0
  %173 = vmatpush1.msra.mxu0 0.0
  %174 = vmatprep.subr.mxu0 0.0
  %175 = vmatpush1.msra.mxu0 0.0
  %176 = vmatprep.subr.mxu0 0.0
  %177 = vmatpush1.msra.mxu0 0.0
  %178 = vmatprep.subr.mxu0 0.0
  %179 = vmatpush1.msra.mxu0 0.0
  %180 = vmatprep.subr.mxu0 0.0
  %181 = vmatpush1.msra.mxu0 0.0
  %182 = vmatprep.subr.mxu0 0.0
  %183 = vmatpush1.msra.mxu0 0.0
  %184 = vmatprep.subr.mxu0 0.0
  %185 = vmatpush1.msra.mxu0 0.0
  %186 = vmatprep.subr.mxu0 0.0
  %187 = vmatpush1.msra.mxu0 0.0
  %188 = vmatprep.subr.mxu0 0.0
  %189 = vmatpush1.msra.mxu0 0.0
  %190 = vmatprep.mubr.f32.mxu0 0.0
  %191 = vmatmul.mubr.f32.gmra.mrb[0].mxu0 %v32
  %v192 = vpop.f32.mrb[0].mxu0
  %v193 = vadd.f32 %v109, %v192
  %v194 = vpop.f32.mrb[0].mxu0
  %v195 = vadd.f32 %v113, %v194
  %196 = vmatprep.mubr.f32.mxu0 0.0
  %197 = vmatmul.mubr.f32.gmra.mrb[0].mxu0 %v33
  %v198 = vpop.f32.mrb[0].mxu0
  %v199 = vadd.f32 %v109, %v198
  %v200 = vpop.f32.mrb[0].mxu0
  %v201 = vadd.f32 %v113, %v200
  %202 = vmatprep.mubr.f32.mxu0 0.0
  %203 = vmatmul.mubr.f32.gmra.mrb[0].mxu0 %v34
  %v204 = vpop.f32.mrb[0].mxu0
  %v205 = vadd.f32 %v109, %v204
  %v206 = vpop.f32.mrb[0].mxu0
  %v207 = vadd.f32 %v113, %v206
  %208 = vmatprep.mubr.f32.mxu0 0.0
  %209 = vmatmul.mubr.f32.gmra.mrb[0].mxu0 %v35
  %v210 = vpop.f32.mrb[0].mxu0
  %v211 = vadd.f32 %v109, %v210
  %v212 = vpop.f32.mrb[0].mxu0
  %v213 = vadd.f32 %v113, %v212
  %214 = vmatprep.mubr.f32.mxu0 0.0
  %215 = vmatmul.mubr.f32.gmra.mrb[0].mxu0 %v36
  %v216 = vpop.f32.mrb[0].mxu0
  %v217 = vadd.f32 %v109, %v216
  %v218 = vpop.f32.mrb[0].mxu0
  %v219 = vadd.f32 %v113, %v218
  %220 = vmatprep.mubr.f32.mxu0 0.0
  %221 = vmatmul.mubr.f32.gmra.mrb[0].mxu0 %v37
  %v222 = vpop.f32.mrb[0].mxu0
  %v223 = vadd.f32 %v109, %v222
  %v224 = vpop.f32.mrb[0].mxu0
  %v225 = vadd.f32 %v113, %v224
  %226 = vmatprep.mubr.f32.mxu0 0.0
  %227 = vmatmul.mubr.f32.gmra.mrb[0].mxu0 %v38
  %v228 = vpop.f32.mrb[0].mxu0
  %v229 = vadd.f32 %v109, %v228
  %v230 = vpop.f32.mrb[0].mxu0
  %v231 = vadd.f32 %v113, %v230
  %232 = vmatprep.mubr.f32.mxu0 0.0
  %233 = vmatmul.mubr.f32.gmra.mrb[0].mxu0 %v39
  %v234 = vpop.f32.mrb[0].mxu0
  %v235 = vadd.f32 %v109, %v234
  %v236 = vpop.f32.mrb[0].mxu0
  %v237 = vadd.f32 %v113, %v236
  %238 = vdwg.mxu0
  %239 = vmatprep.subr.mxu0 %v43
  %240 = vmatpush1.msra.mxu0 %v42
  %241 = vmatprep.subr.mxu0 %v47
  %242 = vmatpush1.msra.mxu0 %v46
  %243 = vmatprep.subr.mxu0 %v51
  %244 = vmatpush1.msra.mxu0 %v50
  %245 = vmatprep.subr.mxu0 %v55
  %246 = vmatpush1.msra.mxu0 %v54
  %247 = vmatprep.subr.mxu0 %v59
  %248 = vmatpush1.msra.mxu0 %v58
  %249 = vmatprep.subr.mxu0 %v63
  %250 = vmatpush1.msra.mxu0 %v62
  %251 = vmatprep.subr.mxu0 %v67
  %252 = vmatpush1.msra.mxu0 %v66
  %253 = vmatprep.subr.mxu0 %v71
  %254 = vmatpush1.msra.mxu0 %v70
  %255 = vmatprep.subr.mxu0 %v75
  %256 = vmatpush1.msra.mxu0 %v74
  %257 = vmatprep.subr.mxu0 %v79
  %258 = vmatpush1.msra.mxu0 %v78
  %259 = vmatprep.subr.mxu0 %v83
  %260 = vmatpush1.msra.mxu0 %v82
  %261 = vmatprep.subr.mxu0 %v87
  %262 = vmatpush1.msra.mxu0 %v86
  %263 = vmatprep.subr.mxu0 %v91
  %264 = vmatpush1.msra.mxu0 %v90
  %265 = vmatprep.subr.mxu0 %v95
  %266 = vmatpush1.msra.mxu0 %v94
  %267 = vmatprep.subr.mxu0 %v99
  %268 = vmatpush1.msra.mxu0 %v98
  %269 = vmatprep.subr.mxu0 %v103
  %270 = vmatpush1.msra.mxu0 %v102
  %271 = vmatprep.subr.mxu0 0.0
  %272 = vmatpush1.msra.mxu0 0.0
  %273 = vmatprep.subr.mxu0 0.0
  %274 = vmatpush1.msra.mxu0 0.0
  %275 = vmatprep.subr.mxu0 0.0
  %276 = vmatpush1.msra.mxu0 0.0
  %277 = vmatprep.subr.mxu0 0.0
  %278 = vmatpush1.msra.mxu0 0.0
  %279 = vmatprep.subr.mxu0 0.0
  %280 = vmatpush1.msra.mxu0 0.0
  %281 = vmatprep.subr.mxu0 0.0
  %282 = vmatpush1.msra.mxu0 0.0
  %283 = vmatprep.subr.mxu0 0.0
  %284 = vmatpush1.msra.mxu0 0.0
  %285 = vmatprep.subr.mxu0 0.0
  %286 = vmatpush1.msra.mxu0 0.0
  %287 = vmatprep.subr.mxu0 0.0
  %288 = vmatpush1.msra.mxu0 0.0
  %289 = vmatprep.subr.mxu0 0.0
  %290 = vmatpush1.msra.mxu0 0.0
  %291 = vmatprep.subr.mxu0 0.0
  %292 = vmatpush1.msra.mxu0 0.0
  %293 = vmatprep.subr.mxu0 0.0
  %294 = vmatpush1.msra.mxu0 0.0
  %295 = vmatprep.subr.mxu0 0.0
  %296 = vmatpush1.msra.mxu0 0.0
  %297 = vmatprep.subr.mxu0 0.0
  %298 = vmatpush1.msra.mxu0 0.0
  %299 = vmatprep.subr.mxu0 0.0
  %300 = vmatpush1.msra.mxu0 0.0
  %301 = vmatprep.subr.mxu0 0.0
  %302 = vmatpush1.msra.mxu0 0.0
  %303 = vmatprep.mubr.f32.mxu0 0.0
  %304 = vmatmul.mubr.f32.gmra.mrb[0].mxu0 %v32
  %v305 = vpop.f32.mrb[0].mxu0
  %v306 = vadd.f32 %v117, %v305
  %v307 = vpop.f32.mrb[0].mxu0
  %v308 = vadd.f32 %v121, %v307
  %309 = vmatprep.mubr.f32.mxu0 0.0
  %310 = vmatmul.mubr.f32.gmra.mrb[0].mxu0 %v33
  %v311 = vpop.f32.mrb[0].mxu0
  %v312 = vadd.f32 %v117, %v311
  %v313 = vpop.f32.mrb[0].mxu0
  %v314 = vadd.f32 %v121, %v313
  %315 = vmatprep.mubr.f32.mxu0 0.0
  %316 = vmatmul.mubr.f32.gmra.mrb[0].mxu0 %v34
  %v317 = vpop.f32.mrb[0].mxu0
  %v318 = vadd.f32 %v117, %v317
  %v319 = vpop.f32.mrb[0].mxu0
  %v320 = vadd.f32 %v121, %v319
  %321 = vmatprep.mubr.f32.mxu0 0.0
  %322 = vmatmul.mubr.f32.gmra.mrb[0].mxu0 %v35
  %v323 = vpop.f32.mrb[0].mxu0
  %v324 = vadd.f32 %v117, %v323
  %v325 = vpop.f32.mrb[0].mxu0
  %v326 = vadd.f32 %v121, %v325
  %327 = vmatprep.mubr.f32.mxu0 0.0
  %328 = vmatmul.mubr.f32.gmra.mrb[0].mxu0 %v36
  %v329 = vpop.f32.mrb[0].mxu0
  %v330 = vadd.f32 %v117, %v329
  %v331 = vpop.f32.mrb[0].mxu0
  %v332 = vadd.f32 %v121, %v331
  %333 = vmatprep.mubr.f32.mxu0 0.0
  %334 = vmatmul.mubr.f32.gmra.mrb[0].mxu0 %v37
  %v335 = vpop.f32.mrb[0].mxu0
  %v336 = vadd.f32 %v117, %v335
  %v337 = vpop.f32.mrb[0].mxu0
  %v338 = vadd.f32 %v121, %v337
  %339 = vmatprep.mubr.f32.mxu0 0.0
  %340 = vmatmul.mubr.f32.gmra.mrb[0].mxu0 %v38
  %v341 = vpop.f32.mrb[0].mxu0
  %v342 = vadd.f32 %v117, %v341
  %v343 = vpop.f32.mrb[0].mxu0
  %v344 = vadd.f32 %v121, %v343
  %345 = vmatprep.mubr.f32.mxu0 0.0
  %346 = vmatmul.mubr.f32.gmra.mrb[0].mxu0 %v39
  %v347 = vpop.f32.mrb[0].mxu0
  %v348 = vadd.f32 %v117, %v347
  %v349 = vpop.f32.mrb[0].mxu0
  %v350 = vadd.f32 %v121, %v349
  %351 = vdwg.mxu0
  %352 = vst [vmem:[#allocation2] sm:$0xff] %v193
  %353 = vst [vmem:[#allocation2 + $0x8] sm:$0xff] %v195
  %354 = vst [vmem:[#allocation2 + $0x10] sm:$0xff] %v306
  %355 = vst [vmem:[#allocation2 + $0x18] sm:$0xff] %v308
  %356 = vst [vmem:[#allocation2 + $0x20] sm:$0xff] %v199
  %357 = vst [vmem:[#allocation2 + $0x28] sm:$0xff] %v201
  %358 = vst [vmem:[#allocation2 + $0x30] sm:$0xff] %v312
  %359 = vst [vmem:[#allocation2 + $0x38] sm:$0xff] %v314
  %360 = vst [vmem:[#allocation2 + $0x40] sm:$0xff] %v205
  %361 = vst [vmem:[#allocation2 + $0x48] sm:$0xff] %v207
  %362 = vst [vmem:[#allocation2 + $0x50] sm:$0xff] %v318
  %363 = vst [vmem:[#allocation2 + $0x58] sm:$0xff] %v320
  %364 = vst [vmem:[#allocation2 + $0x60] sm:$0xff] %v211
  %365 = vst [vmem:[#allocation2 + $0x68] sm:$0xff] %v213
  %366 = vst [vmem:[#allocation2 + $0x70] sm:$0xff] %v324
  %367 = vst [vmem:[#allocation2 + $0x78] sm:$0xff] %v326
  %368 = vst [vmem:[#allocation2 + $0x80] sm:$0xff] %v217
  %369 = vst [vmem:[#allocation2 + $0x88] sm:$0xff] %v219
  %370 = vst [vmem:[#allocation2 + $0x90] sm:$0xff] %v330
  %371 = vst [vmem:[#allocation2 + $0x98] sm:$0xff] %v332
  %372 = vst [vmem:[#allocation2 + $0xa0] sm:$0xff] %v223
  %373 = vst [vmem:[#allocation2 + $0xa8] sm:$0xff] %v225
  %374 = vst [vmem:[#allocation2 + $0xb0] sm:$0xff] %v336
  %375 = vst [vmem:[#allocation2 + $0xb8] sm:$0xff] %v338
  %376 = vst [vmem:[#allocation2 + $0xc0] sm:$0xff] %v229
  %377 = vst [vmem:[#allocation2 + $0xc8] sm:$0xff] %v231
  %378 = vst [vmem:[#allocation2 + $0xd0] sm:$0xff] %v342
  %379 = vst [vmem:[#allocation2 + $0xd8] sm:$0xff] %v344
  %380 = vst [vmem:[#allocation2 + $0xe0] sm:$0xff] %v235
  %381 = vst [vmem:[#allocation2 + $0xe8] sm:$0xff] %v237
  %382 = vst [vmem:[#allocation2 + $0xf0] sm:$0xff] %v348
  %383 = vst [vmem:[#allocation2 + $0xf8] sm:$0xff] %v350
  %v384 = vld [vmem:[%s1] sm:$0xff]
  %v385 = vld [vmem:[%s2] sm:$0xff]
  %s386 = smul.u32 0, 4
  %s387 = smul.addr %s386, 8
  %s388 = scalar_lea.vmem [#allocation2], %s387
  %v389 = vld [vmem:[%s388] sm:$0xff]
  %v390 = vld [vmem:[%s388 + $0x8] sm:$0xff]
  %v391 = vld [vmem:[%s388 + $0x10] sm:$0xff]
  %v392 = vld [vmem:[%s388 + $0x18] sm:$0xff]
  %v393 = vld [vmem:[%s4] sm:$0xff]
  %v394 = vld [vmem:[%s4 + $0x8] sm:$0xff]
  %v395 = vld [vmem:[%s4 + $0x10] sm:$0xff]
  %v396 = vld [vmem:[%s4 + $0x18] sm:$0xff]
  %v397 = vld [vmem:[%s4 + $0x20] sm:$0xff]
  %v398 = vld [vmem:[%s4 + $0x28] sm:$0xff]
  %v399 = vld [vmem:[%s4 + $0x30] sm:$0xff]
  %v400 = vld [vmem:[%s4 + $0x38] sm:$0xff]
  %v401 = vld [vmem:[%s4 + $0x40] sm:$0xff]
  %v402 = vld [vmem:[%s4 + $0x48] sm:$0xff]
  %v403 = vld [vmem:[%s4 + $0x50] sm:$0xff]
  %v404 = vld [vmem:[%s4 + $0x58] sm:$0xff]
  %v405 = vld [vmem:[%s4 + $0x60] sm:$0xff]
  %v406 = vld [vmem:[%s4 + $0x68] sm:$0xff]
  %v407 = vld [vmem:[%s4 + $0x70] sm:$0xff]
  %v408 = vld [vmem:[%s4 + $0x78] sm:$0xff]
  %v409 = vld [vmem:[%s4 + $0x80] sm:$0xff]
  %v410 = vld [vmem:[%s4 + $0x88] sm:$0xff]
  %v411 = vld [vmem:[%s4 + $0x90] sm:$0xff]
  %v412 = vld [vmem:[%s4 + $0x98] sm:$0xff]
  %v413 = vld [vmem:[%s4 + $0xa0] sm:$0xff]
  %v414 = vld [vmem:[%s4 + $0xa8] sm:$0xff]
  %v415 = vld [vmem:[%s4 + $0xb0] sm:$0xff]
  %v416 = vld [vmem:[%s4 + $0xb8] sm:$0xff]
  %v417 = vld [vmem:[%s4 + $0xc0] sm:$0xff]
  %v418 = vld [vmem:[%s4 + $0xc8] sm:$0xff]
  %v419 = vld [vmem:[%s4 + $0xd0] sm:$0xff]
  %v420 = vld [vmem:[%s4 + $0xd8] sm:$0xff]
  %v421 = vld [vmem:[%s4 + $0xe0] sm:$0xff]
  %v422 = vld [vmem:[%s4 + $0xe8] sm:$0xff]
  %v423 = vld [vmem:[%s4 + $0xf0] sm:$0xff]
  %v424 = vld [vmem:[%s4 + $0xf8] sm:$0xff]
  %v425 = vld [vmem:[%s4 + $0x100] sm:$0xff]
  %v426 = vld [vmem:[%s4 + $0x108] sm:$0xff]
  %v427 = vld [vmem:[%s4 + $0x110] sm:$0xff]
  %v428 = vld [vmem:[%s4 + $0x118] sm:$0xff]
  %v429 = vld [vmem:[%s4 + $0x120] sm:$0xff]
  %v430 = vld [vmem:[%s4 + $0x128] sm:$0xff]
  %v431 = vld [vmem:[%s4 + $0x130] sm:$0xff]
  %v432 = vld [vmem:[%s4 + $0x138] sm:$0xff]
  %v433 = vld [vmem:[%s4 + $0x140] sm:$0xff]
  %v434 = vld [vmem:[%s4 + $0x148] sm:$0xff]
  %v435 = vld [vmem:[%s4 + $0x150] sm:$0xff]
  %v436 = vld [vmem:[%s4 + $0x158] sm:$0xff]
  %v437 = vld [vmem:[%s4 + $0x160] sm:$0xff]
  %v438 = vld [vmem:[%s4 + $0x168] sm:$0xff]
  %v439 = vld [vmem:[%s4 + $0x170] sm:$0xff]
  %v440 = vld [vmem:[%s4 + $0x178] sm:$0xff]
  %v441 = vld [vmem:[%s4 + $0x180] sm:$0xff]
  %v442 = vld [vmem:[%s4 + $0x188] sm:$0xff]
  %v443 = vld [vmem:[%s4 + $0x190] sm:$0xff]
  %v444 = vld [vmem:[%s4 + $0x198] sm:$0xff]
  %v445 = vld [vmem:[%s4 + $0x1a0] sm:$0xff]
  %v446 = vld [vmem:[%s4 + $0x1a8] sm:$0xff]
  %v447 = vld [vmem:[%s4 + $0x1b0] sm:$0xff]
  %v448 = vld [vmem:[%s4 + $0x1b8] sm:$0xff]
  %v449 = vld [vmem:[%s4 + $0x1c0] sm:$0xff]
  %v450 = vld [vmem:[%s4 + $0x1c8] sm:$0xff]
  %v451 = vld [vmem:[%s4 + $0x1d0] sm:$0xff]
  %v452 = vld [vmem:[%s4 + $0x1d8] sm:$0xff]
  %v453 = vld [vmem:[%s4 + $0x1e0] sm:$0xff]
  %v454 = vld [vmem:[%s4 + $0x1e8] sm:$0xff]
  %v455 = vld [vmem:[%s4 + $0x1f0] sm:$0xff]
  %v456 = vld [vmem:[%s4 + $0x1f8] sm:$0xff]
  %457 = vmatprep.subr.mxu0 %v394
  %458 = vmatpush1.msra.mxu0 %v393
  %459 = vmatprep.subr.mxu0 %v398
  %460 = vmatpush1.msra.mxu0 %v397
  %461 = vmatprep.subr.mxu0 %v402
  %462 = vmatpush1.msra.mxu0 %v401
  %463 = vmatprep.subr.mxu0 %v406
  %464 = vmatpush1.msra.mxu0 %v405
  %465 = vmatprep.subr.mxu0 %v410
  %466 = vmatpush1.msra.mxu0 %v409
  %467 = vmatprep.subr.mxu0 %v414
  %468 = vmatpush1.msra.mxu0 %v413
  %469 = vmatprep.subr.mxu0 %v418
  %470 = vmatpush1.msra.mxu0 %v417
  %471 = vmatprep.subr.mxu0 %v422
  %472 = vmatpush1.msra.mxu0 %v421
  %473 = vmatprep.subr.mxu0 %v426
  %474 = vmatpush1.msra.mxu0 %v425
  %475 = vmatprep.subr.mxu0 %v430
  %476 = vmatpush1.msra.mxu0 %v429
  %477 = vmatprep.subr.mxu0 %v434
  %478 = vmatpush1.msra.mxu0 %v433
  %479 = vmatprep.subr.mxu0 %v438
  %480 = vmatpush1.msra.mxu0 %v437
  %481 = vmatprep.subr.mxu0 %v442
  %482 = vmatpush1.msra.mxu0 %v441
  %483 = vmatprep.subr.mxu0 %v446
  %484 = vmatpush1.msra.mxu0 %v445
  %485 = vmatprep.subr.mxu0 %v450
  %486 = vmatpush1.msra.mxu0 %v449
  %487 = vmatprep.subr.mxu0 %v454
  %488 = vmatpush1.msra.mxu0 %v453
  %489 = vmatprep.subr.mxu0 0.0
  %490 = vmatpush1.msra.mxu0 0.0
  %491 = vmatprep.subr.mxu0 0.0
  %492 = vmatpush1.msra.mxu0 0.0
  %493 = vmatprep.subr.mxu0 0.0
  %494 = vmatpush1.msra.mxu0 0.0
  %495 = vmatprep.subr.mxu0 0.0
  %496 = vmatpush1.msra.mxu0 0.0
  %497 = vmatprep.subr.mxu0 0.0
  %498 = vmatpush1.msra.mxu0 0.0
  %499 = vmatprep.subr.mxu0 0.0
  %500 = vmatpush1.msra.mxu0 0.0
  %501 = vmatprep.subr.mxu0 0.0
  %502 = vmatpush1.msra.mxu0 0.0
  %503 = vmatprep.subr.mxu0 0.0
  %504 = vmatpush1.msra.mxu0 0.0
  %505 = vmatprep.subr.mxu0 0.0
  %506 = vmatpush1.msra.mxu0 0.0
  %507 = vmatprep.subr.mxu0 0.0
  %508 = vmatpush1.msra.mxu0 0.0
  %509 = vmatprep.subr.mxu0 0.0
  %510 = vmatpush1.msra.mxu0 0.0
  %511 = vmatprep.subr.mxu0 0.0
  %512 = vmatpush1.msra.mxu0 0.0
  %513 = vmatprep.subr.mxu0 0.0
  %514 = vmatpush1.msra.mxu0 0.0
  %515 = vmatprep.subr.mxu0 0.0
  %516 = vmatpush1.msra.mxu0 0.0
  %517 = vmatprep.subr.mxu0 0.0
  %518 = vmatpush1.msra.mxu0 0.0
  %519 = vmatprep.subr.mxu0 0.0
  %520 = vmatpush1.msra.mxu0 0.0
  %521 = vmatprep.mubr.f32.mxu0 0.0
  %522 = vmatmul.mubr.f32.gmra.mrb[0].mxu0 %v384
  %v523 = vpop.f32.mrb[0].mxu0
  %v524 = vadd.f32 0.0, %v523
  %v525 = vpop.f32.mrb[0].mxu0
  %v526 = vadd.f32 0.0, %v525
  %527 = vdwg.mxu0
  %528 = vmatprep.subr.mxu0 %v396
  %529 = vmatpush1.msra.mxu0 %v395
  %530 = vmatprep.subr.mxu0 %v400
  %531 = vmatpush1.msra.mxu0 %v399
  %532 = vmatprep.subr.mxu0 %v404
  %533 = vmatpush1.msra.mxu0 %v403
  %534 = vmatprep.subr.mxu0 %v408
  %535 = vmatpush1.msra.mxu0 %v407
  %536 = vmatprep.subr.mxu0 %v412
  %537 = vmatpush1.msra.mxu0 %v411
  %538 = vmatprep.subr.mxu0 %v416
  %539 = vmatpush1.msra.mxu0 %v415
  %540 = vmatprep.subr.mxu0 %v420
  %541 = vmatpush1.msra.mxu0 %v419
  %542 = vmatprep.subr.mxu0 %v424
  %543 = vmatpush1.msra.mxu0 %v423
  %544 = vmatprep.subr.mxu0 %v428
  %545 = vmatpush1.msra.mxu0 %v427
  %546 = vmatprep.subr.mxu0 %v432
  %547 = vmatpush1.msra.mxu0 %v431
  %548 = vmatprep.subr.mxu0 %v436
  %549 = vmatpush1.msra.mxu0 %v435
  %550 = vmatprep.subr.mxu0 %v440
  %551 = vmatpush1.msra.mxu0 %v439
  %552 = vmatprep.subr.mxu0 %v444
  %553 = vmatpush1.msra.mxu0 %v443
  %554 = vmatprep.subr.mxu0 %v448
  %555 = vmatpush1.msra.mxu0 %v447
  %556 = vmatprep.subr.mxu0 %v452
  %557 = vmatpush1.msra.mxu0 %v451
  %558 = vmatprep.subr.mxu0 %v456
  %559 = vmatpush1.msra.mxu0 %v455
  %560 = vmatprep.subr.mxu0 0.0
  %561 = vmatpush1.msra.mxu0 0.0
  %562 = vmatprep.subr.mxu0 0.0
  %563 = vmatpush1.msra.mxu0 0.0
  %564 = vmatprep.subr.mxu0 0.0
  %565 = vmatpush1.msra.mxu0 0.0
  %566 = vmatprep.subr.mxu0 0.0
  %567 = vmatpush1.msra.mxu0 0.0
  %568 = vmatprep.subr.mxu0 0.0
  %569 = vmatpush1.msra.mxu0 0.0
  %570 = vmatprep.subr.mxu0 0.0
  %571 = vmatpush1.msra.mxu0 0.0
  %572 = vmatprep.subr.mxu0 0.0
  %573 = vmatpush1.msra.mxu0 0.0
  %574 = vmatprep.subr.mxu0 0.0
  %575 = vmatpush1.msra.mxu0 0.0
  %576 = vmatprep.subr.mxu0 0.0
  %577 = vmatpush1.msra.mxu0 0.0
  %578 = vmatprep.subr.mxu0 0.0
  %579 = vmatpush1.msra.mxu0 0.0
  %580 = vmatprep.subr.mxu0 0.0
  %581 = vmatpush1.msra.mxu0 0.0
  %582 = vmatprep.subr.mxu0 0.0
  %583 = vmatpush1.msra.mxu0 0.0
  %584 = vmatprep.subr.mxu0 0.0
  %585 = vmatpush1.msra.mxu0 0.0
  %586 = vmatprep.subr.mxu0 0.0
  %587 = vmatpush1.msra.mxu0 0.0
  %588 = vmatprep.subr.mxu0 0.0
  %589 = vmatpush1.msra.mxu0 0.0
  %590 = vmatprep.subr.mxu0 0.0
  %591 = vmatpush1.msra.mxu0 0.0
  %592 = vmatprep.mubr.f32.mxu0 0.0
  %593 = vmatmul.mubr.f32.gmra.mrb[0].mxu0 %v384
  %v594 = vpop.f32.mrb[0].mxu0
  %v595 = vadd.f32 0.0, %v594
  %v596 = vpop.f32.mrb[0].mxu0
  %v597 = vadd.f32 0.0, %v596
  %598 = vdwg.mxu0
  %v599 = vadd.f32 %v389, %v524
  %v600 = vadd.f32 %v390, %v526
  %v601 = vadd.f32 %v391, %v595
  %v602 = vadd.f32 %v392, %v597
  %v603 = vxor.u32 %v599, 2147483648
  %v604 = vmul.f32 %v603, 1.442695
  %v605 = vpow.pop %v604
  %v606 = vadd.f32 %v605, 1.0
  %v607 = vrcp.pop %v606
  %v608 = vmul.f32 1.0, %v607
  %v609 = vxor.u32 %v600, 2147483648
  %v610 = vmul.f32 %v609, 1.442695
  %v611 = vpow.pop %v610
  %v612 = vadd.f32 %v611, 1.0
  %v613 = vrcp.pop %v612
  %v614 = vmul.f32 1.0, %v613
  %v615 = vtanh.pop %v601
  %v616 = vxor.u32 %v602, 2147483648
  %v617 = vmul.f32 %v616, 1.442695
  %v618 = vpow.pop %v617
  %v619 = vadd.f32 %v618, 1.0
  %v620 = vrcp.pop %v619
  %v621 = vmul.f32 1.0, %v620
  %v622 = vmul.f32 %v614, %v385
  %v623 = vmul.f32 %v608, %v615
  %v624 = vadd.f32 %v622, %v623
  %v625 = vtanh.pop %v624
  %v626 = vmul.f32 %v621, %v625
  %627 = vst [vmem:[#allocation3] sm:$0xff] %v626
  %s628 = smul.u32 1, 4
  %s629 = smul.addr %s628, 8
  %s630 = scalar_lea.vmem [#allocation2], %s629
  %v631 = vld [vmem:[%s630] sm:$0xff]
  %v632 = vld [vmem:[%s630 + $0x8] sm:$0xff]
  %v633 = vld [vmem:[%s630 + $0x10] sm:$0xff]
  %v634 = vld [vmem:[%s630 + $0x18] sm:$0xff]
  %v635 = vld [vmem:[%s4] sm:$0xff]
  %v636 = vld [vmem:[%s4 + $0x8] sm:$0xff]
  %v637 = vld [vmem:[%s4 + $0x10] sm:$0xff]
  %v638 = vld [vmem:[%s4 + $0x18] sm:$0xff]
  %v639 = vld [vmem:[%s4 + $0x20] sm:$0xff]
  %v640 = vld [vmem:[%s4 + $0x28] sm:$0xff]
  %v641 = vld [vmem:[%s4 + $0x30] sm:$0xff]
  %v642 = vld [vmem:[%s4 + $0x38] sm:$0xff]
  %v643 = vld [vmem:[%s4 + $0x40] sm:$0xff]
  %v644 = vld [vmem:[%s4 + $0x48] sm:$0xff]
  %v645 = vld [vmem:[%s4 + $0x50] sm:$0xff]
  %v646 = vld [vmem:[%s4 + $0x58] sm:$0xff]
  %v647 = vld [vmem:[%s4 + $0x60] sm:$0xff]
  %v648 = vld [vmem:[%s4 + $0x68] sm:$0xff]
  %v649 = vld [vmem:[%s4 + $0x70] sm:$0xff]
  %v650 = vld [vmem:[%s4 + $0x78] sm:$0xff]
  %v651 = vld [vmem:[%s4 + $0x80] sm:$0xff]
  %v652 = vld [vmem:[%s4 + $0x88] sm:$0xff]
  %v653 = vld [vmem:[%s4 + $0x90] sm:$0xff]
  %v654 = vld [vmem:[%s4 + $0x98] sm:$0xff]
  %v655 = vld [vmem:[%s4 + $0xa0] sm:$0xff]
  %v656 = vld [vmem:[%s4 + $0xa8] sm:$0xff]
  %v657 = vld [vmem:[%s4 + $0xb0] sm:$0xff]
  %v658 = vld [vmem:[%s4 + $0xb8] sm:$0xff]
  %v659 = vld [vmem:[%s4 + $0xc0] sm:$0xff]
  %v660 = vld [vmem:[%s4 + $0xc8] sm:$0xff]
  %v661 = vld [vmem:[%s4 + $0xd0] sm:$0xff]
  %v662 = vld [vmem:[%s4 + $0xd8] sm:$0xff]
  %v663 = vld [vmem:[%s4 + $0xe0] sm:$0xff]
  %v664 = vld [vmem:[%s4 + $0xe8] sm:$0xff]
  %v665 = vld [vmem:[%s4 + $0xf0] sm:$0xff]
  %v666 = vld [vmem:[%s4 + $0xf8] sm:$0xff]
  %v667 = vld [vmem:[%s4 + $0x100] sm:$0xff]
  %v668 = vld [vmem:[%s4 + $0x108] sm:$0xff]
  %v669 = vld [vmem:[%s4 + $0x110] sm:$0xff]
  %v670 = vld [vmem:[%s4 + $0x118] sm:$0xff]
  %v671 = vld [vmem:[%s4 + $0x120] sm:$0xff]
  %v672 = vld [vmem:[%s4 + $0x128] sm:$0xff]
  %v673 = vld [vmem:[%s4 + $0x130] sm:$0xff]
  %v674 = vld [vmem:[%s4 + $0x138] sm:$0xff]
  %v675 = vld [vmem:[%s4 + $0x140] sm:$0xff]
  %v676 = vld [vmem:[%s4 + $0x148] sm:$0xff]
  %v677 = vld [vmem:[%s4 + $0x150] sm:$0xff]
  %v678 = vld [vmem:[%s4 + $0x158] sm:$0xff]
  %v679 = vld [vmem:[%s4 + $0x160] sm:$0xff]
  %v680 = vld [vmem:[%s4 + $0x168] sm:$0xff]
  %v681 = vld [vmem:[%s4 + $0x170] sm:$0xff]
  %v682 = vld [vmem:[%s4 + $0x178] sm:$0xff]
  %v683 = vld [vmem:[%s4 + $0x180] sm:$0xff]
  %v684 = vld [vmem:[%s4 + $0x188] sm:$0xff]
  %v685 = vld [vmem:[%s4 + $0x190] sm:$0xff]
  %v686 = vld [vmem:[%s4 + $0x198] sm:$0xff]
  %v687 = vld [vmem:[%s4 + $0x1a0] sm:$0xff]
  %v688 = vld [vmem:[%s4 + $0x1a8] sm:$0xff]
  %v689 = vld [vmem:[%s4 + $0x1b0] sm:$0xff]
  %v690 = vld [vmem:[%s4 + $0x1b8] sm:$0xff]
  %v691 = vld [vmem:[%s4 + $0x1c0] sm:$0xff]
  %v692 = vld [vmem:[%s4 + $0x1c8] sm:$0xff]
  %v693 = vld [vmem:[%s4 + $0x1d0] sm:$0xff]
  %v694 = vld [vmem:[%s4 + $0x1d8] sm:$0xff]
  %v695 = vld [vmem:[%s4 + $0x1e0] sm:$0xff]
  %v696 = vld [vmem:[%s4 + $0x1e8] sm:$0xff]
  %v697 = vld [vmem:[%s4 + $0x1f0] sm:$0xff]
  %v698 = vld [vmem:[%s4 + $0x1f8] sm:$0xff]
  %699 = vmatprep.subr.mxu0 %v636
  %700 = vmatpush1.msra.mxu0 %v635
  %701 = vmatprep.subr.mxu0 %v640
  %702 = vmatpush1.msra.mxu0 %v639
  %703 = vmatprep.subr.mxu0 %v644
  %704 = vmatpush1.msra.mxu0 %v643
  %705 = vmatprep.subr.mxu0 %v648
  %706 = vmatpush1.msra.mxu0 %v647
  %707 = vmatprep.subr.mxu0 %v652
  %708 = vmatpush1.msra.mxu0 %v651
  %709 = vmatprep.subr.mxu0 %v656
  %710 = vmatpush1.msra.mxu0 %v655
  %711 = vmatprep.subr.mxu0 %v660
  %712 = vmatpush1.msra.mxu0 %v659
  %713 = vmatprep.subr.mxu0 %v664
  %714 = vmatpush1.msra.mxu0 %v663
  %715 = vmatprep.subr.mxu0 %v668
  %716 = vmatpush1.msra.mxu0 %v667
  %717 = vmatprep.subr.mxu0 %v672
  %718 = vmatpush1.msra.mxu0 %v671
  %719 = vmatprep.subr.mxu0 %v676
  %720 = vmatpush1.msra.mxu0 %v675
  %721 = vmatprep.subr.mxu0 %v680
  %722 = vmatpush1.msra.mxu0 %v679
  %723 = vmatprep.subr.mxu0 %v684
  %724 = vmatpush1.msra.mxu0 %v683
  %725 = vmatprep.subr.mxu0 %v688
  %726 = vmatpush1.msra.mxu0 %v687
  %727 = vmatprep.subr.mxu0 %v692
  %728 = vmatpush1.msra.mxu0 %v691
  %729 = vmatprep.subr.mxu0 %v696
  %730 = vmatpush1.msra.mxu0 %v695
  %731 = vmatprep.subr.mxu0 0.0
  %732 = vmatpush1.msra.mxu0 0.0
  %733 = vmatprep.subr.mxu0 0.0
  %734 = vmatpush1.msra.mxu0 0.0
  %735 = vmatprep.subr.mxu0 0.0
  %736 = vmatpush1.msra.mxu0 0.0
  %737 = vmatprep.subr.mxu0 0.0
  %738 = vmatpush1.msra.mxu0 0.0
  %739 = vmatprep.subr.mxu0 0.0
  %740 = vmatpush1.msra.mxu0 0.0
  %741 = vmatprep.subr.mxu0 0.0
  %742 = vmatpush1.msra.mxu0 0.0
  %743 = vmatprep.subr.mxu0 0.0
  %744 = vmatpush1.msra.mxu0 0.0
  %745 = vmatprep.subr.mxu0 0.0
  %746 = vmatpush1.msra.mxu0 0.0
  %747 = vmatprep.subr.mxu0 0.0
  %748 = vmatpush1.msra.mxu0 0.0
  %749 = vmatprep.subr.mxu0 0.0
  %750 = vmatpush1.msra.mxu0 0.0
  %751 = vmatprep.subr.mxu0 0.0
  %752 = vmatpush1.msra.mxu0 0.0
  %753 = vmatprep.subr.mxu0 0.0
  %754 = vmatpush1.msra.mxu0 0.0
  %755 = vmatprep.subr.mxu0 0.0
  %756 = vmatpush1.msra.mxu0 0.0
  %757 = vmatprep.subr.mxu0 0.0
  %758 = vmatpush1.msra.mxu0 0.0
  %759 = vmatprep.subr.mxu0 0.0
  %760 = vmatpush1.msra.mxu0 0.0
  %761 = vmatprep.subr.mxu0 0.0
  %762 = vmatpush1.msra.mxu0 0.0
  %763 = vmatprep.mubr.f32.mxu0 0.0
  %764 = vmatmul.mubr.f32.gmra.mrb[0].mxu0 %v626
  %v765 = vpop.f32.mrb[0].mxu0
  %v766 = vadd.f32 0.0, %v765
  %v767 = vpop.f32.mrb[0].mxu0
  %v768 = vadd.f32 0.0, %v767
  %769 = vdwg.mxu0
  %770 = vmatprep.subr.mxu0 %v638
  %771 = vmatpush1.msra.mxu0 %v637
  %772 = vmatprep.subr.mxu0 %v642
  %773 = vmatpush1.msra.mxu0 %v641
  %774 = vmatprep.subr.mxu0 %v646
  %775 = vmatpush1.msra.mxu0 %v645
  %776 = vmatprep.subr.mxu0 %v650
  %777 = vmatpush1.msra.mxu0 %v649
  %778 = vmatprep.subr.mxu0 %v654
  %779 = vmatpush1.msra.mxu0 %v653
  %780 = vmatprep.subr.mxu0 %v658
  %781 = vmatpush1.msra.mxu0 %v657
  %782 = vmatprep.subr.mxu0 %v662
  %783 = vmatpush1.msra.mxu0 %v661
  %784 = vmatprep.subr.mxu0 %v666
  %785 = vmatpush1.msra.mxu0 %v665
  %786 = vmatprep.subr.mxu0 %v670
  %787 = vmatpush1.msra.mxu0 %v669
  %788 = vmatprep.subr.mxu0 %v674
  %789 = vmatpush1.msra.mxu0 %v673
  %790 = vmatprep.subr.mxu0 %v678
  %791 = vmatpush1.msra.mxu0 %v677
  %792 = vmatprep.subr.mxu0 %v682
  %793 = vmatpush1.msra.mxu0 %v681
  %794 = vmatprep.subr.mxu0 %v686
  %795 = vmatpush1.msra.mxu0 %v685
  %796 = vmatprep.subr.mxu0 %v690
  %797 = vmatpush1.msra.mxu0 %v689
  %798 = vmatprep.subr.mxu0 %v694
  %799 = vmatpush1.msra.mxu0 %v693
  %800 = vmatprep.subr.mxu0 %v698
  %801 = vmatpush1.msra.mxu0 %v697
  %802 = vmatprep.subr.mxu0 0.0
  %803 = vmatpush1.msra.mxu0 0.0
  %804 = vmatprep.subr.mxu0 0.0
  %805 = vmatpush1.msra.mxu0 0.0
  %806 = vmatprep.subr.mxu0 0.0
  %807 = vmatpush1.msra.mxu0 0.0
  %808 = vmatprep.subr.mxu0 0.0
  %809 = vmatpush1.msra.mxu0 0.0
  %810 = vmatprep.subr.mxu0 0.0
  %811 = vmatpush1.msra.mxu0 0.0
  %812 = vmatprep.subr.mxu0 0.0
  %813 = vmatpush1.msra.mxu0 0.0
  %814 = vmatprep.subr.mxu0 0.0
  %815 = vmatpush1.msra.mxu0 0.0
  %816 = vmatprep.subr.mxu0 0.0
  %817 = vmatpush1.msra.mxu0 0.0
  %818 = vmatprep.subr.mxu0 0.0
  %819 = vmatpush1.msra.mxu0 0.0
  %820 = vmatprep.subr.mxu0 0.0
  %821 = vmatpush1.msra.mxu0 0.0
  %822 = vmatprep.subr.mxu0 0.0
  %823 = vmatpush1.msra.mxu0 0.0
  %824 = vmatprep.subr.mxu0 0.0
  %825 = vmatpush1.msra.mxu0 0.0
  %826 = vmatprep.subr.mxu0 0.0
  %827 = vmatpush1.msra.mxu0 0.0
  %828 = vmatprep.subr.mxu0 0.0
  %829 = vmatpush1.msra.mxu0 0.0
  %830 = vmatprep.subr.mxu0 0.0
  %831 = vmatpush1.msra.mxu0 0.0
  %832 = vmatprep.subr.mxu0 0.0
  %833 = vmatpush1.msra.mxu0 0.0
  %834 = vmatprep.mubr.f32.mxu0 0.0
  %835 = vmatmul.mubr.f32.gmra.mrb[0].mxu0 %v626
  %v836 = vpop.f32.mrb[0].mxu0
  %v837 = vadd.f32 0.0, %v836
  %v838 = vpop.f32.mrb[0].mxu0
  %v839 = vadd.f32 0.0, %v838
  %840 = vdwg.mxu0
  %v841 = vadd.f32 %v631, %v766
  %v842 = vadd.f32 %v632, %v768
  %v843 = vadd.f32 %v633, %v837
  %v844 = vadd.f32 %v634, %v839
  %v845 = vxor.u32 %v841, 2147483648
  %v846 = vmul.f32 %v845, 1.442695
  %v847 = vpow.pop %v846
  %v848 = vadd.f32 %v847, 1.0
  %v849 = vrcp.pop %v848
  %v850 = vmul.f32 1.0, %v849
  %v851 = vxor.u32 %v842, 2147483648
  %v852 = vmul.f32 %v851, 1.442695
  %v853 = vpow.pop %v852
  %v854 = vadd.f32 %v853, 1.0
  %v855 = vrcp.pop %v854
  %v856 = vmul.f32 1.0, %v855
  %v857 = vtanh.pop %v843
  %v858 = vxor.u32 %v844, 2147483648
  %v859 = vmul.f32 %v858, 1.442695
  %v860 = vpow.pop %v859
  %v861 = vadd.f32 %v860, 1.0
  %v862 = vrcp.pop %v861
  %v863 = vmul.f32 1.0, %v862
  %v864 = vmul.f32 %v856, %v624
  %v865 = vmul.f32 %v850, %v857
  %v866 = vadd.f32 %v864, %v865
  %v867 = vtanh.pop %v866
  %v868 = vmul.f32 %v863, %v867
  %s869 = scalar_lea.vmem [#allocation3], 8
  %870 = vst [vmem:[%s869] sm:$0xff] %v868
  %s871 = smul.u32 2, 4
  %s872 = smul.addr %s871, 8
  %s873 = scalar_lea.vmem [#allocation2], %s872
  %v874 = vld [vmem:[%s873] sm:$0xff]
  %v875 = vld [vmem:[%s873 + $0x8] sm:$0xff]
  %v876 = vld [vmem:[%s873 + $0x10] sm:$0xff]
  %v877 = vld [vmem:[%s873 + $0x18] sm:$0xff]
  %v878 = vld [vmem:[%s4] sm:$0xff]
  %v879 = vld [vmem:[%s4 + $0x8] sm:$0xff]
  %v880 = vld [vmem:[%s4 + $0x10] sm:$0xff]
  %v881 = vld [vmem:[%s4 + $0x18] sm:$0xff]
  %v882 = vld [vmem:[%s4 + $0x20] sm:$0xff]
  %v883 = vld [vmem:[%s4 + $0x28] sm:$0xff]
  %v884 = vld [vmem:[%s4 + $0x30] sm:$0xff]
  %v885 = vld [vmem:[%s4 + $0x38] sm:$0xff]
  %v886 = vld [vmem:[%s4 + $0x40] sm:$0xff]
  %v887 = vld [vmem:[%s4 + $0x48] sm:$0xff]
  %v888 = vld [vmem:[%s4 + $0x50] sm:$0xff]
  %v889 = vld [vmem:[%s4 + $0x58] sm:$0xff]
  %v890 = vld [vmem:[%s4 + $0x60] sm:$0xff]
  %v891 = vld [vmem:[%s4 + $0x68] sm:$0xff]
  %v892 = vld [vmem:[%s4 + $0x70] sm:$0xff]
  %v893 = vld [vmem:[%s4 + $0x78] sm:$0xff]
  %v894 = vld [vmem:[%s4 + $0x80] sm:$0xff]
  %v895 = vld [vmem:[%s4 + $0x88] sm:$0xff]
  %v896 = vld [vmem:[%s4 + $0x90] sm:$0xff]
  %v897 = vld [vmem:[%s4 + $0x98] sm:$0xff]
  %v898 = vld [vmem:[%s4 + $0xa0] sm:$0xff]
  %v899 = vld [vmem:[%s4 + $0xa8] sm:$0xff]
  %v900 = vld [vmem:[%s4 + $0xb0] sm:$0xff]
  %v901 = vld [vmem:[%s4 + $0xb8] sm:$0xff]
  %v902 = vld [vmem:[%s4 + $0xc0] sm:$0xff]
  %v903 = vld [vmem:[%s4 + $0xc8] sm:$0xff]
  %v904 = vld [vmem:[%s4 + $0xd0] sm:$0xff]
  %v905 = vld [vmem:[%s4 + $0xd8] sm:$0xff]
  %v906 = vld [vmem:[%s4 + $0xe0] sm:$0xff]
  %v907 = vld [vmem:[%s4 + $0xe8] sm:$0xff]
  %v908 = vld [vmem:[%s4 + $0xf0] sm:$0xff]
  %v909 = vld [vmem:[%s4 + $0xf8] sm:$0xff]
  %v910 = vld [vmem:[%s4 + $0x100] sm:$0xff]
  %v911 = vld [vmem:[%s4 + $0x108] sm:$0xff]
  %v912 = vld [vmem:[%s4 + $0x110] sm:$0xff]
  %v913 = vld [vmem:[%s4 + $0x118] sm:$0xff]
  %v914 = vld [vmem:[%s4 + $0x120] sm:$0xff]
  %v915 = vld [vmem:[%s4 + $0x128] sm:$0xff]
  %v916 = vld [vmem:[%s4 + $0x130] sm:$0xff]
  %v917 = vld [vmem:[%s4 + $0x138] sm:$0xff]
  %v918 = vld [vmem:[%s4 + $0x140] sm:$0xff]
  %v919 = vld [vmem:[%s4 + $0x148] sm:$0xff]
  %v920 = vld [vmem:[%s4 + $0x150] sm:$0xff]
  %v921 = vld [vmem:[%s4 + $0x158] sm:$0xff]
  %v922 = vld [vmem:[%s4 + $0x160] sm:$0xff]
  %v923 = vld [vmem:[%s4 + $0x168] sm:$0xff]
  %v924 = vld [vmem:[%s4 + $0x170] sm:$0xff]
  %v925 = vld [vmem:[%s4 + $0x178] sm:$0xff]
  %v926 = vld [vmem:[%s4 + $0x180] sm:$0xff]
  %v927 = vld [vmem:[%s4 + $0x188] sm:$0xff]
  %v928 = vld [vmem:[%s4 + $0x190] sm:$0xff]
  %v929 = vld [vmem:[%s4 + $0x198] sm:$0xff]
  %v930 = vld [vmem:[%s4 + $0x1a0] sm:$0xff]
  %v931 = vld [vmem:[%s4 + $0x1a8] sm:$0xff]
  %v932 = vld [vmem:[%s4 + $0x1b0] sm:$0xff]
  %v933 = vld [vmem:[%s4 + $0x1b8] sm:$0xff]
  %v934 = vld [vmem:[%s4 + $0x1c0] sm:$0xff]
  %v935 = vld [vmem:[%s4 + $0x1c8] sm:$0xff]
  %v936 = vld [vmem:[%s4 + $0x1d0] sm:$0xff]
  %v937 = vld [vmem:[%s4 + $0x1d8] sm:$0xff]
  %v938 = vld [vmem:[%s4 + $0x1e0] sm:$0xff]
  %v939 = vld [vmem:[%s4 + $0x1e8] sm:$0xff]
  %v940 = vld [vmem:[%s4 + $0x1f0] sm:$0xff]
  %v941 = vld [vmem:[%s4 + $0x1f8] sm:$0xff]
  %942 = vmatprep.subr.mxu0 %v879
  %943 = vmatpush1.msra.mxu0 %v878
  %944 = vmatprep.subr.mxu0 %v883
  %945 = vmatpush1.msra.mxu0 %v882
  %946 = vmatprep.subr.mxu0 %v887
  %947 = vmatpush1.msra.mxu0 %v886
  %948 = vmatprep.subr.mxu0 %v891
  %949 = vmatpush1.msra.mxu0 %v890
  %950 = vmatprep.subr.mxu0 %v895
  %951 = vmatpush1.msra.mxu0 %v894
  %952 = vmatprep.subr.mxu0 %v899
  %953 = vmatpush1.msra.mxu0 %v898
  %954 = vmatprep.subr.mxu0 %v903
  %955 = vmatpush1.msra.mxu0 %v902
  %956 = vmatprep.subr.mxu0 %v907
  %957 = vmatpush1.msra.mxu0 %v906
  %958 = vmatprep.subr.mxu0 %v911
  %959 = vmatpush1.msra.mxu0 %v910
  %960 = vmatprep.subr.mxu0 %v915
  %961 = vmatpush1.msra.mxu0 %v914
  %962 = vmatprep.subr.mxu0 %v919
  %963 = vmatpush1.msra.mxu0 %v918
  %964 = vmatprep.subr.mxu0 %v923
  %965 = vmatpush1.msra.mxu0 %v922
  %966 = vmatprep.subr.mxu0 %v927
  %967 = vmatpush1.msra.mxu0 %v926
  %968 = vmatprep.subr.mxu0 %v931
  %969 = vmatpush1.msra.mxu0 %v930
  %970 = vmatprep.subr.mxu0 %v935
  %971 = vmatpush1.msra.mxu0 %v934
  %972 = vmatprep.subr.mxu0 %v939
  %973 = vmatpush1.msra.mxu0 %v938
  %974 = vmatprep.subr.mxu0 0.0
  %975 = vmatpush1.msra.mxu0 0.0
  %976 = vmatprep.subr.mxu0 0.0
  %977 = vmatpush1.msra.mxu0 0.0
  %978 = vmatprep.subr.mxu0 0.0
  %979 = vmatpush1.msra.mxu0 0.0
  %980 = vmatprep.subr.mxu0 0.0
  %981 = vmatpush1.msra.mxu0 0.0
  %982 = vmatprep.subr.mxu0 0.0
  %983 = vmatpush1.msra.mxu0 0.0
  %984 = vmatprep.subr.mxu0 0.0
  %985 = vmatpush1.msra.mxu0 0.0
  %986 = vmatprep.subr.mxu0 0.0
  %987 = vmatpush1.msra.mxu0 0.0
  %988 = vmatprep.subr.mxu0 0.0
  %989 = vmatpush1.msra.mxu0 0.0
  %990 = vmatprep.subr.mxu0 0.0
  %991 = vmatpush1.msra.mxu0 0.0
  %992 = vmatprep.subr.mxu0 0.0
  %993 = vmatpush1.msra.mxu0 0.0
  %994 = vmatprep.subr.mxu0 0.0
  %995 = vmatpush1.msra.mxu0 0.0
  %996 = vmatprep.subr.mxu0 0.0
  %997 = vmatpush1.msra.mxu0 0.0
  %998 = vmatprep.subr.mxu0 0.0
  %999 = vmatpush1.msra.mxu0 0.0
  %1000 = vmatprep.subr.mxu0 0.0
  %1001 = vmatpush1.msra.mxu0 0.0
  %1002 = vmatprep.subr.mxu0 0.0
  %1003 = vmatpush1.msra.mxu0 0.0
  %1004 = vmatprep.subr.mxu0 0.0
  %1005 = vmatpush1.msra.mxu0 0.0
  %1006 = vmatprep.mubr.f32.mxu0 0.0
  %1007 = vmatmul.mubr.f32.gmra.mrb[0].mxu0 %v868
  %v1008 = vpop.f32.mrb[0].mxu0
  %v1009 = vadd.f32 0.0, %v1008
  %v1010 = vpop.f32.mrb[0].mxu0
  %v1011 = vadd.f32 0.0, %v1010
  %1012 = vdwg.mxu0
  %1013 = vmatprep.subr.mxu0 %v881
  %1014 = vmatpush1.msra.mxu0 %v880
  %1015 = vmatprep.subr.mxu0 %v885
  %1016 = vmatpush1.msra.mxu0 %v884
  %1017 = vmatprep.subr.mxu0 %v889
  %1018 = vmatpush1.msra.mxu0 %v888
  %1019 = vmatprep.subr.mxu0 %v893
  %1020 = vmatpush1.msra.mxu0 %v892
  %1021 = vmatprep.subr.mxu0 %v897
  %1022 = vmatpush1.msra.mxu0 %v896
  %1023 = vmatprep.subr.mxu0 %v901
  %1024 = vmatpush1.msra.mxu0 %v900
  %1025 = vmatprep.subr.mxu0 %v905
  %1026 = vmatpush1.msra.mxu0 %v904
  %1027 = vmatprep.subr.mxu0 %v909
  %1028 = vmatpush1.msra.mxu0 %v908
  %1029 = vmatprep.subr.mxu0 %v913
  %1030 = vmatpush1.msra.mxu0 %v912
  %1031 = vmatprep.subr.mxu0 %v917
  %1032 = vmatpush1.msra.mxu0 %v916
  %1033 = vmatprep.subr.mxu0 %v921
  %1034 = vmatpush1.msra.mxu0 %v920
  %1035 = vmatprep.subr.mxu0 %v925
  %1036 = vmatpush1.msra.mxu0 %v924
  %1037 = vmatprep.subr.mxu0 %v929
  %1038 = vmatpush1.msra.mxu0 %v928
  %1039 = vmatprep.subr.mxu0 %v933
  %1040 = vmatpush1.msra.mxu0 %v932
  %1041 = vmatprep.subr.mxu0 %v937
  %1042 = vmatpush1.msra.mxu0 %v936
  %1043 = vmatprep.subr.mxu0 %v941
  %1044 = vmatpush1.msra.mxu0 %v940
  %1045 = vmatprep.subr.mxu0 0.0
  %1046 = vmatpush1.msra.mxu0 0.0
  %1047 = vmatprep.subr.mxu0 0.0
  %1048 = vmatpush1.msra.mxu0 0.0
  %1049 = vmatprep.subr.mxu0 0.0
  %1050 = vmatpush1.msra.mxu0 0.0
  %1051 = vmatprep.subr.mxu0 0.0
  %1052 = vmatpush1.msra.mxu0 0.0
  %1053 = vmatprep.subr.mxu0 0.0
  %1054 = vmatpush1.msra.mxu0 0.0
  %1055 = vmatprep.subr.mxu0 0.0
  %1056 = vmatpush1.msra.mxu0 0.0
  %1057 = vmatprep.subr.mxu0 0.0
  %1058 = vmatpush1.msra.mxu0 0.0
  %1059 = vmatprep.subr.mxu0 0.0
  %1060 = vmatpush1.msra.mxu0 0.0
  %1061 = vmatprep.subr.mxu0 0.0
  %1062 = vmatpush1.msra.mxu0 0.0
  %1063 = vmatprep.subr.mxu0 0.0
  %1064 = vmatpush1.msra.mxu0 0.0
  %1065 = vmatprep.subr.mxu0 0.0
  %1066 = vmatpush1.msra.mxu0 0.0
  %1067 = vmatprep.subr.mxu0 0.0
  %1068 = vmatpush1.msra.mxu0 0.0
  %1069 = vmatprep.subr.mxu0 0.0
  %1070 = vmatpush1.msra.mxu0 0.0
  %1071 = vmatprep.subr.mxu0 0.0
  %1072 = vmatpush1.msra.mxu0 0.0
  %1073 = vmatprep.subr.mxu0 0.0
  %1074 = vmatpush1.msra.mxu0 0.0
  %1075 = vmatprep.subr.mxu0 0.0
  %1076 = vmatpush1.msra.mxu0 0.0
  %1077 = vmatprep.mubr.f32.mxu0 0.0
  %1078 = vmatmul.mubr.f32.gmra.mrb[0].mxu0 %v868
  %v1079 = vpop.f32.mrb[0].mxu0
  %v1080 = vadd.f32 0.0, %v1079
  %v1081 = vpop.f32.mrb[0].mxu0
  %v1082 = vadd.f32 0.0, %v1081
  %1083 = vdwg.mxu0
  %v1084 = vadd.f32 %v874, %v1009
  %v1085 = vadd.f32 %v875, %v1011
  %v1086 = vadd.f32 %v876, %v1080
  %v1087 = vadd.f32 %v877, %v1082
  %v1088 = vxor.u32 %v1084, 2147483648
  %v1089 = vmul.f32 %v1088, 1.442695
  %v1090 = vpow.pop %v1089
  %v1091 = vadd.f32 %v1090, 1.0
  %v1092 = vrcp.pop %v1091
  %v1093 = vmul.f32 1.0, %v1092
  %v1094 = vxor.u32 %v1085, 2147483648
  %v1095 = vmul.f32 %v1094, 1.442695
  %v1096 = vpow.pop %v1095
  %v1097 = vadd.f32 %v1096, 1.0
  %v1098 = vrcp.pop %v1097
  %v1099 = vmul.f32 1.0, %v1098
  %v1100 = vtanh.pop %v1086
  %v1101 = vxor.u32 %v1087, 2147483648
  %v1102 = vmul.f32 %v1101, 1.442695
  %v1103 = vpow.pop %v1102
  %v1104 = vadd.f32 %v1103, 1.0
  %v1105 = vrcp.pop %v1104
  %v1106 = vmul.f32 1.0, %v1105
  %v1107 = vmul.f32 %v1099, %v866
  %v1108 = vmul.f32 %v1093, %v1100
  %v1109 = vadd.f32 %v1107, %v1108
  %v1110 = vtanh.pop %v1109
  %v1111 = vmul.f32 %v1106, %v1110
  %s1112 = scalar_lea.vmem [#allocation3], 16
  %1113 = vst [vmem:[%s1112] sm:$0xff] %v1111
  %s1114 = smul.u32 3, 4
  %s1115 = smul.addr %s1114, 8
  %s1116 = scalar_lea.vmem [#allocation2], %s1115
  %v1117 = vld [vmem:[%s1116] sm:$0xff]
  %v1118 = vld [vmem:[%s1116 + $0x8] sm:$0xff]
  %v1119 = vld [vmem:[%s1116 + $0x10] sm:$0xff]
  %v1120 = vld [vmem:[%s1116 + $0x18] sm:$0xff]
  %v1121 = vld [vmem:[%s4] sm:$0xff]
  %v1122 = vld [vmem:[%s4 + $0x8] sm:$0xff]
  %v1123 = vld [vmem:[%s4 + $0x10] sm:$0xff]
  %v1124 = vld [vmem:[%s4 + $0x18] sm:$0xff]
  %v1125 = vld [vmem:[%s4 + $0x20] sm:$0xff]
  %v1126 = vld [vmem:[%s4 + $0x28] sm:$0xff]
  %v1127 = vld [vmem:[%s4 + $0x30] sm:$0xff]
  %v1128 = vld [vmem:[%s4 + $0x38] sm:$0xff]
  %v1129 = vld [vmem:[%s4 + $0x40] sm:$0xff]
  %v1130 = vld [vmem:[%s4 + $0x48] sm:$0xff]
  %v1131 = vld [vmem:[%s4 + $0x50] sm:$0xff]
  %v1132 = vld [vmem:[%s4 + $0x58] sm:$0xff]
  %v1133 = vld [vmem:[%s4 + $0x60] sm:$0xff]
  %v1134 = vld [vmem:[%s4 + $0x68] sm:$0xff]
  %v1135 = vld [vmem:[%s4 + $0x70] sm:$0xff]
  %v1136 = vld [vmem:[%s4 + $0x78] sm:$0xff]
  %v1137 = vld [vmem:[%s4 + $0x80] sm:$0xff]
  %v1138 = vld [vmem:[%s4 + $0x88] sm:$0xff]
  %v1139 = vld [vmem:[%s4 + $0x90] sm:$0xff]
  %v1140 = vld [vmem:[%s4 + $0x98] sm:$0xff]
  %v1141 = vld [vmem:[%s4 + $0xa0] sm:$0xff]
  %v1142 = vld [vmem:[%s4 + $0xa8] sm:$0xff]
  %v1143 = vld [vmem:[%s4 + $0xb0] sm:$0xff]
  %v1144 = vld [vmem:[%s4 + $0xb8] sm:$0xff]
  %v1145 = vld [vmem:[%s4 + $0xc0] sm:$0xff]
  %v1146 = vld [vmem:[%s4 + $0xc8] sm:$0xff]
  %v1147 = vld [vmem:[%s4 + $0xd0] sm:$0xff]
  %v1148 = vld [vmem:[%s4 + $0xd8] sm:$0xff]
  %v1149 = vld [vmem:[%s4 + $0xe0] sm:$0xff]
  %v1150 = vld [vmem:[%s4 + $0xe8] sm:$0xff]
  %v1151 = vld [vmem:[%s4 + $0xf0] sm:$0xff]
  %v1152 = vld [vmem:[%s4 + $0xf8] sm:$0xff]
  %v1153 = vld [vmem:[%s4 + $0x100] sm:$0xff]
  %v1154 = vld [vmem:[%s4 + $0x108] sm:$0xff]
  %v1155 = vld [vmem:[%s4 + $0x110] sm:$0xff]
  %v1156 = vld [vmem:[%s4 + $0x118] sm:$0xff]
  %v1157 = vld [vmem:[%s4 + $0x120] sm:$0xff]
  %v1158 = vld [vmem:[%s4 + $0x128] sm:$0xff]
  %v1159 = vld [vmem:[%s4 + $0x130] sm:$0xff]
  %v1160 = vld [vmem:[%s4 + $0x138] sm:$0xff]
  %v1161 = vld [vmem:[%s4 + $0x140] sm:$0xff]
  %v1162 = vld [vmem:[%s4 + $0x148] sm:$0xff]
  %v1163 = vld [vmem:[%s4 + $0x150] sm:$0xff]
  %v1164 = vld [vmem:[%s4 + $0x158] sm:$0xff]
  %v1165 = vld [vmem:[%s4 + $0x160] sm:$0xff]
  %v1166 = vld [vmem:[%s4 + $0x168] sm:$0xff]
  %v1167 = vld [vmem:[%s4 + $0x170] sm:$0xff]
  %v1168 = vld [vmem:[%s4 + $0x178] sm:$0xff]
  %v1169 = vld [vmem:[%s4 + $0x180] sm:$0xff]
  %v1170 = vld [vmem:[%s4 + $0x188] sm:$0xff]
  %v1171 = vld [vmem:[%s4 + $0x190] sm:$0xff]
  %v1172 = vld [vmem:[%s4 + $0x198] sm:$0xff]
  %v1173 = vld [vmem:[%s4 + $0x1a0] sm:$0xff]
  %v1174 = vld [vmem:[%s4 + $0x1a8] sm:$0xff]
  %v1175 = vld [vmem:[%s4 + $0x1b0] sm:$0xff]
  %v1176 = vld [vmem:[%s4 + $0x1b8] sm:$0xff]
  %v1177 = vld [vmem:[%s4 + $0x1c0] sm:$0xff]
  %v1178 = vld [vmem:[%s4 + $0x1c8] sm:$0xff]
  %v1179 = vld [vmem:[%s4 + $0x1d0] sm:$0xff]
  %v1180 = vld [vmem:[%s4 + $0x1d8] sm:$0xff]
  %v1181 = vld [vmem:[%s4 + $0x1e0] sm:$0xff]
  %v1182 = vld [vmem:[%s4 + $0x1e8] sm:$0xff]
  %v1183 = vld [vmem:[%s4 + $0x1f0] sm:$0xff]
  %v1184 = vld [vmem:[%s4 + $0x1f8] sm:$0xff]
  %1185 = vmatprep.subr.mxu0 %v1122
  %1186 = vmatpush1.msra.mxu0 %v1121
  %1187 = vmatprep.subr.mxu0 %v1126
  %1188 = vmatpush1.msra.mxu0 %v1125
  %1189 = vmatprep.subr.mxu0 %v1130
  %1190 = vmatpush1.msra.mxu0 %v1129
  %1191 = vmatprep.subr.mxu0 %v1134
  %1192 = vmatpush1.msra.mxu0 %v1133
  %1193 = vmatprep.subr.mxu0 %v1138
  %1194 = vmatpush1.msra.mxu0 %v1137
  %1195 = vmatprep.subr.mxu0 %v1142
  %1196 = vmatpush1.msra.mxu0 %v1141
  %1197 = vmatprep.subr.mxu0 %v1146
  %1198 = vmatpush1.msra.mxu0 %v1145
  %1199 = vmatprep.subr.mxu0 %v1150
  %1200 = vmatpush1.msra.mxu0 %v1149
  %1201 = vmatprep.subr.mxu0 %v1154
  %1202 = vmatpush1.msra.mxu0 %v1153
  %1203 = vmatprep.subr.mxu0 %v1158
  %1204 = vmatpush1.msra.mxu0 %v1157
  %1205 = vmatprep.subr.mxu0 %v1162
  %1206 = vmatpush1.msra.mxu0 %v1161
  %1207 = vmatprep.subr.mxu0 %v1166
  %1208 = vmatpush1.msra.mxu0 %v1165
  %1209 = vmatprep.subr.mxu0 %v1170
  %1210 = vmatpush1.msra.mxu0 %v1169
  %1211 = vmatprep.subr.mxu0 %v1174
  %1212 = vmatpush1.msra.mxu0 %v1173
  %1213 = vmatprep.subr.mxu0 %v1178
  %1214 = vmatpush1.msra.mxu0 %v1177
  %1215 = vmatprep.subr.mxu0 %v1182
  %1216 = vmatpush1.msra.mxu0 %v1181
  %1217 = vmatprep.subr.mxu0 0.0
  %1218 = vmatpush1.msra.mxu0 0.0
  %1219 = vmatprep.subr.mxu0 0.0
  %1220 = vmatpush1.msra.mxu0 0.0
  %1221 = vmatprep.subr.mxu0 0.0
  %1222 = vmatpush1.msra.mxu0 0.0
  %1223 = vmatprep.subr.mxu0 0.0
  %1224 = vmatpush1.msra.mxu0 0.0
  %1225 = vmatprep.subr.mxu0 0.0
  %1226 = vmatpush1.msra.mxu0 0.0
  %1227 = vmatprep.subr.mxu0 0.0
  %1228 = vmatpush1.msra.mxu0 0.0
  %1229 = vmatprep.subr.mxu0 0.0
  %1230 = vmatpush1.msra.mxu0 0.0
  %1231 = vmatprep.subr.mxu0 0.0
  %1232 = vmatpush1.msra.mxu0 0.0
  %1233 = vmatprep.subr.mxu0 0.0
  %1234 = vmatpush1.msra.mxu0 0.0
  %1235 = vmatprep.subr.mxu0 0.0
  %1236 = vmatpush1.msra.mxu0 0.0
  %1237 = vmatprep.subr.mxu0 0.0
  %1238 = vmatpush1.msra.mxu0 0.0
  %1239 = vmatprep.subr.mxu0 0.0
  %1240 = vmatpush1.msra.mxu0 0.0
  %1241 = vmatprep.subr.mxu0 0.0
  %1242 = vmatpush1.msra.mxu0 0.0
  %1243 = vmatprep.subr.mxu0 0.0
  %1244 = vmatpush1.msra.mxu0 0.0
  %1245 = vmatprep.subr.mxu0 0.0
  %1246 = vmatpush1.msra.mxu0 0.0
  %1247 = vmatprep.subr.mxu0 0.0
  %1248 = vmatpush1.msra.mxu0 0.0
  %1249 = vmatprep.mubr.f32.mxu0 0.0
  %1250 = vmatmul.mubr.f32.gmra.mrb[0].mxu0 %v1111
  %v1251 = vpop.f32.mrb[0].mxu0
  %v1252 = vadd.f32 0.0, %v1251
  %v1253 = vpop.f32.mrb[0].mxu0
  %v1254 = vadd.f32 0.0, %v1253
  %1255 = vdwg.mxu0
  %1256 = vmatprep.subr.mxu0 %v1124
  %1257 = vmatpush1.msra.mxu0 %v1123
  %1258 = vmatprep.subr.mxu0 %v1128
  %1259 = vmatpush1.msra.mxu0 %v1127
  %1260 = vmatprep.subr.mxu0 %v1132
  %1261 = vmatpush1.msra.mxu0 %v1131
  %1262 = vmatprep.subr.mxu0 %v1136
  %1263 = vmatpush1.msra.mxu0 %v1135
  %1264 = vmatprep.subr.mxu0 %v1140
  %1265 = vmatpush1.msra.mxu0 %v1139
  %1266 = vmatprep.subr.mxu0 %v1144
  %1267 = vmatpush1.msra.mxu0 %v1143
  %1268 = vmatprep.subr.mxu0 %v1148
  %1269 = vmatpush1.msra.mxu0 %v1147
  %1270 = vmatprep.subr.mxu0 %v1152
  %1271 = vmatpush1.msra.mxu0 %v1151
  %1272 = vmatprep.subr.mxu0 %v1156
  %1273 = vmatpush1.msra.mxu0 %v1155
  %1274 = vmatprep.subr.mxu0 %v1160
  %1275 = vmatpush1.msra.mxu0 %v1159
  %1276 = vmatprep.subr.mxu0 %v1164
  %1277 = vmatpush1.msra.mxu0 %v1163
  %1278 = vmatprep.subr.mxu0 %v1168
  %1279 = vmatpush1.msra.mxu0 %v1167
  %1280 = vmatprep.subr.mxu0 %v1172
  %1281 = vmatpush1.msra.mxu0 %v1171
  %1282 = vmatprep.subr.mxu0 %v1176
  %1283 = vmatpush1.msra.mxu0 %v1175
  %1284 = vmatprep.subr.mxu0 %v1180
  %1285 = vmatpush1.msra.mxu0 %v1179
  %1286 = vmatprep.subr.mxu0 %v1184
  %1287 = vmatpush1.msra.mxu0 %v1183
  %1288 = vmatprep.subr.mxu0 0.0
  %1289 = vmatpush1.msra.mxu0 0.0
  %1290 = vmatprep.subr.mxu0 0.0
  %1291 = vmatpush1.msra.mxu0 0.0
  %1292 = vmatprep.subr.mxu0 0.0
  %1293 = vmatpush1.msra.mxu0 0.0
  %1294 = vmatprep.subr.mxu0 0.0
  %1295 = vmatpush1.msra.mxu0 0.0
  %1296 = vmatprep.subr.mxu0 0.0
  %1297 = vmatpush1.msra.mxu0 0.0
  %1298 = vmatprep.subr.mxu0 0.0
  %1299 = vmatpush1.msra.mxu0 0.0
  %1300 = vmatprep.subr.mxu0 0.0
  %1301 = vmatpush1.msra.mxu0 0.0
  %1302 = vmatprep.subr.mxu0 0.0
  %1303 = vmatpush1.msra.mxu0 0.0
  %1304 = vmatprep.subr.mxu0 0.0
  %1305 = vmatpush1.msra.mxu0 0.0
  %1306 = vmatprep.subr.mxu0 0.0
  %1307 = vmatpush1.msra.mxu0 0.0
  %1308 = vmatprep.subr.mxu0 0.0
  %1309 = vmatpush1.msra.mxu0 0.0
  %1310 = vmatprep.subr.mxu0 0.0
  %1311 = vmatpush1.msra.mxu0 0.0
  %1312 = vmatprep.subr.mxu0 0.0
  %1313 = vmatpush1.msra.mxu0 0.0
  %1314 = vmatprep.subr.mxu0 0.0
  %1315 = vmatpush1.msra.mxu0 0.0
  %1316 = vmatprep.subr.mxu0 0.0
  %1317 = vmatpush1.msra.mxu0 0.0
  %1318 = vmatprep.subr.mxu0 0.0
  %1319 = vmatpush1.msra.mxu0 0.0
  %1320 = vmatprep.mubr.f32.mxu0 0.0
  %1321 = vmatmul.mubr.f32.gmra.mrb[0].mxu0 %v1111
  %v1322 = vpop.f32.mrb[0].mxu0
  %v1323 = vadd.f32 0.0, %v1322
  %v1324 = vpop.f32.mrb[0].mxu0
  %v1325 = vadd.f32 0.0, %v1324
  %1326 = vdwg.mxu0
  %v1327 = vadd.f32 %v1117, %v1252
  %v1328 = vadd.f32 %v1118, %v1254
  %v1329 = vadd.f32 %v1119, %v1323
  %v1330 = vadd.f32 %v1120, %v1325
  %v1331 = vxor.u32 %v1327, 2147483648
  %v1332 = vmul.f32 %v1331, 1.442695
  %v1333 = vpow.pop %v1332
  %v1334 = vadd.f32 %v1333, 1.0
  %v1335 = vrcp.pop %v1334
  %v1336 = vmul.f32 1.0, %v1335
  %v1337 = vxor.u32 %v1328, 2147483648
  %v1338 = vmul.f32 %v1337, 1.442695
  %v1339 = vpow.pop %v1338
  %v1340 = vadd.f32 %v1339, 1.0
  %v1341 = vrcp.pop %v1340
  %v1342 = vmul.f32 1.0, %v1341
  %v1343 = vtanh.pop %v1329
  %v1344 = vxor.u32 %v1330, 2147483648
  %v1345 = vmul.f32 %v1344, 1.442695
  %v1346 = vpow.pop %v1345
  %v1347 = vadd.f32 %v1346, 1.0
  %v1348 = vrcp.pop %v1347
  %v1349 = vmul.f32 1.0, %v1348
  %v1350 = vmul.f32 %v1342, %v1109
  %v1351 = vmul.f32 %v1336, %v1343
  %v1352 = vadd.f32 %v1350, %v1351
  %v1353 = vtanh.pop %v1352
  %v1354 = vmul.f32 %v1349, %v1353
  %s1355 = scalar_lea.vmem [#allocation3], 24
  %1356 = vst [vmem:[%s1355] sm:$0xff] %v1354
  %s1357 = smul.u32 4, 4
  %s1358 = smul.addr %s1357, 8
  %s1359 = scalar_lea.vmem [#allocation2], %s1358
  %v1360 = vld [vmem:[%s1359] sm:$0xff]
  %v1361 = vld [vmem:[%s1359 + $0x8] sm:$0xff]
  %v1362 = vld [vmem:[%s1359 + $0x10] sm:$0xff]
  %v1363 = vld [vmem:[%s1359 + $0x18] sm:$0xff]
  %v1364 = vld [vmem:[%s4] sm:$0xff]
  %v1365 = vld [vmem:[%s4 + $0x8] sm:$0xff]
  %v1366 = vld [vmem:[%s4 + $0x10] sm:$0xff]
  %v1367 = vld [vmem:[%s4 + $0x18] sm:$0xff]
  %v1368 = vld [vmem:[%s4 + $0x20] sm:$0xff]
  %v1369 = vld [vmem:[%s4 + $0x28] sm:$0xff]
  %v1370 = vld [vmem:[%s4 + $0x30] sm:$0xff]
  %v1371 = vld [vmem:[%s4 + $0x38] sm:$0xff]
  %v1372 = vld [vmem:[%s4 + $0x40] sm:$0xff]
  %v1373 = vld [vmem:[%s4 + $0x48] sm:$0xff]
  %v1374 = vld [vmem:[%s4 + $0x50] sm:$0xff]
  %v1375 = vld [vmem:[%s4 + $0x58] sm:$0xff]
  %v1376 = vld [vmem:[%s4 + $0x60] sm:$0xff]
  %v1377 = vld [vmem:[%s4 + $0x68] sm:$0xff]
  %v1378 = vld [vmem:[%s4 + $0x70] sm:$0xff]
  %v1379 = vld [vmem:[%s4 + $0x78] sm:$0xff]
  %v1380 = vld [vmem:[%s4 + $0x80] sm:$0xff]
  %v1381 = vld [vmem:[%s4 + $0x88] sm:$0xff]
  %v1382 = vld [vmem:[%s4 + $0x90] sm:$0xff]
  %v1383 = vld [vmem:[%s4 + $0x98] sm:$0xff]
  %v1384 = vld [vmem:[%s4 + $0xa0] sm:$0xff]
  %v1385 = vld [vmem:[%s4 + $0xa8] sm:$0xff]
  %v1386 = vld [vmem:[%s4 + $0xb0] sm:$0xff]
  %v1387 = vld [vmem:[%s4 + $0xb8] sm:$0xff]
  %v1388 = vld [vmem:[%s4 + $0xc0] sm:$0xff]
  %v1389 = vld [vmem:[%s4 + $0xc8] sm:$0xff]
  %v1390 = vld [vmem:[%s4 + $0xd0] sm:$0xff]
  %v1391 = vld [vmem:[%s4 + $0xd8] sm:$0xff]
  %v1392 = vld [vmem:[%s4 + $0xe0] sm:$0xff]
  %v1393 = vld [vmem:[%s4 + $0xe8] sm:$0xff]
  %v1394 = vld [vmem:[%s4 + $0xf0] sm:$0xff]
  %v1395 = vld [vmem:[%s4 + $0xf8] sm:$0xff]
  %v1396 = vld [vmem:[%s4 + $0x100] sm:$0xff]
  %v1397 = vld [vmem:[%s4 + $0x108] sm:$0xff]
  %v1398 = vld [vmem:[%s4 + $0x110] sm:$0xff]
  %v1399 = vld [vmem:[%s4 + $0x118] sm:$0xff]
  %v1400 = vld [vmem:[%s4 + $0x120] sm:$0xff]
  %v1401 = vld [vmem:[%s4 + $0x128] sm:$0xff]
  %v1402 = vld [vmem:[%s4 + $0x130] sm:$0xff]
  %v1403 = vld [vmem:[%s4 + $0x138] sm:$0xff]
  %v1404 = vld [vmem:[%s4 + $0x140] sm:$0xff]
  %v1405 = vld [vmem:[%s4 + $0x148] sm:$0xff]
  %v1406 = vld [vmem:[%s4 + $0x150] sm:$0xff]
  %v1407 = vld [vmem:[%s4 + $0x158] sm:$0xff]
  %v1408 = vld [vmem:[%s4 + $0x160] sm:$0xff]
  %v1409 = vld [vmem:[%s4 + $0x168] sm:$0xff]
  %v1410 = vld [vmem:[%s4 + $0x170] sm:$0xff]
  %v1411 = vld [vmem:[%s4 + $0x178] sm:$0xff]
  %v1412 = vld [vmem:[%s4 + $0x180] sm:$0xff]
  %v1413 = vld [vmem:[%s4 + $0x188] sm:$0xff]
  %v1414 = vld [vmem:[%s4 + $0x190] sm:$0xff]
  %v1415 = vld [vmem:[%s4 + $0x198] sm:$0xff]
  %v1416 = vld [vmem:[%s4 + $0x1a0] sm:$0xff]
  %v1417 = vld [vmem:[%s4 + $0x1a8] sm:$0xff]
  %v1418 = vld [vmem:[%s4 + $0x1b0] sm:$0xff]
  %v1419 = vld [vmem:[%s4 + $0x1b8] sm:$0xff]
  %v1420 = vld [vmem:[%s4 + $0x1c0] sm:$0xff]
  %v1421 = vld [vmem:[%s4 + $0x1c8] sm:$0xff]
  %v1422 = vld [vmem:[%s4 + $0x1d0] sm:$0xff]
  %v1423 = vld [vmem:[%s4 + $0x1d8] sm:$0xff]
  %v1424 = vld [vmem:[%s4 + $0x1e0] sm:$0xff]
  %v1425 = vld [vmem:[%s4 + $0x1e8] sm:$0xff]
  %v1426 = vld [vmem:[%s4 + $0x1f0] sm:$0xff]
  %v1427 = vld [vmem:[%s4 + $0x1f8] sm:$0xff]
  %1428 = vmatprep.subr.mxu0 %v1365
  %1429 = vmatpush1.msra.mxu0 %v1364
  %1430 = vmatprep.subr.mxu0 %v1369
  %1431 = vmatpush1.msra.mxu0 %v1368
  %1432 = vmatprep.subr.mxu0 %v1373
  %1433 = vmatpush1.msra.mxu0 %v1372
  %1434 = vmatprep.subr.mxu0 %v1377
  %1435 = vmatpush1.msra.mxu0 %v1376
  %1436 = vmatprep.subr.mxu0 %v1381
  %1437 = vmatpush1.msra.mxu0 %v1380
  %1438 = vmatprep.subr.mxu0 %v1385
  %1439 = vmatpush1.msra.mxu0 %v1384
  %1440 = vmatprep.subr.mxu0 %v1389
  %1441 = vmatpush1.msra.mxu0 %v1388
  %1442 = vmatprep.subr.mxu0 %v1393
  %1443 = vmatpush1.msra.mxu0 %v1392
  %1444 = vmatprep.subr.mxu0 %v1397
  %1445 = vmatpush1.msra.mxu0 %v1396
  %1446 = vmatprep.subr.mxu0 %v1401
  %1447 = vmatpush1.msra.mxu0 %v1400
  %1448 = vmatprep.subr.mxu0 %v1405
  %1449 = vmatpush1.msra.mxu0 %v1404
  %1450 = vmatprep.subr.mxu0 %v1409
  %1451 = vmatpush1.msra.mxu0 %v1408
  %1452 = vmatprep.subr.mxu0 %v1413
  %1453 = vmatpush1.msra.mxu0 %v1412
  %1454 = vmatprep.subr.mxu0 %v1417
  %1455 = vmatpush1.msra.mxu0 %v1416
  %1456 = vmatprep.subr.mxu0 %v1421
  %1457 = vmatpush1.msra.mxu0 %v1420
  %1458 = vmatprep.subr.mxu0 %v1425
  %1459 = vmatpush1.msra.mxu0 %v1424
  %1460 = vmatprep.subr.mxu0 0.0
  %1461 = vmatpush1.msra.mxu0 0.0
  %1462 = vmatprep.subr.mxu0 0.0
  %1463 = vmatpush1.msra.mxu0 0.0
  %1464 = vmatprep.subr.mxu0 0.0
  %1465 = vmatpush1.msra.mxu0 0.0
  %1466 = vmatprep.subr.mxu0 0.0
  %1467 = vmatpush1.msra.mxu0 0.0
  %1468 = vmatprep.subr.mxu0 0.0
  %1469 = vmatpush1.msra.mxu0 0.0
  %1470 = vmatprep.subr.mxu0 0.0
  %1471 = vmatpush1.msra.mxu0 0.0
  %1472 = vmatprep.subr.mxu0 0.0
  %1473 = vmatpush1.msra.mxu0 0.0
  %1474 = vmatprep.subr.mxu0 0.0
  %1475 = vmatpush1.msra.mxu0 0.0
  %1476 = vmatprep.subr.mxu0 0.0
  %1477 = vmatpush1.msra.mxu0 0.0
  %1478 = vmatprep.subr.mxu0 0.0
  %1479 = vmatpush1.msra.mxu0 0.0
  %1480 = vmatprep.subr.mxu0 0.0
  %1481 = vmatpush1.msra.mxu0 0.0
  %1482 = vmatprep.subr.mxu0 0.0
  %1483 = vmatpush1.msra.mxu0 0.0
  %1484 = vmatprep.subr.mxu0 0.0
  %1485 = vmatpush1.msra.mxu0 0.0
  %1486 = vmatprep.subr.mxu0 0.0
  %1487 = vmatpush1.msra.mxu0 0.0
  %1488 = vmatprep.subr.mxu0 0.0
  %1489 = vmatpush1.msra.mxu0 0.0
  %1490 = vmatprep.subr.mxu0 0.0
  %1491 = vmatpush1.msra.mxu0 0.0
  %1492 = vmatprep.mubr.f32.mxu0 0.0
  %1493 = vmatmul.mubr.f32.gmra.mrb[0].mxu0 %v1354
  %v1494 = vpop.f32.mrb[0].mxu0
  %v1495 = vadd.f32 0.0, %v1494
  %v1496 = vpop.f32.mrb[0].mxu0
  %v1497 = vadd.f32 0.0, %v1496
  %1498 = vdwg.mxu0
  %1499 = vmatprep.subr.mxu0 %v1367
  %1500 = vmatpush1.msra.mxu0 %v1366
  %1501 = vmatprep.subr.mxu0 %v1371
  %1502 = vmatpush1.msra.mxu0 %v1370
  %1503 = vmatprep.subr.mxu0 %v1375
  %1504 = vmatpush1.msra.mxu0 %v1374
  %1505 = vmatprep.subr.mxu0 %v1379
  %1506 = vmatpush1.msra.mxu0 %v1378
  %1507 = vmatprep.subr.mxu0 %v1383
  %1508 = vmatpush1.msra.mxu0 %v1382
  %1509 = vmatprep.subr.mxu0 %v1387
  %1510 = vmatpush1.msra.mxu0 %v1386
  %1511 = vmatprep.subr.mxu0 %v1391
  %1512 = vmatpush1.msra.mxu0 %v1390
  %1513 = vmatprep.subr.mxu0 %v1395
  %1514 = vmatpush1.msra.mxu0 %v1394
  %1515 = vmatprep.subr.mxu0 %v1399
  %1516 = vmatpush1.msra.mxu0 %v1398
  %1517 = vmatprep.subr.mxu0 %v1403
  %1518 = vmatpush1.msra.mxu0 %v1402
  %1519 = vmatprep.subr.mxu0 %v1407
  %1520 = vmatpush1.msra.mxu0 %v1406
  %1521 = vmatprep.subr.mxu0 %v1411
  %1522 = vmatpush1.msra.mxu0 %v1410
  %1523 = vmatprep.subr.mxu0 %v1415
  %1524 = vmatpush1.msra.mxu0 %v1414
  %1525 = vmatprep.subr.mxu0 %v1419
  %1526 = vmatpush1.msra.mxu0 %v1418
  %1527 = vmatprep.subr.mxu0 %v1423
  %1528 = vmatpush1.msra.mxu0 %v1422
  %1529 = vmatprep.subr.mxu0 %v1427
  %1530 = vmatpush1.msra.mxu0 %v1426
  %1531 = vmatprep.subr.mxu0 0.0
  %1532 = vmatpush1.msra.mxu0 0.0
  %1533 = vmatprep.subr.mxu0 0.0
  %1534 = vmatpush1.msra.mxu0 0.0
  %1535 = vmatprep.subr.mxu0 0.0
  %1536 = vmatpush1.msra.mxu0 0.0
  %1537 = vmatprep.subr.mxu0 0.0
  %1538 = vmatpush1.msra.mxu0 0.0
  %1539 = vmatprep.subr.mxu0 0.0
  %1540 = vmatpush1.msra.mxu0 0.0
  %1541 = vmatprep.subr.mxu0 0.0
  %1542 = vmatpush1.msra.mxu0 0.0
  %1543 = vmatprep.subr.mxu0 0.0
  %1544 = vmatpush1.msra.mxu0 0.0
  %1545 = vmatprep.subr.mxu0 0.0
  %1546 = vmatpush1.msra.mxu0 0.0
  %1547 = vmatprep.subr.mxu0 0.0
  %1548 = vmatpush1.msra.mxu0 0.0
  %1549 = vmatprep.subr.mxu0 0.0
  %1550 = vmatpush1.msra.mxu0 0.0
  %1551 = vmatprep.subr.mxu0 0.0
  %1552 = vmatpush1.msra.mxu0 0.0
  %1553 = vmatprep.subr.mxu0 0.0
  %1554 = vmatpush1.msra.mxu0 0.0
  %1555 = vmatprep.subr.mxu0 0.0
  %1556 = vmatpush1.msra.mxu0 0.0
  %1557 = vmatprep.subr.mxu0 0.0
  %1558 = vmatpush1.msra.mxu0 0.0
  %1559 = vmatprep.subr.mxu0 0.0
  %1560 = vmatpush1.msra.mxu0 0.0
  %1561 = vmatprep.subr.mxu0 0.0
  %1562 = vmatpush1.msra.mxu0 0.0
  %1563 = vmatprep.mubr.f32.mxu0 0.0
  %1564 = vmatmul.mubr.f32.gmra.mrb[0].mxu0 %v1354
  %v1565 = vpop.f32.mrb[0].mxu0
  %v1566 = vadd.f32 0.0, %v1565
  %v1567 = vpop.f32.mrb[0].mxu0
  %v1568 = vadd.f32 0.0, %v1567
  %1569 = vdwg.mxu0
  %v1570 = vadd.f32 %v1360, %v1495
  %v1571 = vadd.f32 %v1361, %v1497
  %v1572 = vadd.f32 %v1362, %v1566
  %v1573 = vadd.f32 %v1363, %v1568
  %v1574 = vxor.u32 %v1570, 2147483648
  %v1575 = vmul.f32 %v1574, 1.442695
  %v1576 = vpow.pop %v1575
  %v1577 = vadd.f32 %v1576, 1.0
  %v1578 = vrcp.pop %v1577
  %v1579 = vmul.f32 1.0, %v1578
  %v1580 = vxor.u32 %v1571, 2147483648
  %v1581 = vmul.f32 %v1580, 1.442695
  %v1582 = vpow.pop %v1581
  %v1583 = vadd.f32 %v1582, 1.0
  %v1584 = vrcp.pop %v1583
  %v1585 = vmul.f32 1.0, %v1584
  %v1586 = vtanh.pop %v1572
  %v1587 = vxor.u32 %v1573, 2147483648
  %v1588 = vmul.f32 %v1587, 1.442695
  %v1589 = vpow.pop %v1588
  %v1590 = vadd.f32 %v1589, 1.0
  %v1591 = vrcp.pop %v1590
  %v1592 = vmul.f32 1.0, %v1591
  %v1593 = vmul.f32 %v1585, %v1352
  %v1594 = vmul.f32 %v1579, %v1586
  %v1595 = vadd.f32 %v1593, %v1594
  %v1596 = vtanh.pop %v1595
  %v1597 = vmul.f32 %v1592, %v1596
  %s1598 = scalar_lea.vmem [#allocation3], 32
  %1599 = vst [vmem:[%s1598] sm:$0xff] %v1597
  %s1600 = smul.u32 5, 4
  %s1601 = smul.addr %s1600, 8
  %s1602 = scalar_lea.vmem [#allocation2], %s1601
  %v1603 = vld [vmem:[%s1602] sm:$0xff]
  %v1604 = vld [vmem:[%s1602 + $0x8] sm:$0xff]
  %v1605 = vld [vmem:[%s1602 + $0x10] sm:$0xff]
  %v1606 = vld [vmem:[%s1602 + $0x18] sm:$0xff]
  %v1607 = vld [vmem:[%s4] sm:$0xff]
  %v1608 = vld [vmem:[%s4 + $0x8] sm:$0xff]
  %v1609 = vld [vmem:[%s4 + $0x10] sm:$0xff]
  %v1610 = vld [vmem:[%s4 + $0x18] sm:$0xff]
  %v1611 = vld [vmem:[%s4 + $0x20] sm:$0xff]
  %v1612 = vld [vmem:[%s4 + $0x28] sm:$0xff]
  %v1613 = vld [vmem:[%s4 + $0x30] sm:$0xff]
  %v1614 = vld [vmem:[%s4 + $0x38] sm:$0xff]
  %v1615 = vld [vmem:[%s4 + $0x40] sm:$0xff]
  %v1616 = vld [vmem:[%s4 + $0x48] sm:$0xff]
  %v1617 = vld [vmem:[%s4 + $0x50] sm:$0xff]
  %v1618 = vld [vmem:[%s4 + $0x58] sm:$0xff]
  %v1619 = vld [vmem:[%s4 + $0x60] sm:$0xff]
  %v1620 = vld [vmem:[%s4 + $0x68] sm:$0xff]
  %v1621 = vld [vmem:[%s4 + $0x70] sm:$0xff]
  %v1622 = vld [vmem:[%s4 + $0x78] sm:$0xff]
  %v1623 = vld [vmem:[%s4 + $0x80] sm:$0xff]
  %v1624 = vld [vmem:[%s4 + $0x88] sm:$0xff]
  %v1625 = vld [vmem:[%s4 + $0x90] sm:$0xff]
  %v1626 = vld [vmem:[%s4 + $0x98] sm:$0xff]
  %v1627 = vld [vmem:[%s4 + $0xa0] sm:$0xff]
  %v1628 = vld [vmem:[%s4 + $0xa8] sm:$0xff]
  %v1629 = vld [vmem:[%s4 + $0xb0] sm:$0xff]
  %v1630 = vld [vmem:[%s4 + $0xb8] sm:$0xff]
  %v1631 = vld [vmem:[%s4 + $0xc0] sm:$0xff]
  %v1632 = vld [vmem:[%s4 + $0xc8] sm:$0xff]
  %v1633 = vld [vmem:[%s4 + $0xd0] sm:$0xff]
  %v1634 = vld [vmem:[%s4 + $0xd8] sm:$0xff]
  %v1635 = vld [vmem:[%s4 + $0xe0] sm:$0xff]
  %v1636 = vld [vmem:[%s4 + $0xe8] sm:$0xff]
  %v1637 = vld [vmem:[%s4 + $0xf0] sm:$0xff]
  %v1638 = vld [vmem:[%s4 + $0xf8] sm:$0xff]
  %v1639 = vld [vmem:[%s4 + $0x100] sm:$0xff]
  %v1640 = vld [vmem:[%s4 + $0x108] sm:$0xff]
  %v1641 = vld [vmem:[%s4 + $0x110] sm:$0xff]
  %v1642 = vld [vmem:[%s4 + $0x118] sm:$0xff]
  %v1643 = vld [vmem:[%s4 + $0x120] sm:$0xff]
  %v1644 = vld [vmem:[%s4 + $0x128] sm:$0xff]
  %v1645 = vld [vmem:[%s4 + $0x130] sm:$0xff]
  %v1646 = vld [vmem:[%s4 + $0x138] sm:$0xff]
  %v1647 = vld [vmem:[%s4 + $0x140] sm:$0xff]
  %v1648 = vld [vmem:[%s4 + $0x148] sm:$0xff]
  %v1649 = vld [vmem:[%s4 + $0x150] sm:$0xff]
  %v1650 = vld [vmem:[%s4 + $0x158] sm:$0xff]
  %v1651 = vld [vmem:[%s4 + $0x160] sm:$0xff]
  %v1652 = vld [vmem:[%s4 + $0x168] sm:$0xff]
  %v1653 = vld [vmem:[%s4 + $0x170] sm:$0xff]
  %v1654 = vld [vmem:[%s4 + $0x178] sm:$0xff]
  %v1655 = vld [vmem:[%s4 + $0x180] sm:$0xff]
  %v1656 = vld [vmem:[%s4 + $0x188] sm:$0xff]
  %v1657 = vld [vmem:[%s4 + $0x190] sm:$0xff]
  %v1658 = vld [vmem:[%s4 + $0x198] sm:$0xff]
  %v1659 = vld [vmem:[%s4 + $0x1a0] sm:$0xff]
  %v1660 = vld [vmem:[%s4 + $0x1a8] sm:$0xff]
  %v1661 = vld [vmem:[%s4 + $0x1b0] sm:$0xff]
  %v1662 = vld [vmem:[%s4 + $0x1b8] sm:$0xff]
  %v1663 = vld [vmem:[%s4 + $0x1c0] sm:$0xff]
  %v1664 = vld [vmem:[%s4 + $0x1c8] sm:$0xff]
  %v1665 = vld [vmem:[%s4 + $0x1d0] sm:$0xff]
  %v1666 = vld [vmem:[%s4 + $0x1d8] sm:$0xff]
  %v1667 = vld [vmem:[%s4 + $0x1e0] sm:$0xff]
  %v1668 = vld [vmem:[%s4 + $0x1e8] sm:$0xff]
  %v1669 = vld [vmem:[%s4 + $0x1f0] sm:$0xff]
  %v1670 = vld [vmem:[%s4 + $0x1f8] sm:$0xff]
  %1671 = vmatprep.subr.mxu0 %v1608
  %1672 = vmatpush1.msra.mxu0 %v1607
  %1673 = vmatprep.subr.mxu0 %v1612
  %1674 = vmatpush1.msra.mxu0 %v1611
  %1675 = vmatprep.subr.mxu0 %v1616
  %1676 = vmatpush1.msra.mxu0 %v1615
  %1677 = vmatprep.subr.mxu0 %v1620
  %1678 = vmatpush1.msra.mxu0 %v1619
  %1679 = vmatprep.subr.mxu0 %v1624
  %1680 = vmatpush1.msra.mxu0 %v1623
  %1681 = vmatprep.subr.mxu0 %v1628
  %1682 = vmatpush1.msra.mxu0 %v1627
  %1683 = vmatprep.subr.mxu0 %v1632
  %1684 = vmatpush1.msra.mxu0 %v1631
  %1685 = vmatprep.subr.mxu0 %v1636
  %1686 = vmatpush1.msra.mxu0 %v1635
  %1687 = vmatprep.subr.mxu0 %v1640
  %1688 = vmatpush1.msra.mxu0 %v1639
  %1689 = vmatprep.subr.mxu0 %v1644
  %1690 = vmatpush1.msra.mxu0 %v1643
  %1691 = vmatprep.subr.mxu0 %v1648
  %1692 = vmatpush1.msra.mxu0 %v1647
  %1693 = vmatprep.subr.mxu0 %v1652
  %1694 = vmatpush1.msra.mxu0 %v1651
  %1695 = vmatprep.subr.mxu0 %v1656
  %1696 = vmatpush1.msra.mxu0 %v1655
  %1697 = vmatprep.subr.mxu0 %v1660
  %1698 = vmatpush1.msra.mxu0 %v1659
  %1699 = vmatprep.subr.mxu0 %v1664
  %1700 = vmatpush1.msra.mxu0 %v1663
  %1701 = vmatprep.subr.mxu0 %v1668
  %1702 = vmatpush1.msra.mxu0 %v1667
  %1703 = vmatprep.subr.mxu0 0.0
  %1704 = vmatpush1.msra.mxu0 0.0
  %1705 = vmatprep.subr.mxu0 0.0
  %1706 = vmatpush1.msra.mxu0 0.0
  %1707 = vmatprep.subr.mxu0 0.0
  %1708 = vmatpush1.msra.mxu0 0.0
  %1709 = vmatprep.subr.mxu0 0.0
  %1710 = vmatpush1.msra.mxu0 0.0
  %1711 = vmatprep.subr.mxu0 0.0
  %1712 = vmatpush1.msra.mxu0 0.0
  %1713 = vmatprep.subr.mxu0 0.0
  %1714 = vmatpush1.msra.mxu0 0.0
  %1715 = vmatprep.subr.mxu0 0.0
  %1716 = vmatpush1.msra.mxu0 0.0
  %1717 = vmatprep.subr.mxu0 0.0
  %1718 = vmatpush1.msra.mxu0 0.0
  %1719 = vmatprep.subr.mxu0 0.0
  %1720 = vmatpush1.msra.mxu0 0.0
  %1721 = vmatprep.subr.mxu0 0.0
  %1722 = vmatpush1.msra.mxu0 0.0
  %1723 = vmatprep.subr.mxu0 0.0
  %1724 = vmatpush1.msra.mxu0 0.0
  %1725 = vmatprep.subr.mxu0 0.0
  %1726 = vmatpush1.msra.mxu0 0.0
  %1727 = vmatprep.subr.mxu0 0.0
  %1728 = vmatpush1.msra.mxu0 0.0
  %1729 = vmatprep.subr.mxu0 0.0
  %1730 = vmatpush1.msra.mxu0 0.0
  %1731 = vmatprep.subr.mxu0 0.0
  %1732 = vmatpush1.msra.mxu0 0.0
  %1733 = vmatprep.subr.mxu0 0.0
  %1734 = vmatpush1.msra.mxu0 0.0
  %1735 = vmatprep.mubr.f32.mxu0 0.0
  %1736 = vmatmul.mubr.f32.gmra.mrb[0].mxu0 %v1597
  %v1737 = vpop.f32.mrb[0].mxu0
  %v1738 = vadd.f32 0.0, %v1737
  %v1739 = vpop.f32.mrb[0].mxu0
  %v1740 = vadd.f32 0.0, %v1739
  %1741 = vdwg.mxu0
  %1742 = vmatprep.subr.mxu0 %v1610
  %1743 = vmatpush1.msra.mxu0 %v1609
  %1744 = vmatprep.subr.mxu0 %v1614
  %1745 = vmatpush1.msra.mxu0 %v1613
  %1746 = vmatprep.subr.mxu0 %v1618
  %1747 = vmatpush1.msra.mxu0 %v1617
  %1748 = vmatprep.subr.mxu0 %v1622
  %1749 = vmatpush1.msra.mxu0 %v1621
  %1750 = vmatprep.subr.mxu0 %v1626
  %1751 = vmatpush1.msra.mxu0 %v1625
  %1752 = vmatprep.subr.mxu0 %v1630
  %1753 = vmatpush1.msra.mxu0 %v1629
  %1754 = vmatprep.subr.mxu0 %v1634
  %1755 = vmatpush1.msra.mxu0 %v1633
  %1756 = vmatprep.subr.mxu0 %v1638
  %1757 = vmatpush1.msra.mxu0 %v1637
  %1758 = vmatprep.subr.mxu0 %v1642
  %1759 = vmatpush1.msra.mxu0 %v1641
  %1760 = vmatprep.subr.mxu0 %v1646
  %1761 = vmatpush1.msra.mxu0 %v1645
  %1762 = vmatprep.subr.mxu0 %v1650
  %1763 = vmatpush1.msra.mxu0 %v1649
  %1764 = vmatprep.subr.mxu0 %v1654
  %1765 = vmatpush1.msra.mxu0 %v1653
  %1766 = vmatprep.subr.mxu0 %v1658
  %1767 = vmatpush1.msra.mxu0 %v1657
  %1768 = vmatprep.subr.mxu0 %v1662
  %1769 = vmatpush1.msra.mxu0 %v1661
  %1770 = vmatprep.subr.mxu0 %v1666
  %1771 = vmatpush1.msra.mxu0 %v1665
  %1772 = vmatprep.subr.mxu0 %v1670
  %1773 = vmatpush1.msra.mxu0 %v1669
  %1774 = vmatprep.subr.mxu0 0.0
  %1775 = vmatpush1.msra.mxu0 0.0
  %1776 = vmatprep.subr.mxu0 0.0
  %1777 = vmatpush1.msra.mxu0 0.0
  %1778 = vmatprep.subr.mxu0 0.0
  %1779 = vmatpush1.msra.mxu0 0.0
  %1780 = vmatprep.subr.mxu0 0.0
  %1781 = vmatpush1.msra.mxu0 0.0
  %1782 = vmatprep.subr.mxu0 0.0
  %1783 = vmatpush1.msra.mxu0 0.0
  %1784 = vmatprep.subr.mxu0 0.0
  %1785 = vmatpush1.msra.mxu0 0.0
  %1786 = vmatprep.subr.mxu0 0.0
  %1787 = vmatpush1.msra.mxu0 0.0
  %1788 = vmatprep.subr.mxu0 0.0
  %1789 = vmatpush1.msra.mxu0 0.0
  %1790 = vmatprep.subr.mxu0 0.0
  %1791 = vmatpush1.msra.mxu0 0.0
  %1792 = vmatprep.subr.mxu0 0.0
  %1793 = vmatpush1.msra.mxu0 0.0
  %1794 = vmatprep.subr.mxu0 0.0
  %1795 = vmatpush1.msra.mxu0 0.0
  %1796 = vmatprep.subr.mxu0 0.0
  %1797 = vmatpush1.msra.mxu0 0.0
  %1798 = vmatprep.subr.mxu0 0.0
  %1799 = vmatpush1.msra.mxu0 0.0
  %1800 = vmatprep.subr.mxu0 0.0
  %1801 = vmatpush1.msra.mxu0 0.0
  %1802 = vmatprep.subr.mxu0 0.0
  %1803 = vmatpush1.msra.mxu0 0.0
  %1804 = vmatprep.subr.mxu0 0.0
  %1805 = vmatpush1.msra.mxu0 0.0
  %1806 = vmatprep.mubr.f32.mxu0 0.0
  %1807 = vmatmul.mubr.f32.gmra.mrb[0].mxu0 %v1597
  %v1808 = vpop.f32.mrb[0].mxu0
  %v1809 = vadd.f32 0.0, %v1808
  %v1810 = vpop.f32.mrb[0].mxu0
  %v1811 = vadd.f32 0.0, %v1810
  %1812 = vdwg.mxu0
  %v1813 = vadd.f32 %v1603, %v1738
  %v1814 = vadd.f32 %v1604, %v1740
  %v1815 = vadd.f32 %v1605, %v1809
  %v1816 = vadd.f32 %v1606, %v1811
  %v1817 = vxor.u32 %v1813, 2147483648
  %v1818 = vmul.f32 %v1817, 1.442695
  %v1819 = vpow.pop %v1818
  %v1820 = vadd.f32 %v1819, 1.0
  %v1821 = vrcp.pop %v1820
  %v1822 = vmul.f32 1.0, %v1821
  %v1823 = vxor.u32 %v1814, 2147483648
  %v1824 = vmul.f32 %v1823, 1.442695
  %v1825 = vpow.pop %v1824
  %v1826 = vadd.f32 %v1825, 1.0
  %v1827 = vrcp.pop %v1826
  %v1828 = vmul.f32 1.0, %v1827
  %v1829 = vtanh.pop %v1815
  %v1830 = vxor.u32 %v1816, 2147483648
  %v1831 = vmul.f32 %v1830, 1.442695
  %v1832 = vpow.pop %v1831
  %v1833 = vadd.f32 %v1832, 1.0
  %v1834 = vrcp.pop %v1833
  %v1835 = vmul.f32 1.0, %v1834
  %v1836 = vmul.f32 %v1828, %v1595
  %v1837 = vmul.f32 %v1822, %v1829
  %v1838 = vadd.f32 %v1836, %v1837
  %v1839 = vtanh.pop %v1838
  %v1840 = vmul.f32 %v1835, %v1839
  %s1841 = scalar_lea.vmem [#allocation3], 40
  %1842 = vst [vmem:[%s1841] sm:$0xff] %v1840
  %s1843 = smul.u32 6, 4
  %s1844 = smul.addr %s1843, 8
  %s1845 = scalar_lea.vmem [#allocation2], %s1844
  %v1846 = vld [vmem:[%s1845] sm:$0xff]
  %v1847 = vld [vmem:[%s1845 + $0x8] sm:$0xff]
  %v1848 = vld [vmem:[%s1845 + $0x10] sm:$0xff]
  %v1849 = vld [vmem:[%s1845 + $0x18] sm:$0xff]
  %v1850 = vld [vmem:[%s4] sm:$0xff]
  %v1851 = vld [vmem:[%s4 + $0x8] sm:$0xff]
  %v1852 = vld [vmem:[%s4 + $0x10] sm:$0xff]
  %v1853 = vld [vmem:[%s4 + $0x18] sm:$0xff]
  %v1854 = vld [vmem:[%s4 + $0x20] sm:$0xff]
  %v1855 = vld [vmem:[%s4 + $0x28] sm:$0xff]
  %v1856 = vld [vmem:[%s4 + $0x30] sm:$0xff]
  %v1857 = vld [vmem:[%s4 + $0x38] sm:$0xff]
  %v1858 = vld [vmem:[%s4 + $0x40] sm:$0xff]
  %v1859 = vld [vmem:[%s4 + $0x48] sm:$0xff]
  %v1860 = vld [vmem:[%s4 + $0x50] sm:$0xff]
  %v1861 = vld [vmem:[%s4 + $0x58] sm:$0xff]
  %v1862 = vld [vmem:[%s4 + $0x60] sm:$0xff]
  %v1863 = vld [vmem:[%s4 + $0x68] sm:$0xff]
  %v1864 = vld [vmem:[%s4 + $0x70] sm:$0xff]
  %v1865 = vld [vmem:[%s4 + $0x78] sm:$0xff]
  %v1866 = vld [vmem:[%s4 + $0x80] sm:$0xff]
  %v1867 = vld [vmem:[%s4 + $0x88] sm:$0xff]
  %v1868 = vld [vmem:[%s4 + $0x90] sm:$0xff]
  %v1869 = vld [vmem:[%s4 + $0x98] sm:$0xff]
  %v1870 = vld [vmem:[%s4 + $0xa0] sm:$0xff]
  %v1871 = vld [vmem:[%s4 + $0xa8] sm:$0xff]
  %v1872 = vld [vmem:[%s4 + $0xb0] sm:$0xff]
  %v1873 = vld [vmem:[%s4 + $0xb8] sm:$0xff]
  %v1874 = vld [vmem:[%s4 + $0xc0] sm:$0xff]
  %v1875 = vld [vmem:[%s4 + $0xc8] sm:$0xff]
  %v1876 = vld [vmem:[%s4 + $0xd0] sm:$0xff]
  %v1877 = vld [vmem:[%s4 + $0xd8] sm:$0xff]
  %v1878 = vld [vmem:[%s4 + $0xe0] sm:$0xff]
  %v1879 = vld [vmem:[%s4 + $0xe8] sm:$0xff]
  %v1880 = vld [vmem:[%s4 + $0xf0] sm:$0xff]
  %v1881 = vld [vmem:[%s4 + $0xf8] sm:$0xff]
  %v1882 = vld [vmem:[%s4 + $0x100] sm:$0xff]
  %v1883 = vld [vmem:[%s4 + $0x108] sm:$0xff]
  %v1884 = vld [vmem:[%s4 + $0x110] sm:$0xff]
  %v1885 = vld [vmem:[%s4 + $0x118] sm:$0xff]
  %v1886 = vld [vmem:[%s4 + $0x120] sm:$0xff]
  %v1887 = vld [vmem:[%s4 + $0x128] sm:$0xff]
  %v1888 = vld [vmem:[%s4 + $0x130] sm:$0xff]
  %v1889 = vld [vmem:[%s4 + $0x138] sm:$0xff]
  %v1890 = vld [vmem:[%s4 + $0x140] sm:$0xff]
  %v1891 = vld [vmem:[%s4 + $0x148] sm:$0xff]
  %v1892 = vld [vmem:[%s4 + $0x150] sm:$0xff]
  %v1893 = vld [vmem:[%s4 + $0x158] sm:$0xff]
  %v1894 = vld [vmem:[%s4 + $0x160] sm:$0xff]
  %v1895 = vld [vmem:[%s4 + $0x168] sm:$0xff]
  %v1896 = vld [vmem:[%s4 + $0x170] sm:$0xff]
  %v1897 = vld [vmem:[%s4 + $0x178] sm:$0xff]
  %v1898 = vld [vmem:[%s4 + $0x180] sm:$0xff]
  %v1899 = vld [vmem:[%s4 + $0x188] sm:$0xff]
  %v1900 = vld [vmem:[%s4 + $0x190] sm:$0xff]
  %v1901 = vld [vmem:[%s4 + $0x198] sm:$0xff]
  %v1902 = vld [vmem:[%s4 + $0x1a0] sm:$0xff]
  %v1903 = vld [vmem:[%s4 + $0x1a8] sm:$0xff]
  %v1904 = vld [vmem:[%s4 + $0x1b0] sm:$0xff]
  %v1905 = vld [vmem:[%s4 + $0x1b8] sm:$0xff]
  %v1906 = vld [vmem:[%s4 + $0x1c0] sm:$0xff]
  %v1907 = vld [vmem:[%s4 + $0x1c8] sm:$0xff]
  %v1908 = vld [vmem:[%s4 + $0x1d0] sm:$0xff]
  %v1909 = vld [vmem:[%s4 + $0x1d8] sm:$0xff]
  %v1910 = vld [vmem:[%s4 + $0x1e0] sm:$0xff]
  %v1911 = vld [vmem:[%s4 + $0x1e8] sm:$0xff]
  %v1912 = vld [vmem:[%s4 + $0x1f0] sm:$0xff]
  %v1913 = vld [vmem:[%s4 + $0x1f8] sm:$0xff]
  %1914 = vmatprep.subr.mxu0 %v1851
  %1915 = vmatpush1.msra.mxu0 %v1850
  %1916 = vmatprep.subr.mxu0 %v1855
  %1917 = vmatpush1.msra.mxu0 %v1854
  %1918 = vmatprep.subr.mxu0 %v1859
  %1919 = vmatpush1.msra.mxu0 %v1858
  %1920 = vmatprep.subr.mxu0 %v1863
  %1921 = vmatpush1.msra.mxu0 %v1862
  %1922 = vmatprep.subr.mxu0 %v1867
  %1923 = vmatpush1.msra.mxu0 %v1866
  %1924 = vmatprep.subr.mxu0 %v1871
  %1925 = vmatpush1.msra.mxu0 %v1870
  %1926 = vmatprep.subr.mxu0 %v1875
  %1927 = vmatpush1.msra.mxu0 %v1874
  %1928 = vmatprep.subr.mxu0 %v1879
  %1929 = vmatpush1.msra.mxu0 %v1878
  %1930 = vmatprep.subr.mxu0 %v1883
  %1931 = vmatpush1.msra.mxu0 %v1882
  %1932 = vmatprep.subr.mxu0 %v1887
  %1933 = vmatpush1.msra.mxu0 %v1886
  %1934 = vmatprep.subr.mxu0 %v1891
  %1935 = vmatpush1.msra.mxu0 %v1890
  %1936 = vmatprep.subr.mxu0 %v1895
  %1937 = vmatpush1.msra.mxu0 %v1894
  %1938 = vmatprep.subr.mxu0 %v1899
  %1939 = vmatpush1.msra.mxu0 %v1898
  %1940 = vmatprep.subr.mxu0 %v1903
  %1941 = vmatpush1.msra.mxu0 %v1902
  %1942 = vmatprep.subr.mxu0 %v1907
  %1943 = vmatpush1.msra.mxu0 %v1906
  %1944 = vmatprep.subr.mxu0 %v1911
  %1945 = vmatpush1.msra.mxu0 %v1910
  %1946 = vmatprep.subr.mxu0 0.0
  %1947 = vmatpush1.msra.mxu0 0.0
  %1948 = vmatprep.subr.mxu0 0.0
  %1949 = vmatpush1.msra.mxu0 0.0
  %1950 = vmatprep.subr.mxu0 0.0
  %1951 = vmatpush1.msra.mxu0 0.0
  %1952 = vmatprep.subr.mxu0 0.0
  %1953 = vmatpush1.msra.mxu0 0.0
  %1954 = vmatprep.subr.mxu0 0.0
  %1955 = vmatpush1.msra.mxu0 0.0
  %1956 = vmatprep.subr.mxu0 0.0
  %1957 = vmatpush1.msra.mxu0 0.0
  %1958 = vmatprep.subr.mxu0 0.0
  %1959 = vmatpush1.msra.mxu0 0.0
  %1960 = vmatprep.subr.mxu0 0.0
  %1961 = vmatpush1.msra.mxu0 0.0
  %1962 = vmatprep.subr.mxu0 0.0
  %1963 = vmatpush1.msra.mxu0 0.0
  %1964 = vmatprep.subr.mxu0 0.0
  %1965 = vmatpush1.msra.mxu0 0.0
  %1966 = vmatprep.subr.mxu0 0.0
  %1967 = vmatpush1.msra.mxu0 0.0
  %1968 = vmatprep.subr.mxu0 0.0
  %1969 = vmatpush1.msra.mxu0 0.0
  %1970 = vmatprep.subr.mxu0 0.0
  %1971 = vmatpush1.msra.mxu0 0.0
  %1972 = vmatprep.subr.mxu0 0.0
  %1973 = vmatpush1.msra.mxu0 0.0
  %1974 = vmatprep.subr.mxu0 0.0
  %1975 = vmatpush1.msra.mxu0 0.0
  %1976 = vmatprep.subr.mxu0 0.0
  %1977 = vmatpush1.msra.mxu0 0.0
  %1978 = vmatprep.mubr.f32.mxu0 0.0
  %1979 = vmatmul.mubr.f32.gmra.mrb[0].mxu0 %v1840
  %v1980 = vpop.f32.mrb[0].mxu0
  %v1981 = vadd.f32 0.0, %v1980
  %v1982 = vpop.f32.mrb[0].mxu0
  %v1983 = vadd.f32 0.0, %v1982
  %1984 = vdwg.mxu0
  %1985 = vmatprep.subr.mxu0 %v1853
  %1986 = vmatpush1.msra.mxu0 %v1852
  %1987 = vmatprep.subr.mxu0 %v1857
  %1988 = vmatpush1.msra.mxu0 %v1856
  %1989 = vmatprep.subr.mxu0 %v1861
  %1990 = vmatpush1.msra.mxu0 %v1860
  %1991 = vmatprep.subr.mxu0 %v1865
  %1992 = vmatpush1.msra.mxu0 %v1864
  %1993 = vmatprep.subr.mxu0 %v1869
  %1994 = vmatpush1.msra.mxu0 %v1868
  %1995 = vmatprep.subr.mxu0 %v1873
  %1996 = vmatpush1.msra.mxu0 %v1872
  %1997 = vmatprep.subr.mxu0 %v1877
  %1998 = vmatpush1.msra.mxu0 %v1876
  %1999 = vmatprep.subr.mxu0 %v1881
  %2000 = vmatpush1.msra.mxu0 %v1880
  %2001 = vmatprep.subr.mxu0 %v1885
  %2002 = vmatpush1.msra.mxu0 %v1884
  %2003 = vmatprep.subr.mxu0 %v1889
  %2004 = vmatpush1.msra.mxu0 %v1888
  %2005 = vmatprep.subr.mxu0 %v1893
  %2006 = vmatpush1.msra.mxu0 %v1892
  %2007 = vmatprep.subr.mxu0 %v1897
  %2008 = vmatpush1.msra.mxu0 %v1896
  %2009 = vmatprep.subr.mxu0 %v1901
  %2010 = vmatpush1.msra.mxu0 %v1900
  %2011 = vmatprep.subr.mxu0 %v1905
  %2012 = vmatpush1.msra.mxu0 %v1904
  %2013 = vmatprep.subr.mxu0 %v1909
  %2014 = vmatpush1.msra.mxu0 %v1908
  %2015 = vmatprep.subr.mxu0 %v1913
  %2016 = vmatpush1.msra.mxu0 %v1912
  %2017 = vmatprep.subr.mxu0 0.0
  %2018 = vmatpush1.msra.mxu0 0.0
  %2019 = vmatprep.subr.mxu0 0.0
  %2020 = vmatpush1.msra.mxu0 0.0
  %2021 = vmatprep.subr.mxu0 0.0
  %2022 = vmatpush1.msra.mxu0 0.0
  %2023 = vmatprep.subr.mxu0 0.0
  %2024 = vmatpush1.msra.mxu0 0.0
  %2025 = vmatprep.subr.mxu0 0.0
  %2026 = vmatpush1.msra.mxu0 0.0
  %2027 = vmatprep.subr.mxu0 0.0
  %2028 = vmatpush1.msra.mxu0 0.0
  %2029 = vmatprep.subr.mxu0 0.0
  %2030 = vmatpush1.msra.mxu0 0.0
  %2031 = vmatprep.subr.mxu0 0.0
  %2032 = vmatpush1.msra.mxu0 0.0
  %2033 = vmatprep.subr.mxu0 0.0
  %2034 = vmatpush1.msra.mxu0 0.0
  %2035 = vmatprep.subr.mxu0 0.0
  %2036 = vmatpush1.msra.mxu0 0.0
  %2037 = vmatprep.subr.mxu0 0.0
  %2038 = vmatpush1.msra.mxu0 0.0
  %2039 = vmatprep.subr.mxu0 0.0
  %2040 = vmatpush1.msra.mxu0 0.0
  %2041 = vmatprep.subr.mxu0 0.0
  %2042 = vmatpush1.msra.mxu0 0.0
  %2043 = vmatprep.subr.mxu0 0.0
  %2044 = vmatpush1.msra.mxu0 0.0
  %2045 = vmatprep.subr.mxu0 0.0
  %2046 = vmatpush1.msra.mxu0 0.0
  %2047 = vmatprep.subr.mxu0 0.0
  %2048 = vmatpush1.msra.mxu0 0.0
  %2049 = vmatprep.mubr.f32.mxu0 0.0
  %2050 = vmatmul.mubr.f32.gmra.mrb[0].mxu0 %v1840
  %v2051 = vpop.f32.mrb[0].mxu0
  %v2052 = vadd.f32 0.0, %v2051
  %v2053 = vpop.f32.mrb[0].mxu0
  %v2054 = vadd.f32 0.0, %v2053
  %2055 = vdwg.mxu0
  %v2056 = vadd.f32 %v1846, %v1981
  %v2057 = vadd.f32 %v1847, %v1983
  %v2058 = vadd.f32 %v1848, %v2052
  %v2059 = vadd.f32 %v1849, %v2054
  %v2060 = vxor.u32 %v2056, 2147483648
  %v2061 = vmul.f32 %v2060, 1.442695
  %v2062 = vpow.pop %v2061
  %v2063 = vadd.f32 %v2062, 1.0
  %v2064 = vrcp.pop %v2063
  %v2065 = vmul.f32 1.0, %v2064
  %v2066 = vxor.u32 %v2057, 2147483648
  %v2067 = vmul.f32 %v2066, 1.442695
  %v2068 = vpow.pop %v2067
  %v2069 = vadd.f32 %v2068, 1.0
  %v2070 = vrcp.pop %v2069
  %v2071 = vmul.f32 1.0, %v2070
  %v2072 = vtanh.pop %v2058
  %v2073 = vxor.u32 %v2059, 2147483648
  %v2074 = vmul.f32 %v2073, 1.442695
  %v2075 = vpow.pop %v2074
  %v2076 = vadd.f32 %v2075, 1.0
  %v2077 = vrcp.pop %v2076
  %v2078 = vmul.f32 1.0, %v2077
  %v2079 = vmul.f32 %v2071, %v1838
  %v2080 = vmul.f32 %v2065, %v2072
  %v2081 = vadd.f32 %v2079, %v2080
  %v2082 = vtanh.pop %v2081
  %v2083 = vmul.f32 %v2078, %v2082
  %s2084 = scalar_lea.vmem [#allocation3], 48
  %2085 = vst [vmem:[%s2084] sm:$0xff] %v2083
  %s2086 = smul.u32 7, 4
  %s2087 = smul.addr %s2086, 8
  %s2088 = scalar_lea.vmem [#allocation2], %s2087
  %v2089 = vld [vmem:[%s2088] sm:$0xff]
  %v2090 = vld [vmem:[%s2088 + $0x8] sm:$0xff]
  %v2091 = vld [vmem:[%s2088 + $0x10] sm:$0xff]
  %v2092 = vld [vmem:[%s2088 + $0x18] sm:$0xff]
  %v2093 = vld [vmem:[%s4] sm:$0xff]
  %v2094 = vld [vmem:[%s4 + $0x8] sm:$0xff]
  %v2095 = vld [vmem:[%s4 + $0x10] sm:$0xff]
  %v2096 = vld [vmem:[%s4 + $0x18] sm:$0xff]
  %v2097 = vld [vmem:[%s4 + $0x20] sm:$0xff]
  %v2098 = vld [vmem:[%s4 + $0x28] sm:$0xff]
  %v2099 = vld [vmem:[%s4 + $0x30] sm:$0xff]
  %v2100 = vld [vmem:[%s4 + $0x38] sm:$0xff]
  %v2101 = vld [vmem:[%s4 + $0x40] sm:$0xff]
  %v2102 = vld [vmem:[%s4 + $0x48] sm:$0xff]
  %v2103 = vld [vmem:[%s4 + $0x50] sm:$0xff]
  %v2104 = vld [vmem:[%s4 + $0x58] sm:$0xff]
  %v2105 = vld [vmem:[%s4 + $0x60] sm:$0xff]
  %v2106 = vld [vmem:[%s4 + $0x68] sm:$0xff]
  %v2107 = vld [vmem:[%s4 + $0x70] sm:$0xff]
  %v2108 = vld [vmem:[%s4 + $0x78] sm:$0xff]
  %v2109 = vld [vmem:[%s4 + $0x80] sm:$0xff]
  %v2110 = vld [vmem:[%s4 + $0x88] sm:$0xff]
  %v2111 = vld [vmem:[%s4 + $0x90] sm:$0xff]
  %v2112 = vld [vmem:[%s4 + $0x98] sm:$0xff]
  %v2113 = vld [vmem:[%s4 + $0xa0] sm:$0xff]
  %v2114 = vld [vmem:[%s4 + $0xa8] sm:$0xff]
  %v2115 = vld [vmem:[%s4 + $0xb0] sm:$0xff]
  %v2116 = vld [vmem:[%s4 + $0xb8] sm:$0xff]
  %v2117 = vld [vmem:[%s4 + $0xc0] sm:$0xff]
  %v2118 = vld [vmem:[%s4 + $0xc8] sm:$0xff]
  %v2119 = vld [vmem:[%s4 + $0xd0] sm:$0xff]
  %v2120 = vld [vmem:[%s4 + $0xd8] sm:$0xff]
  %v2121 = vld [vmem:[%s4 + $0xe0] sm:$0xff]
  %v2122 = vld [vmem:[%s4 + $0xe8] sm:$0xff]
  %v2123 = vld [vmem:[%s4 + $0xf0] sm:$0xff]
  %v2124 = vld [vmem:[%s4 + $0xf8] sm:$0xff]
  %v2125 = vld [vmem:[%s4 + $0x100] sm:$0xff]
  %v2126 = vld [vmem:[%s4 + $0x108] sm:$0xff]
  %v2127 = vld [vmem:[%s4 + $0x110] sm:$0xff]
  %v2128 = vld [vmem:[%s4 + $0x118] sm:$0xff]
  %v2129 = vld [vmem:[%s4 + $0x120] sm:$0xff]
  %v2130 = vld [vmem:[%s4 + $0x128] sm:$0xff]
  %v2131 = vld [vmem:[%s4 + $0x130] sm:$0xff]
  %v2132 = vld [vmem:[%s4 + $0x138] sm:$0xff]
  %v2133 = vld [vmem:[%s4 + $0x140] sm:$0xff]
  %v2134 = vld [vmem:[%s4 + $0x148] sm:$0xff]
  %v2135 = vld [vmem:[%s4 + $0x150] sm:$0xff]
  %v2136 = vld [vmem:[%s4 + $0x158] sm:$0xff]
  %v2137 = vld [vmem:[%s4 + $0x160] sm:$0xff]
  %v2138 = vld [vmem:[%s4 + $0x168] sm:$0xff]
  %v2139 = vld [vmem:[%s4 + $0x170] sm:$0xff]
  %v2140 = vld [vmem:[%s4 + $0x178] sm:$0xff]
  %v2141 = vld [vmem:[%s4 + $0x180] sm:$0xff]
  %v2142 = vld [vmem:[%s4 + $0x188] sm:$0xff]
  %v2143 = vld [vmem:[%s4 + $0x190] sm:$0xff]
  %v2144 = vld [vmem:[%s4 + $0x198] sm:$0xff]
  %v2145 = vld [vmem:[%s4 + $0x1a0] sm:$0xff]
  %v2146 = vld [vmem:[%s4 + $0x1a8] sm:$0xff]
  %v2147 = vld [vmem:[%s4 + $0x1b0] sm:$0xff]
  %v2148 = vld [vmem:[%s4 + $0x1b8] sm:$0xff]
  %v2149 = vld [vmem:[%s4 + $0x1c0] sm:$0xff]
  %v2150 = vld [vmem:[%s4 + $0x1c8] sm:$0xff]
  %v2151 = vld [vmem:[%s4 + $0x1d0] sm:$0xff]
  %v2152 = vld [vmem:[%s4 + $0x1d8] sm:$0xff]
  %v2153 = vld [vmem:[%s4 + $0x1e0] sm:$0xff]
  %v2154 = vld [vmem:[%s4 + $0x1e8] sm:$0xff]
  %v2155 = vld [vmem:[%s4 + $0x1f0] sm:$0xff]
  %v2156 = vld [vmem:[%s4 + $0x1f8] sm:$0xff]
  %2157 = vmatprep.subr.mxu0 %v2094
  %2158 = vmatpush1.msra.mxu0 %v2093
  %2159 = vmatprep.subr.mxu0 %v2098
  %2160 = vmatpush1.msra.mxu0 %v2097
  %2161 = vmatprep.subr.mxu0 %v2102
  %2162 = vmatpush1.msra.mxu0 %v2101
  %2163 = vmatprep.subr.mxu0 %v2106
  %2164 = vmatpush1.msra.mxu0 %v2105
  %2165 = vmatprep.subr.mxu0 %v2110
  %2166 = vmatpush1.msra.mxu0 %v2109
  %2167 = vmatprep.subr.mxu0 %v2114
  %2168 = vmatpush1.msra.mxu0 %v2113
  %2169 = vmatprep.subr.mxu0 %v2118
  %2170 = vmatpush1.msra.mxu0 %v2117
  %2171 = vmatprep.subr.mxu0 %v2122
  %2172 = vmatpush1.msra.mxu0 %v2121
  %2173 = vmatprep.subr.mxu0 %v2126
  %2174 = vmatpush1.msra.mxu0 %v2125
  %2175 = vmatprep.subr.mxu0 %v2130
  %2176 = vmatpush1.msra.mxu0 %v2129
  %2177 = vmatprep.subr.mxu0 %v2134
  %2178 = vmatpush1.msra.mxu0 %v2133
  %2179 = vmatprep.subr.mxu0 %v2138
  %2180 = vmatpush1.msra.mxu0 %v2137
  %2181 = vmatprep.subr.mxu0 %v2142
  %2182 = vmatpush1.msra.mxu0 %v2141
  %2183 = vmatprep.subr.mxu0 %v2146
  %2184 = vmatpush1.msra.mxu0 %v2145
  %2185 = vmatprep.subr.mxu0 %v2150
  %2186 = vmatpush1.msra.mxu0 %v2149
  %2187 = vmatprep.subr.mxu0 %v2154
  %2188 = vmatpush1.msra.mxu0 %v2153
  %2189 = vmatprep.subr.mxu0 0.0
  %2190 = vmatpush1.msra.mxu0 0.0
  %2191 = vmatprep.subr.mxu0 0.0
  %2192 = vmatpush1.msra.mxu0 0.0
  %2193 = vmatprep.subr.mxu0 0.0
  %2194 = vmatpush1.msra.mxu0 0.0
  %2195 = vmatprep.subr.mxu0 0.0
  %2196 = vmatpush1.msra.mxu0 0.0
  %2197 = vmatprep.subr.mxu0 0.0
  %2198 = vmatpush1.msra.mxu0 0.0
  %2199 = vmatprep.subr.mxu0 0.0
  %2200 = vmatpush1.msra.mxu0 0.0
  %2201 = vmatprep.subr.mxu0 0.0
  %2202 = vmatpush1.msra.mxu0 0.0
  %2203 = vmatprep.subr.mxu0 0.0
  %2204 = vmatpush1.msra.mxu0 0.0
  %2205 = vmatprep.subr.mxu0 0.0
  %2206 = vmatpush1.msra.mxu0 0.0
  %2207 = vmatprep.subr.mxu0 0.0
  %2208 = vmatpush1.msra.mxu0 0.0
  %2209 = vmatprep.subr.mxu0 0.0
  %2210 = vmatpush1.msra.mxu0 0.0
  %2211 = vmatprep.subr.mxu0 0.0
  %2212 = vmatpush1.msra.mxu0 0.0
  %2213 = vmatprep.subr.mxu0 0.0
  %2214 = vmatpush1.msra.mxu0 0.0
  %2215 = vmatprep.subr.mxu0 0.0
  %2216 = vmatpush1.msra.mxu0 0.0
  %2217 = vmatprep.subr.mxu0 0.0
  %2218 = vmatpush1.msra.mxu0 0.0
  %2219 = vmatprep.subr.mxu0 0.0
  %2220 = vmatpush1.msra.mxu0 0.0
  %2221 = vmatprep.mubr.f32.mxu0 0.0
  %2222 = vmatmul.mubr.f32.gmra.mrb[0].mxu0 %v2083
  %v2223 = vpop.f32.mrb[0].mxu0
  %v2224 = vadd.f32 0.0, %v2223
  %v2225 = vpop.f32.mrb[0].mxu0
  %v2226 = vadd.f32 0.0, %v2225
  %2227 = vdwg.mxu0
  %2228 = vmatprep.subr.mxu0 %v2096
  %2229 = vmatpush1.msra.mxu0 %v2095
  %2230 = vmatprep.subr.mxu0 %v2100
  %2231 = vmatpush1.msra.mxu0 %v2099
  %2232 = vmatprep.subr.mxu0 %v2104
  %2233 = vmatpush1.msra.mxu0 %v2103
  %2234 = vmatprep.subr.mxu0 %v2108
  %2235 = vmatpush1.msra.mxu0 %v2107
  %2236 = vmatprep.subr.mxu0 %v2112
  %2237 = vmatpush1.msra.mxu0 %v2111
  %2238 = vmatprep.subr.mxu0 %v2116
  %2239 = vmatpush1.msra.mxu0 %v2115
  %2240 = vmatprep.subr.mxu0 %v2120
  %2241 = vmatpush1.msra.mxu0 %v2119
  %2242 = vmatprep.subr.mxu0 %v2124
  %2243 = vmatpush1.msra.mxu0 %v2123
  %2244 = vmatprep.subr.mxu0 %v2128
  %2245 = vmatpush1.msra.mxu0 %v2127
  %2246 = vmatprep.subr.mxu0 %v2132
  %2247 = vmatpush1.msra.mxu0 %v2131
  %2248 = vmatprep.subr.mxu0 %v2136
  %2249 = vmatpush1.msra.mxu0 %v2135
  %2250 = vmatprep.subr.mxu0 %v2140
  %2251 = vmatpush1.msra.mxu0 %v2139
  %2252 = vmatprep.subr.mxu0 %v2144
  %2253 = vmatpush1.msra.mxu0 %v2143
  %2254 = vmatprep.subr.mxu0 %v2148
  %2255 = vmatpush1.msra.mxu0 %v2147
  %2256 = vmatprep.subr.mxu0 %v2152
  %2257 = vmatpush1.msra.mxu0 %v2151
  %2258 = vmatprep.subr.mxu0 %v2156
  %2259 = vmatpush1.msra.mxu0 %v2155
  %2260 = vmatprep.subr.mxu0 0.0
  %2261 = vmatpush1.msra.mxu0 0.0
  %2262 = vmatprep.subr.mxu0 0.0
  %2263 = vmatpush1.msra.mxu0 0.0
  %2264 = vmatprep.subr.mxu0 0.0
  %2265 = vmatpush1.msra.mxu0 0.0
  %2266 = vmatprep.subr.mxu0 0.0
  %2267 = vmatpush1.msra.mxu0 0.0
  %2268 = vmatprep.subr.mxu0 0.0
  %2269 = vmatpush1.msra.mxu0 0.0
  %2270 = vmatprep.subr.mxu0 0.0
  %2271 = vmatpush1.msra.mxu0 0.0
  %2272 = vmatprep.subr.mxu0 0.0
  %2273 = vmatpush1.msra.mxu0 0.0
  %2274 = vmatprep.subr.mxu0 0.0
  %2275 = vmatpush1.msra.mxu0 0.0
  %2276 = vmatprep.subr.mxu0 0.0
  %2277 = vmatpush1.msra.mxu0 0.0
  %2278 = vmatprep.subr.mxu0 0.0
  %2279 = vmatpush1.msra.mxu0 0.0
  %2280 = vmatprep.subr.mxu0 0.0
  %2281 = vmatpush1.msra.mxu0 0.0
  %2282 = vmatprep.subr.mxu0 0.0
  %2283 = vmatpush1.msra.mxu0 0.0
  %2284 = vmatprep.subr.mxu0 0.0
  %2285 = vmatpush1.msra.mxu0 0.0
  %2286 = vmatprep.subr.mxu0 0.0
  %2287 = vmatpush1.msra.mxu0 0.0
  %2288 = vmatprep.subr.mxu0 0.0
  %2289 = vmatpush1.msra.mxu0 0.0
  %2290 = vmatprep.subr.mxu0 0.0
  %2291 = vmatpush1.msra.mxu0 0.0
  %2292 = vmatprep.mubr.f32.mxu0 0.0
  %2293 = vmatmul.mubr.f32.gmra.mrb[0].mxu0 %v2083
  %v2294 = vpop.f32.mrb[0].mxu0
  %v2295 = vadd.f32 0.0, %v2294
  %v2296 = vpop.f32.mrb[0].mxu0
  %v2297 = vadd.f32 0.0, %v2296
  %2298 = vdwg.mxu0
  %v2299 = vadd.f32 %v2089, %v2224
  %v2300 = vadd.f32 %v2090, %v2226
  %v2301 = vadd.f32 %v2091, %v2295
  %v2302 = vadd.f32 %v2092, %v2297
  %v2303 = vxor.u32 %v2299, 2147483648
  %v2304 = vmul.f32 %v2303, 1.442695
  %v2305 = vpow.pop %v2304
  %v2306 = vadd.f32 %v2305, 1.0
  %v2307 = vrcp.pop %v2306
  %v2308 = vmul.f32 1.0, %v2307
  %v2309 = vxor.u32 %v2300, 2147483648
  %v2310 = vmul.f32 %v2309, 1.442695
  %v2311 = vpow.pop %v2310
  %v2312 = vadd.f32 %v2311, 1.0
  %v2313 = vrcp.pop %v2312
  %v2314 = vmul.f32 1.0, %v2313
  %v2315 = vtanh.pop %v2301
  %v2316 = vxor.u32 %v2302, 2147483648
  %v2317 = vmul.f32 %v2316, 1.442695
  %v2318 = vpow.pop %v2317
  %v2319 = vadd.f32 %v2318, 1.0
  %v2320 = vrcp.pop %v2319
  %v2321 = vmul.f32 1.0, %v2320
  %v2322 = vmul.f32 %v2314, %v2081
  %v2323 = vmul.f32 %v2308, %v2315
  %v2324 = vadd.f32 %v2322, %v2323
  %v2325 = vtanh.pop %v2324
  %v2326 = vmul.f32 %v2321, %v2325
  %s2327 = scalar_lea.vmem [#allocation3], 56
  %2328 = vst [vmem:[%s2327] sm:$0xff] %v2326
  %2329 = vst [vmem:[%s9] sm:$0xff] %v2326
  %2330 = vst [vmem:[%s10] sm:$0xff] %v2324
  %v2331 = vld [vmem:[#allocation3] sm:$0xff]
  %v2332 = vld [vmem:[#allocation3 + $0x8] sm:$0xff]
  %v2333 = vld [vmem:[#allocation3 + $0x10] sm:$0xff]
  %v2334 = vld [vmem:[#allocation3 + $0x18] sm:$0xff]
  %v2335 = vld [vmem:[#allocation3 + $0x20] sm:$0xff]
  %v2336 = vld [vmem:[#allocation3 + $0x28] sm:$0xff]
  %v2337 = vld [vmem:[#allocation3 + $0x30] sm:$0xff]
  %v2338 = vld [vmem:[#allocation3 + $0x38] sm:$0xff]
  %v2339 = vld [vmem:[%s6] sm:$0xff]
  %v2340 = vld [vmem:[%s6 + $0x8] sm:$0xff]
  %v2341 = vld [vmem:[%s6 + $0x10] sm:$0xff]
  %v2342 = vld [vmem:[%s6 + $0x18] sm:$0xff]
  %v2343 = vld [vmem:[%s6 + $0x20] sm:$0xff]
  %v2344 = vld [vmem:[%s6 + $0x28] sm:$0xff]
  %v2345 = vld [vmem:[%s6 + $0x30] sm:$0xff]
  %v2346 = vld [vmem:[%s6 + $0x38] sm:$0xff]
  %v2347 = vld [vmem:[%s6 + $0x40] sm:$0xff]
  %v2348 = vld [vmem:[%s6 + $0x48] sm:$0xff]
  %v2349 = vld [vmem:[%s6 + $0x50] sm:$0xff]
  %v2350 = vld [vmem:[%s6 + $0x58] sm:$0xff]
  %v2351 = vld [vmem:[%s6 + $0x60] sm:$0xff]
  %v2352 = vld [vmem:[%s6 + $0x68] sm:$0xff]
  %v2353 = vld [vmem:[%s6 + $0x70] sm:$0xff]
  %v2354 = vld [vmem:[%s6 + $0x78] sm:$0xff]
  %v2355 = vld [vmem:[%s7] sm:$0x1]
  %v2357 = vlaneseq
  %v2358 = vshrl.u32 %v2357, 7
  %v2359 = vsub.s32 0, %v2358
  %v2360 = vrot.slane %v2355, %v2359
  %2362 = vmatprep.subr.mxu0 0.0
  %2363 = vmatpush1.msra.mxu0 %v2339
  %2364 = vmatprep.subr.mxu0 0.0
  %2365 = vmatpush1.msra.mxu0 %v2340
  %2366 = vmatprep.subr.mxu0 0.0
  %2367 = vmatpush1.msra.mxu0 %v2341
  %2368 = vmatprep.subr.mxu0 0.0
  %2369 = vmatpush1.msra.mxu0 %v2342
  %2370 = vmatprep.subr.mxu0 0.0
  %2371 = vmatpush1.msra.mxu0 %v2343
  %2372 = vmatprep.subr.mxu0 0.0
  %2373 = vmatpush1.msra.mxu0 %v2344
  %2374 = vmatprep.subr.mxu0 0.0
  %2375 = vmatpush1.msra.mxu0 %v2345
  %2376 = vmatprep.subr.mxu0 0.0
  %2377 = vmatpush1.msra.mxu0 %v2346
  %2378 = vmatprep.subr.mxu0 0.0
  %2379 = vmatpush1.msra.mxu0 %v2347
  %2380 = vmatprep.subr.mxu0 0.0
  %2381 = vmatpush1.msra.mxu0 %v2348
  %2382 = vmatprep.subr.mxu0 0.0
  %2383 = vmatpush1.msra.mxu0 %v2349
  %2384 = vmatprep.subr.mxu0 0.0
  %2385 = vmatpush1.msra.mxu0 %v2350
  %2386 = vmatprep.subr.mxu0 0.0
  %2387 = vmatpush1.msra.mxu0 %v2351
  %2388 = vmatprep.subr.mxu0 0.0
  %2389 = vmatpush1.msra.mxu0 %v2352
  %2390 = vmatprep.subr.mxu0 0.0
  %2391 = vmatpush1.msra.mxu0 %v2353
  %2392 = vmatprep.subr.mxu0 0.0
  %2393 = vmatpush1.msra.mxu0 %v2354
  %2394 = vmatprep.subr.mxu0 0.0
  %2395 = vmatpush1.msra.mxu0 0.0
  %2396 = vmatprep.subr.mxu0 0.0
  %2397 = vmatpush1.msra.mxu0 0.0
  %2398 = vmatprep.subr.mxu0 0.0
  %2399 = vmatpush1.msra.mxu0 0.0
  %2400 = vmatprep.subr.mxu0 0.0
  %2401 = vmatpush1.msra.mxu0 0.0
  %2402 = vmatprep.subr.mxu0 0.0
  %2403 = vmatpush1.msra.mxu0 0.0
  %2404 = vmatprep.subr.mxu0 0.0
  %2405 = vmatpush1.msra.mxu0 0.0
  %2406 = vmatprep.subr.mxu0 0.0
  %2407 = vmatpush1.msra.mxu0 0.0
  %2408 = vmatprep.subr.mxu0 0.0
  %2409 = vmatpush1.msra.mxu0 0.0
  %2410 = vmatprep.subr.mxu0 0.0
  %2411 = vmatpush1.msra.mxu0 0.0
  %2412 = vmatprep.subr.mxu0 0.0
  %2413 = vmatpush1.msra.mxu0 0.0
  %2414 = vmatprep.subr.mxu0 0.0
  %2415 = vmatpush1.msra.mxu0 0.0
  %2416 = vmatprep.subr.mxu0 0.0
  %2417 = vmatpush1.msra.mxu0 0.0
  %2418 = vmatprep.subr.mxu0 0.0
  %2419 = vmatpush1.msra.mxu0 0.0
  %2420 = vmatprep.subr.mxu0 0.0
  %2421 = vmatpush1.msra.mxu0 0.0
  %2422 = vmatprep.subr.mxu0 0.0
  %2423 = vmatpush1.msra.mxu0 0.0
  %2424 = vmatprep.subr.mxu0 0.0
  %2425 = vmatpush1.msra.mxu0 0.0
  %2426 = vmatprep.mubr.f32.mxu0 0.0
  %2427 = vmatmul.mubr.f32.gmra.mrb[0].mxu0 %v2331
  %v2428 = vpop.f32.mrb[0].mxu0
  %v2429 = vadd.f32 %v2360, %v2428
  %v2430 = vpop.f32.mrb[0].mxu0
  %2431 = vmatprep.mubr.f32.mxu0 0.0
  %2432 = vmatmul.mubr.f32.gmra.mrb[0].mxu0 %v2332
  %v2433 = vpop.f32.mrb[0].mxu0
  %v2434 = vadd.f32 %v2360, %v2433
  %v2435 = vpop.f32.mrb[0].mxu0
  %2436 = vmatprep.mubr.f32.mxu0 0.0
  %2437 = vmatmul.mubr.f32.gmra.mrb[0].mxu0 %v2333
  %v2438 = vpop.f32.mrb[0].mxu0
  %v2439 = vadd.f32 %v2360, %v2438
  %v2440 = vpop.f32.mrb[0].mxu0
  %2441 = vmatprep.mubr.f32.mxu0 0.0
  %2442 = vmatmul.mubr.f32.gmra.mrb[0].mxu0 %v2334
  %v2443 = vpop.f32.mrb[0].mxu0
  %v2444 = vadd.f32 %v2360, %v2443
  %v2445 = vpop.f32.mrb[0].mxu0
  %2446 = vmatprep.mubr.f32.mxu0 0.0
  %2447 = vmatmul.mubr.f32.gmra.mrb[0].mxu0 %v2335
  %v2448 = vpop.f32.mrb[0].mxu0
  %v2449 = vadd.f32 %v2360, %v2448
  %v2450 = vpop.f32.mrb[0].mxu0
  %2451 = vmatprep.mubr.f32.mxu0 0.0
  %2452 = vmatmul.mubr.f32.gmra.mrb[0].mxu0 %v2336
  %v2453 = vpop.f32.mrb[0].mxu0
  %v2454 = vadd.f32 %v2360, %v2453
  %v2455 = vpop.f32.mrb[0].mxu0
  %2456 = vmatprep.mubr.f32.mxu0 0.0
  %2457 = vmatmul.mubr.f32.gmra.mrb[0].mxu0 %v2337
  %v2458 = vpop.f32.mrb[0].mxu0
  %v2459 = vadd.f32 %v2360, %v2458
  %v2460 = vpop.f32.mrb[0].mxu0
  %2461 = vmatprep.mubr.f32.mxu0 0.0
  %2462 = vmatmul.mubr.f32.gmra.mrb[0].mxu0 %v2338
  %v2463 = vpop.f32.mrb[0].mxu0
  %v2464 = vadd.f32 %v2360, %v2463
  %v2465 = vpop.f32.mrb[0].mxu0
  %2466 = vdwg.mxu0
  %v2467 = vxor.u32 %v2429, 2147483648
  %v2468 = vxor.u32 %v2434, 2147483648
  %v2469 = vxor.u32 %v2439, 2147483648
  %v2470 = vxor.u32 %v2444, 2147483648
  %v2471 = vxor.u32 %v2449, 2147483648
  %v2472 = vxor.u32 %v2454, 2147483648
  %v2473 = vxor.u32 %v2459, 2147483648
  %v2474 = vxor.u32 %v2464, 2147483648
  %v2475 = vmul.f32 %v2467, 1.442695
  %v2476 = vpow.pop %v2475
  %v2477 = vmul.f32 %v2468, 1.442695
  %v2478 = vpow.pop %v2477
  %v2479 = vmul.f32 %v2469, 1.442695
  %v2480 = vpow.pop %v2479
  %v2481 = vmul.f32 %v2470, 1.442695
  %v2482 = vpow.pop %v2481
  %v2483 = vmul.f32 %v2471, 1.442695
  %v2484 = vpow.pop %v2483
  %v2485 = vmul.f32 %v2472, 1.442695
  %v2486 = vpow.pop %v2485
  %v2487 = vmul.f32 %v2473, 1.442695
  %v2488 = vpow.pop %v2487
  %v2489 = vmul.f32 %v2474, 1.442695
  %v2490 = vpow.pop %v2489
  %v2491 = vadd.f32 %v2476, 1.0
  %v2492 = vadd.f32 %v2478, 1.0
  %v2493 = vadd.f32 %v2480, 1.0
  %v2494 = vadd.f32 %v2482, 1.0
  %v2495 = vadd.f32 %v2484, 1.0
  %v2496 = vadd.f32 %v2486, 1.0
  %v2497 = vadd.f32 %v2488, 1.0
  %v2498 = vadd.f32 %v2490, 1.0
  %v2499 = vrcp.pop %v2491
  %v2500 = vmul.f32 1.0, %v2499
  %v2501 = vrcp.pop %v2492
  %v2502 = vmul.f32 1.0, %v2501
  %v2503 = vrcp.pop %v2493
  %v2504 = vmul.f32 1.0, %v2503
  %v2505 = vrcp.pop %v2494
  %v2506 = vmul.f32 1.0, %v2505
  %v2507 = vrcp.pop %v2495
  %v2508 = vmul.f32 1.0, %v2507
  %v2509 = vrcp.pop %v2496
  %v2510 = vmul.f32 1.0, %v2509
  %v2511 = vrcp.pop %v2497
  %v2512 = vmul.f32 1.0, %v2511
  %v2513 = vrcp.pop %v2498
  %v2514 = vmul.f32 1.0, %v2513
  %2515 = vst [vmem:[%s8] sm:$0xff] %v2500
  %2516 = vst [vmem:[%s8 + $0x8] sm:$0xff] %v2502
  %2517 = vst [vmem:[%s8 + $0x10] sm:$0xff] %v2504
  %2518 = vst [vmem:[%s8 + $0x18] sm:$0xff] %v2506
  %2519 = vst [vmem:[%s8 + $0x20] sm:$0xff] %v2508
  %2520 = vst [vmem:[%s8 + $0x28] sm:$0xff] %v2510
  %2521 = vst [vmem:[%s8 + $0x30] sm:$0xff] %v2512
  %2522 = vst [vmem:[%s8 + $0x38] sm:$0xff] %v2514
  // Predicated region
  $region34: #{lotto_predictor_forward.1} parent=0 // pred_check
    _
  $region35: #{lotto_predictor_forward.1} parent=0 // pred_check_branch
    %2524 = sbr.rel (0) target = $region37
  $region36: #{lotto_predictor_forward.1} parent=0 // pred_region
    _
  $region37: #{lotto_predictor_forward.1} parent=0 // pred_fallthru
    _
  // Predicated region
  $region38: #{lotto_predictor_forward.1} parent=0 // pred_check
    _
  $region39: #{lotto_predictor_forward.1} parent=0 // pred_check_branch
    %2526 = sbr.rel (0) target = $region41
  $region40: #{lotto_predictor_forward.1} parent=0 // pred_region
    _
  $region41: #{lotto_predictor_forward.1} parent=0 // pred_fallthru
    _
  // Predicated region
  $region42: #{lotto_predictor_forward.1} parent=0 // pred_check
    _
  $region43: #{lotto_predictor_forward.1} parent=0 // pred_check_branch
    %2528 = sbr.rel (0) target = $region45
  $region44: #{lotto_predictor_forward.1} parent=0 // pred_region
    _
  $region45: #{lotto_predictor_forward.1} parent=0 // pred_fallthru
    _
  // Predicated region
  $region46: #{lotto_predictor_forward.1} parent=0 // pred_check
    _
  $region47: #{lotto_predictor_forward.1} parent=0 // pred_check_branch
    %2530 = sbr.rel (0) target = $region49
  $region48: #{lotto_predictor_forward.1} parent=0 // pred_region
    _
  $region49: #{lotto_predictor_forward.1} parent=0 // pred_fallthru
    _
  // Predicated region
  $region50: #{lotto_predictor_forward.1} parent=0 // pred_check
    _
  $region51: #{lotto_predictor_forward.1} parent=0 // pred_check_branch
    %2532 = sbr.rel (0) target = $region53
  $region52: #{lotto_predictor_forward.1} parent=0 // pred_region
    _
  $region53: #{lotto_predictor_forward.1} parent=0 // pred_fallthru
    _
  // Predicated region
  $region54: #{lotto_predictor_forward.1} parent=0 // pred_check
    _
  $region55: #{lotto_predictor_forward.1} parent=0 // pred_check_branch
    %2534 = sbr.rel (0) target = $region57
  $region56: #{lotto_predictor_forward.1} parent=0 // pred_region
    _
  $region57: #{lotto_predictor_forward.1} parent=0 // pred_fallthru
    _

</llo_original>
